<compile_context>
chip_gen: v7x
topology: tpu7x:2x2x1
jax: 0.10.0
libtpu: 0.0.40
codegen_flags: <defaults>
</compile_context>

<pallas_src>
import math
import functools

import jax
import jax.numpy as jnp
from jax.experimental import pallas as pl
from jax.experimental.pallas import tpu as pltpu


def _pick_tile(dim, candidates, min_blocks=1):
    """Largest candidate dividing dim (preferring >= min_blocks blocks)."""
    for c in candidates:
        if c <= dim and dim % c == 0 and dim // c >= min_blocks:
            return c
    for c in candidates:
        if c <= dim and dim % c == 0:
            return c
    return dim


# ----------------------------------------------------------------------------
# Kernel 1/3 and 3/3: Conv1D (linear)  y = x @ W + b   -- tiled matmul
# ----------------------------------------------------------------------------
def _matmul_bias_kernel(x_ref, w_ref, b_ref, o_ref, acc_ref):
    @pl.when(pl.program_id(2) == 0)
    def _():
        acc_ref[...] = jnp.zeros_like(acc_ref)

    acc_ref[...] += jnp.dot(
        x_ref[...], w_ref[...], preferred_element_type=jnp.float32
    )

    @pl.when(pl.program_id(2) == pl.num_programs(2) - 1)
    def _():
        o_ref[...] = (acc_ref[...] + b_ref[...].astype(jnp.float32)).astype(
            o_ref.dtype
        )


def conv1d(x2d, w, b):
    """x2d: [N, Cin], w: [Cin, Cout], b: [Cout] -> [N, Cout] (x2d.dtype)."""
    n, cin = x2d.shape
    cout = w.shape[1]

    # Large tiles: full 768-deep contraction and 768-wide output blocks at
    # GPT-2 sizes.  f32 worst case (tm=512, tn=768, tk=768) is ~12.5 MiB
    # double-buffered, inside the 32 MiB scoped-VMEM limit set below and well
    # under v7x's 64 MiB physical VMEM.  tm prefers >=2 row blocks so the
    # parallel (i, j) grid extents don't degenerate to 1 on v7x megacore.
    tm = _pick_tile(n, (512, 256, 128, 64, 32, 16, 8), min_blocks=2)
    tn = _pick_tile(cout, (768, 512, 384, 256, 128))
    tk = _pick_tile(cin, (768, 512, 384, 256, 128))

    itemsize = jnp.dtype(x2d.dtype).itemsize
    cost = pl.CostEstimate(
        flops=2 * n * cin * cout,
        transcendentals=0,
        bytes_accessed=(n * cin + cin * cout + cout + n * cout) * itemsize,
    )

    return pl.pallas_call(
        _matmul_bias_kernel,
        out_shape=jax.ShapeDtypeStruct((n, cout), x2d.dtype),
        grid_spec=pltpu.PrefetchScalarGridSpec(
            num_scalar_prefetch=0,
            grid=(n // tm, cout // tn, cin // tk),
            in_specs=[
                pl.BlockSpec((tm, tk), lambda i, j, k: (i, k)),
                pl.BlockSpec((tk, tn), lambda i, j, k: (k, j)),
                pl.BlockSpec((1, tn), lambda i, j, k: (0, j)),
            ],
            out_specs=pl.BlockSpec((tm, tn), lambda i, j, k: (i, j)),
            scratch_shapes=[pltpu.VMEM((tm, tn), jnp.float32)],
        ),
        compiler_params=pltpu.CompilerParams(
            dimension_semantics=("parallel", "parallel", "arbitrary"),
            vmem_limit_bytes=32 * 1024 * 1024,
        ),
        cost_estimate=cost,
    )(x2d, w, b.reshape(1, cout))


# ----------------------------------------------------------------------------
# Kernel 2/3: fused causal attention, flash-style, heads packed per block.
# Reads q/k/v directly from qkv=[B,T,3C]; writes directly to [B,T,C].
# ----------------------------------------------------------------------------
def _flash_attn_kernel(
    q_ref, k_ref, v_ref, o_ref, q_sc, m_sc, l_sc, acc_sc,
    *, hp, d, tq_blk, tq_sub, n_sub, tkv,
):
    qi = pl.program_id(2)
    ki = pl.program_id(3)

    # ---- per-q-block init: zero stats, pre-scale q and zero-pad per head ----
    @pl.when(ki == 0)
    def _():
        m_sc[...] = jnp.full_like(m_sc, -jnp.inf)
        l_sc[...] = jnp.zeros_like(l_sc)
        acc_sc[...] = jnp.zeros_like(acc_sc)

        q_blk = q_ref[0]                                    # (tq_blk, hp*d)
        q_blk = q_blk * jnp.asarray(1.0 / math.sqrt(d), q_blk.dtype)
        lane = jax.lax.broadcasted_iota(jnp.int32, (tq_sub, hp * d), 1)
        for sub in range(n_sub):
            q_sub = q_blk[sub * tq_sub:(sub + 1) * tq_sub, :]
            for p in range(hp):
                # Head p's channels kept, other lanes zeroed: the full-width
                # QK^T dot then equals the per-head dot with no k slicing.
                in_head = (lane >= p * d) & (lane < (p + 1) * d)
                q_sc[sub * hp + p] = jnp.where(
                    in_head, q_sub, jnp.zeros_like(q_sub)
                )

    # ---- online-softmax update for one q sub-tile against this KV block ----
    def process(sub, visible):
        k_blk = k_ref[0]                                    # (tkv, hp*d)
        v_blk = v_ref[0]                                    # (tkv, hp*d)
        for p in range(hp):
            idx = sub * hp + p
            s = jax.lax.dot_general(                        # (tq_sub, tkv) f32
                q_sc[idx], k_blk, (((1,), (1,)), ((), ())),
                preferred_element_type=jnp.float32,
            )
            if visible is not None:
                # GPT-2 uses masked_bias = -10000.0 (not -inf).
                s = jnp.where(visible, s, jnp.float32(-10000.0))
            m_prev = m_sc[idx]                              # (tq_sub, 1)
            m_new = jnp.maximum(m_prev, jnp.max(s, axis=-1, keepdims=True))
            alpha = jnp.exp(m_prev - m_new)
            e = jnp.exp(s - m_new)                          # f32
            l_sc[idx] = alpha * l_sc[idx] + jnp.sum(e, axis=-1, keepdims=True)
            vp = v_blk[:, p * d:(p + 1) * d]
            acc_sc[idx] = alpha * acc_sc[idx] + jnp.dot(
                e.astype(vp.dtype), vp, preferred_element_type=jnp.float32
            )
            m_sc[idx] = m_new

    c0 = ki * tkv
    for sub in range(n_sub):
        r0 = qi * tq_blk + sub * tq_sub                     # first query row

        # Fully below the diagonal: no mask construction at all (fast path).
        @pl.when(c0 + (tkv - 1) <= r0)
        def _(sub=sub):
            process(sub, visible=None)

        # Crosses the diagonal: build the causal mask.  Fully-above blocks
        # fall in neither branch and are skipped (their DMA is also elided by
        # the clamped k/v index_maps).
        @pl.when((c0 <= r0 + (tq_sub - 1)) & (c0 + (tkv - 1) > r0))
        def _(sub=sub, r0=r0):
            row = r0 + jax.lax.broadcasted_iota(jnp.int32, (tq_sub, tkv), 0)
            col = c0 + jax.lax.broadcasted_iota(jnp.int32, (tq_sub, tkv), 1)
            process(sub, visible=(col <= row))

    # ---- finalize: normalize and do one lane-dense store of the q block ----
    @pl.when(ki == pl.num_programs(3) - 1)
    def _():
        rows = []
        for sub in range(n_sub):
            outs = []
            for p in range(hp):
                idx = sub * hp + p
                outs.append(acc_sc[idx] * pl.reciprocal(l_sc[idx], approx=False))
            rows.append(jnp.concatenate(outs, axis=-1))     # (tq_sub, hp*d)
        o_ref[0] = jnp.concatenate(rows, axis=0).astype(o_ref.dtype)


def fused_causal_attention(qkv, num_heads):
    """qkv: [B, T, 3C] -> attention output [B, T, C] (same dtype)."""
    b, t, three_c = qkv.shape
    c = three_c // 3
    d = c // num_heads

    # Pack heads so the channel block width is a multiple of 128 lanes.
    hp = None
    for cand in range(1, num_heads + 1):
        if num_heads % cand == 0 and (cand * d) % 128 == 0:
            hp = cand
            break
    if hp is None:
        # TODO(synk): fall back to a split-heads path when num_heads*head_dim
        # cannot be packed into 128-lane-aligned channel blocks.
        raise NotImplementedError(
            f"no head packing with hp*head_dim % 128 == 0 for "
            f"num_heads={num_heads}, head_dim={d}"
        )
    hg = num_heads // hp          # head-groups = channel blocks per q/k/v region

    # 256-row q DMA block processed as two 128-row compute sub-tiles; 128-row
    # KV blocks keep each f32 score tile at 128x128 (no vreg spills).
    tq_blk = _pick_tile(t, (256, 128, 64, 32, 16, 8))
    tq_sub = min(128, tq_blk)
    n_sub = tq_blk // tq_sub
    tkv = _pick_tile(t, (128, 64, 32, 16, 8))
    r = tq_blk // tkv             # kv blocks spanned by one q block

    itemsize = jnp.dtype(qkv.dtype).itemsize
    cost = pl.CostEstimate(
        flops=4 * b * num_heads * t * t * d,
        transcendentals=b * num_heads * t * t,
        bytes_accessed=(3 * b * t * c + b * t * c) * itemsize,
    )

    kernel = functools.partial(
        _flash_attn_kernel,
        hp=hp, d=d, tq_blk=tq_blk, tq_sub=tq_sub, n_sub=n_sub, tkv=tkv,
    )

    # q/k/v are channel slices of the same [B,T,3C] tensor, selected by the
    # index_map in (hp*d)-wide lane-dense blocks: q -> block g, k -> hg+g,
    # v -> 2*hg+g.  The k/v maps clamp the KV block index to the last
    # causally-needed block, so skipped (fully masked) steps re-request the
    # previous block and Pallas elides the DMA.
    q_spec = pl.BlockSpec((1, tq_blk, hp * d), lambda bb, g, qi, ki: (bb, qi, g))
    k_spec = pl.BlockSpec(
        (1, tkv, hp * d),
        lambda bb, g, qi, ki: (bb, jnp.minimum(ki, qi * r + (r - 1)), hg + g),
    )
    v_spec = pl.BlockSpec(
        (1, tkv, hp * d),
        lambda bb, g, qi, ki: (bb, jnp.minimum(ki, qi * r + (r - 1)), 2 * hg + g),
    )
    o_spec = pl.BlockSpec((1, tq_blk, hp * d), lambda bb, g, qi, ki: (bb, qi, g))

    return pl.pallas_call(
        kernel,
        out_shape=jax.ShapeDtypeStruct((b, t, c), qkv.dtype),
        grid_spec=pltpu.PrefetchScalarGridSpec(
            num_scalar_prefetch=0,
            grid=(b, hg, t // tq_blk, t // tkv),
            in_specs=[q_spec, k_spec, v_spec],
            out_specs=o_spec,
            scratch_shapes=[
                pltpu.VMEM((n_sub * hp, tq_sub, hp * d), qkv.dtype),  # scaled, padded q
                pltpu.VMEM((n_sub * hp, tq_sub, 1), jnp.float32),     # running max
                pltpu.VMEM((n_sub * hp, tq_sub, 1), jnp.float32),     # running denom
                pltpu.VMEM((n_sub * hp, tq_sub, d), jnp.float32),     # out accumulator
            ],
        ),
        compiler_params=pltpu.CompilerParams(
            dimension_semantics=("parallel", "parallel", "parallel", "arbitrary"),
        ),
        cost_estimate=cost,
    )(qkv, qkv, qkv)


# ----------------------------------------------------------------------------
# Full GPT2Attention forward (self-attention, eval mode)
# ----------------------------------------------------------------------------
def gpt2_attention_forward(hidden_states, params, num_heads):
    """hidden_states: [B, T, C] -> [B, T, C] (same dtype)."""
    b, t, c = hidden_states.shape

    x2d = hidden_states.reshape(b * t, c)

    # c_attn: [B*T, C] @ [C, 3C] + [3C]
    qkv = conv1d(x2d, params["c_attn_w"], params["c_attn_b"]).reshape(b, t, 3 * c)

    # fused causal attention, head split/merge folded into BlockSpecs
    attn_out = fused_causal_attention(qkv, num_heads)          # [B, T, C]

    # c_proj: [B*T, C] @ [C, C] + [C]
    out = conv1d(attn_out.reshape(b * t, c), params["c_proj_w"], params["c_proj_b"])
    return out.reshape(b, t, c)


# ----------------------------------------------------------------------------
# Pure-JAX reference (for correctness check)
# ----------------------------------------------------------------------------
def gpt2_attention_reference(hidden_states, params, num_heads):
    b, t, c = hidden_states.shape
    head_dim = c // num_heads
    qkv = hidden_states @ params["c_attn_w"] + params["c_attn_b"]
    q, k, v = jnp.split(qkv, 3, axis=-1)

    def split_heads(x):
        return x.reshape(b, t, num_heads, head_dim).transpose(0, 2, 1, 3)

    q, k, v = split_heads(q), split_heads(k), split_heads(v)
    s = jnp.einsum("bhqd,bhkd->bhqk", q, k) / math.sqrt(head_dim)
    mask = jnp.tril(jnp.ones((t, t), dtype=bool))
    s = jnp.where(mask[None, None], s, jnp.float32(-10000.0))
    p = jax.nn.softmax(s, axis=-1)
    o = jnp.einsum("bhqk,bhkd->bhqd", p, v)
    o = o.transpose(0, 2, 1, 3).reshape(b, t, c)
    return o @ params["c_proj_w"] + params["c_proj_b"]


if __name__ == "__main__":
    # Small (but lane/tile-aligned) config: hidden=256, heads=4, head_dim=64,
    # batch=2, seq=512 -> exercises large conv1d tiles, head packing (2 heads
    # = 128 lanes), 256-row q blocks with two sub-tiles, causal block
    # skipping/clamping and both mask / no-mask paths.
    B, T, C, H = 2, 512, 256, 4

    key = jax.random.PRNGKey(0)
    k_x, k_w1, k_b1, k_w2, k_b2 = jax.random.split(key, 5)

    hidden_states = jax.random.normal(k_x, (B, T, C), dtype=jnp.float32)

    # GPT-2-style init: normal(0, 0.02) weights; small nonzero biases so the
    # bias path is actually exercised.
    params = {
        "c_attn_w": 0.02 * jax.random.normal(k_w1, (C, 3 * C), dtype=jnp.float32),
        "c_attn_b": 0.01 * jax.random.normal(k_b1, (3 * C,), dtype=jnp.float32),
        "c_proj_w": 0.02 * jax.random.normal(k_w2, (C, C), dtype=jnp.float32),
        "c_proj_b": 0.01 * jax.random.normal(k_b2, (C,), dtype=jnp.float32),
    }

    ref = gpt2_attention_reference(hidden_states, params, num_heads=H)

    # f32 path
    out = jax.block_until_ready(
        gpt2_attention_forward(hidden_states, params, num_heads=H)
    )
    assert out.shape == (B, T, C)
    assert jnp.allclose(out, ref, atol=2e-3, rtol=2e-3), "f32 mismatch vs reference"

    # bf16 path (halves HBM traffic, full-rate MXU on v6e/v7x); softmax and
    # accumulation stay f32 inside the kernels.
    hs_bf16 = hidden_states.astype(jnp.bfloat16)
    params_bf16 = {k: v.astype(jnp.bfloat16) for k, v in params.items()}
    out_bf16 = jax.block_until_ready(
        gpt2_attention_forward(hs_bf16, params_bf16, num_heads=H)
    )
    assert out_bf16.shape == (B, T, C)
    assert jnp.allclose(
        out_bf16.astype(jnp.float32), ref, atol=5e-2, rtol=5e-2
    ), "bf16 mismatch vs reference"

    print("KERNEL_OK")
</pallas_src>

<mosaic_0001>
module attributes {stable_mosaic.version = 11 : i64} {
  func.func @_matmul_bias_kernel(%arg0: i32, %arg1: i32, %arg2: i32, %arg3: memref<512x256xf32, #tpu.memory_space<vmem>>, %arg4: memref<256x768xf32, #tpu.memory_space<vmem>>, %arg5: memref<1x768xf32, #tpu.memory_space<vmem>>, %arg6: memref<512x768xf32, #tpu.memory_space<vmem>>, %arg7: memref<512x768xf32, #tpu.memory_space<vmem>>) attributes {dimension_semantics = [#tpu.dimension_semantics<parallel>, #tpu.dimension_semantics<parallel>, #tpu.dimension_semantics<arbitrary>], iteration_bounds = array<i64: 2, 1, 1>, scalar_prefetch = 0 : i64, scratch_operands = 1 : i64, tpu.core_type = #tpu.core_type<tc>, window_params = [{transform_indices = @transform_0, window_bounds = array<i64: 512, 256>}, {transform_indices = @transform_1, window_bounds = array<i64: 256, 768>}, {transform_indices = @transform_2, window_bounds = array<i64: 1, 768>}, {transform_indices = @transform_3, window_bounds = array<i64: 512, 768>}]} {
    %c0_i32 = arith.constant 0 : i32
    %0 = arith.cmpi eq, %arg2, %c0_i32 : i32
    %1 = arith.extui %0 : i1 to i32
    %c0_i32_0 = arith.constant 0 : i32
    %2 = arith.cmpi ne, %1, %c0_i32_0 : i32
    scf.if %2 {
      %cst_10 = arith.constant 0.000000e+00 : f32
      %12 = vector.broadcast %cst_10 : f32 to vector<512x768xf32>
      %c0_11 = arith.constant 0 : index
      %c0_12 = arith.constant 0 : index
      %13 = vector.load %arg7[%c0_11, %c0_12] : memref<512x768xf32, #tpu.memory_space<vmem>>, vector<512x768xf32>
      tpu.vector_store %arg7[%c0_11, %c0_12], %12 {strides = array<i32>} : memref<512x768xf32, #tpu.memory_space<vmem>>, vector<512x768xf32>,
    } else {
    }
    %c0 = arith.constant 0 : index
    %c0_1 = arith.constant 0 : index
    %3 = vector.load %arg7[%c0, %c0_1] : memref<512x768xf32, #tpu.memory_space<vmem>>, vector<512x768xf32>
    %c0_2 = arith.constant 0 : index
    %c0_3 = arith.constant 0 : index
    %4 = vector.load %arg3[%c0_2, %c0_3] : memref<512x256xf32, #tpu.memory_space<vmem>>, vector<512x256xf32>
    %c0_4 = arith.constant 0 : index
    %c0_5 = arith.constant 0 : index
    %5 = vector.load %arg4[%c0_4, %c0_5] : memref<256x768xf32, #tpu.memory_space<vmem>>, vector<256x768xf32>
    %cst = arith.constant dense<0.000000e+00> : vector<512x768xf32>
    %6 = tpu.matmul %4, %5, %cst {dimension_numbers = #tpu.dot_dimension_numbers<[1], [0], [0], [1], [0, 0, 1, 1], [], []>} : vector<512x256xf32>, vector<256x768xf32>, vector<512x768xf32> -> vector<512x768xf32>
    %7 = arith.addf %3, %6 : vector<512x768xf32>
    %c0_6 = arith.constant 0 : index
    %c0_7 = arith.constant 0 : index
    %8 = vector.load %arg7[%c0_6, %c0_7] : memref<512x768xf32, #tpu.memory_space<vmem>>, vector<512x768xf32>
    tpu.vector_store %arg7[%c0_6, %c0_7], %7 {strides = array<i32>} : memref<512x768xf32, #tpu.memory_space<vmem>>, vector<512x768xf32>,
    %c0_i32_8 = arith.constant 0 : i32
    %9 = arith.cmpi eq, %arg2, %c0_i32_8 : i32
    %10 = arith.extui %9 : i1 to i32
    %c0_i32_9 = arith.constant 0 : i32
    %11 = arith.cmpi ne, %10, %c0_i32_9 : i32
    scf.if %11 {
      %c0_10 = arith.constant 0 : index
      %c0_11 = arith.constant 0 : index
      %12 = vector.load %arg7[%c0_10, %c0_11] : memref<512x768xf32, #tpu.memory_space<vmem>>, vector<512x768xf32>
      %c0_12 = arith.constant 0 : index
      %c0_13 = arith.constant 0 : index
      %13 = vector.load %arg5[%c0_12, %c0_13] : memref<1x768xf32, #tpu.memory_space<vmem>>, vector<1x768xf32>
      %14 = vector.broadcast %13 : vector<1x768xf32> to vector<512x768xf32>
      %15 = arith.addf %12, %14 : vector<512x768xf32>
      %c0_14 = arith.constant 0 : index
      %c0_15 = arith.constant 0 : index
      %16 = vector.load %arg6[%c0_14, %c0_15] : memref<512x768xf32, #tpu.memory_space<vmem>>, vector<512x768xf32>
      tpu.vector_store %arg6[%c0_14, %c0_15], %15 {strides = array<i32>} : memref<512x768xf32, #tpu.memory_space<vmem>>, vector<512x768xf32>,
    } else {
    }
    return
  }
  func.func @transform_0(%arg0: i32, %arg1: i32, %arg2: i32) -> (i32, i32) {
    %c0_i32 = arith.constant 0 : i32
    return %arg0, %arg2 : i32, i32
  }
  func.func @transform_1(%arg0: i32, %arg1: i32, %arg2: i32) -> (i32, i32) {
    %c0_i32 = arith.constant 0 : i32
    return %arg2, %arg1 : i32, i32
  }
  func.func @transform_2(%arg0: i32, %arg1: i32, %arg2: i32) -> (i32, i32) {
    %c0_i32 = arith.constant 0 : i32
    %c0_i32_0 = arith.constant 0 : i32
    return %c0_i32, %arg1 : i32, i32
  }
  func.func @transform_3(%arg0: i32, %arg1: i32, %arg2: i32) -> (i32, i32) {
    %c0_i32 = arith.constant 0 : i32
    return %arg0, %arg1 : i32, i32
  }
}

</mosaic_0001>

<llo_original>
// kernel: tpu_custom_call.1
$region0: #{tpu_custom_call.1}
  #allocation0 [shape = 'u32[]', space=smem, size = 0x4, offset = 0x4, fixed_abs, tag = 'smem constant byte address 0x4 - core index']
  #allocation1 [shape = 'u32[144,128]{1,0:T(1,128)}', space=vmem, size = 0x12000, scoped, tag = 'internal scratch']
  #allocation2 [shape = 'f32[512,768]{1,0:T(8,128)}', space=vmem, size = 0x180000, scoped, tag = 'scratch operand']
  %s0 = inlined_call_operand.hbm [shape: f32[1024,256], index: 0, kind: input, shape index: {}]
  %s1 = inlined_call_operand.hbm [shape: f32[256,768], index: 1, kind: input, shape index: {}]
  %s2 = inlined_call_operand.hbm [shape: f32[1,768], index: 2, kind: input, shape index: {}]
  %s3 = inlined_call_operand.hbm [shape: f32[1024,768], index: 3, kind: output, shape index: {}]
  %s4 = sld [smem:[#allocation0]]
  $region65: #{tpu_custom_call.1} parent=0
    _
  %s6 = ssub.s32 1, %s4
  %s7 = scalar_select 0, %s6, %s4
  $region1: #{tpu_custom_call.1} parent=0
    #allocation3 [shape = 'u8[1048576]{0}', space=vmem, size = 0x100000, scoped, tag = 'input window, operand 0']
    #allocation4 [shape = 's32[2]{0}', space=sflag, size = 0x8, scoped, tag = 'scoped memory for tpu_custom_call.1']
    #allocation5 [shape = 's32[2]{0}', space=sflag, size = 0x8, scoped, tag = 'scoped memory for tpu_custom_call.1']
    #allocation6 [shape = 'u8[786432]{0}', space=vmem, size = 0xc0000, scoped, tag = 'input window, operand 1, single buffered']
    #allocation7 [shape = 's32[1]{0}', space=sflag, size = 0x4, scoped, tag = 'scoped memory for tpu_custom_call.1']
    #allocation8 [shape = 'u8[3072]{0}', space=vmem, size = 0xc00, scoped, tag = 'input window, operand 2, single buffered']
    #allocation9 [shape = 'u8[3145728]{0}', space=vmem, size = 0x300000, scoped, tag = 'output window, operand 0']
    %8 = vsyncpa [#allocation4], 0
    %s9 = scalar_lea.sflag [#allocation4], 1
    %10 = vsyncpa %s9, 0
    %11 = vsyncpa [#allocation7], 0
    %12 = vsyncpa [#allocation5], 0
    %s13 = scalar_lea.sflag [#allocation5], 1
    %14 = vsyncpa %s13, 0
    loop: start=0, step=1, limit=4
    $region2: #{tpu_custom_call.1} parent=1 // loop_pre_header
      _
    $region3: #{tpu_custom_call.1} parent=1 // loop_header
      %s16 = sphi 0, %s20
      %p17 = scmp.ge.s32.totalorder %s16, 4
      %s23 = sphi 0, %s42
      %s24 = sphi 0, %s38
      %s25 = sphi 0, %s34
      %s26 = sphi 0, %s23
      %s27 = sphi 0, %s24
      %s28 = sphi 0, %s25
      %s29 = sphi 0, %s26
      %s30 = sphi 0, %s27
      %s31 = sphi 0, %s28
      %s47 = sphi 0, %s49
      %s50 = sphi 0, %s47
      %s51 = sphi 0, %s50
      %s67 = sphi 0, %s51
      %s75 = sphi 0, %s77
      %s78 = sphi 0, %s75
      %s79 = sphi 0, %s78
      %s95 = sphi 0, %s79
      %s101 = sphi 0, %s103
      %s104 = sphi 0, %s101
      %s105 = sphi 0, %s104
      %s121 = sphi 0, %s105
      %s129 = sphi 0, %s131
      %s132 = sphi 0, %s129
      %s133 = sphi 0, %s132
      %s149 = sphi 0, %s133
    $region4: #{tpu_custom_call.1} parent=1 // loop_header_branch
      %19 = sbr.rel (%p17) target = $region8
    $region5: #{tpu_custom_call.1} parent=1 // loop_body
      %s21 = ssub.s32 %s16, 1
      %s22 = ssub.s32 %s16, 2
      %s32 = sadd.s32 1, %s25
      %p33 = scmp.ge.s32.totalorder %s32, 1
      %s34 = scalar_select %p33, 0, %s32
      %s35 = sadd.s32 1, %s24
      %s36 = scalar_select %p33, %s35, %s24
      %p37 = scmp.ge.s32.totalorder %s36, 1
      %s38 = scalar_select %p37, 0, %s36
      %s39 = sadd.s32 1, %s23
      %s40 = scalar_select %p37, %s39, %s23
      %p41 = scmp.ge.s32.totalorder %s40, 2
      %s42 = scalar_select %p41, 0, %s40
      %s43 = ssub.s32 %s23, %s42
      %s44 = ssub.s32 %s25, %s34
      %s45 = sor.u32 %s43, %s44
      %p46 = scmp.eq.s32.totalorder %s45, 0
      %s48 = sadd.s32 %s47, 1
      %s49 = scalar_select %p46, %s47, %s48
      %p52 = pneg %p46
      %p53 = scmp.eq.s32.totalorder %s16, 1
      %p54 = por %p52, %p53
      %p55 = scmp.ne.s32.totalorder %s47, %s50
      %p56 = scmp.eq.s32.totalorder %s16, 0
      %p57 = por %p55, %p56
      %p58 = scmp.ne.s32.totalorder %s47, %s50
      %p59 = scmp.eq.s32.totalorder %s21, 1
      %p60 = por %p58, %p59
      %p61 = scmp.ne.s32.totalorder %s50, %s51
      %p62 = scmp.eq.s32.totalorder %s21, 0
      %p63 = por %p61, %p62
      %p64 = scmp.ne.s32.totalorder %s50, %s51
      %p65 = scmp.eq.s32.totalorder %s22, 1
      %p66 = por %p64, %p65
      %p68 = scmp.ne.s32.totalorder %s51, %s67
      %p69 = scmp.eq.s32.totalorder %s22, 0
      %p70 = por %p68, %p69
      %s71 = ssub.s32 %s25, %s34
      %s72 = ssub.s32 %s24, %s38
      %s73 = sor.u32 %s71, %s72
      %p74 = scmp.eq.s32.totalorder %s73, 0
      %s76 = sadd.s32 %s75, 1
      %s77 = scalar_select %p74, %s75, %s76
      %p80 = pneg %p74
      %p81 = scmp.eq.s32.totalorder %s16, 1
      %p82 = por %p80, %p81
      %p83 = scmp.ne.s32.totalorder %s75, %s78
      %p84 = scmp.eq.s32.totalorder %s16, 0
      %p85 = por %p83, %p84
      %p86 = scmp.ne.s32.totalorder %s75, %s78
      %p87 = scmp.eq.s32.totalorder %s21, 1
      %p88 = por %p86, %p87
      %p89 = scmp.ne.s32.totalorder %s78, %s79
      %p90 = scmp.eq.s32.totalorder %s21, 0
      %p91 = por %p89, %p90
      %p92 = scmp.ne.s32.totalorder %s78, %s79
      %p93 = scmp.eq.s32.totalorder %s22, 1
      %p94 = por %p92, %p93
      %p96 = scmp.ne.s32.totalorder %s79, %s95
      %p97 = scmp.eq.s32.totalorder %s22, 0
      %p98 = por %p96, %p97
      %s99 = ssub.s32 %s24, %s38
      %p100 = scmp.eq.s32.totalorder %s99, 0
      %s102 = sadd.s32 %s101, 1
      %s103 = scalar_select %p100, %s101, %s102
      %p106 = pneg %p100
      %p107 = scmp.eq.s32.totalorder %s16, 1
      %p108 = por %p106, %p107
      %p109 = scmp.ne.s32.totalorder %s101, %s104
      %p110 = scmp.eq.s32.totalorder %s16, 0
      %p111 = por %p109, %p110
      %p112 = scmp.ne.s32.totalorder %s101, %s104
      %p113 = scmp.eq.s32.totalorder %s21, 1
      %p114 = por %p112, %p113
      %p115 = scmp.ne.s32.totalorder %s104, %s105
      %p116 = scmp.eq.s32.totalorder %s21, 0
      %p117 = por %p115, %p116
      %p118 = scmp.ne.s32.totalorder %s104, %s105
      %p119 = scmp.eq.s32.totalorder %s22, 1
      %p120 = por %p118, %p119
      %p122 = scmp.ne.s32.totalorder %s105, %s121
      %p123 = scmp.eq.s32.totalorder %s22, 0
      %p124 = por %p122, %p123
      %s125 = ssub.s32 %s23, %s42
      %s126 = ssub.s32 %s24, %s38
      %s127 = sor.u32 %s125, %s126
      %p128 = scmp.eq.s32.totalorder %s127, 0
      %s130 = sadd.s32 %s129, 1
      %s131 = scalar_select %p128, %s129, %s130
      %p134 = pneg %p128
      %p135 = scmp.eq.s32.totalorder %s16, 1
      %p136 = por %p134, %p135
      %p137 = scmp.ne.s32.totalorder %s129, %s132
      %p138 = scmp.eq.s32.totalorder %s16, 0
      %p139 = por %p137, %p138
      %p140 = scmp.ne.s32.totalorder %s129, %s132
      %p141 = scmp.eq.s32.totalorder %s21, 1
      %p142 = por %p140, %p141
      %p143 = scmp.ne.s32.totalorder %s132, %s133
      %p144 = scmp.eq.s32.totalorder %s21, 0
      %p145 = por %p143, %p144
      %p146 = scmp.ne.s32.totalorder %s132, %s133
      %p147 = scmp.eq.s32.totalorder %s22, 1
      %p148 = por %p146, %p147
      %p150 = scmp.ne.s32.totalorder %s133, %s149
      %p151 = scmp.eq.s32.totalorder %s22, 0
      %p152 = por %p150, %p151
      %p153 = scmp.le.s32.totalorder 1, %s16
      %p154 = scmp.lt.s32.totalorder %s16, 3
      %p155 = pnand %p153, %p154
      %p156 = pneg %p155
      // Predicated region
      $region9: #{tpu_custom_call.1} parent=5 // pred_check
        _
      $region10: #{tpu_custom_call.1} parent=5 // pred_check_branch
        %158 = sbr.rel (%p155) target = $region12
      $region11: #{tpu_custom_call.1} parent=5 // pred_region
        %s159 = ssub.s32 %s16, 1
        // Predicated region
        $region13: #{tpu_custom_call.1} parent=11 // pred_check
          %p160 = pneg %p91
        $region14: #{tpu_custom_call.1} parent=11 // pred_check_branch
          %162 = sbr.rel (%p160) target = $region16
        $region15: #{tpu_custom_call.1} parent=11 // pred_region
          %s163 = smul.u32 32, %s28
          %s164 = smul.u32 6, %s27
          %s166 = ssub.s32 24576, 24576
          %167 = vsyncadd [#allocation7], %s166
          %s168 = smul.addr %s163, 6
          %s169 = sadd.s32 %s164, %s168
          %s170 = smul.addr %s169, 128
          %s171 = scalar_lea.hbm %s1, %s170
          %s172 = sshll.u32 [#allocation6], 4
          %s173 = int_to_ptr.vmem [resolvable:$true] %s172
          %178 = dma.hbm_to_vmem [thread:$0]  %s171, 24576, %s173, [#allocation7], 768, 768, 48
        $region16: #{tpu_custom_call.1} parent=11 // pred_fallthru
          _
        // Predicated region
        $region17: #{tpu_custom_call.1} parent=11 // pred_check
          %p179 = pneg %p117
        $region18: #{tpu_custom_call.1} parent=11 // pred_check_branch
          %181 = sbr.rel (%p179) target = $region20
        $region19: #{tpu_custom_call.1} parent=11 // pred_region
          %s182 = smul.u32 6, %s27
          %s184 = ssub.s32 96, 96
          %185 = vsyncadd [#allocation7], %s184
          %s186 = smul.addr %s182, 16
          %s187 = scalar_lea.hbm %s2, %s186
          %s189 = sshll.u32 [#allocation8], 4
          %s190 = int_to_ptr.vmem [resolvable:$true] %s189
          %192 = dma.hbm_to_vmem [thread:$0]  %s187, 96, %s190, [#allocation7]
        $region20: #{tpu_custom_call.1} parent=11 // pred_fallthru
          _
      $region12: #{tpu_custom_call.1} parent=5 // pred_fallthru
        _
      %p193 = scmp.lt.s32.totalorder %s16, 2
      // Predicated region
      $region21: #{tpu_custom_call.1} parent=5 // pred_check
        %p194 = pneg %p193
      $region22: #{tpu_custom_call.1} parent=5 // pred_check_branch
        %196 = sbr.rel (%p194) target = $region24
      $region23: #{tpu_custom_call.1} parent=5 // pred_region
        // Predicated region
        $region25: #{tpu_custom_call.1} parent=23 // pred_check
          %p197 = pneg %p57
        $region26: #{tpu_custom_call.1} parent=23 // pred_check_branch
          %199 = sbr.rel (%p197) target = $region28
        $region27: #{tpu_custom_call.1} parent=23 // pred_region
          %s200 = sand.u32 %s47, 1
          %s201 = scalar_lea.sflag [#allocation4], %s200
          %s202 = sand.u32 %s47, 1
          %s203 = smul.addr %s202, 1024
          %s204 = scalar_lea.vmem [#allocation3], %s203
          %s205 = smul.u32 64, %s23
          %s206 = smul.u32 2, %s25
          %s208 = ssub.s32 16384, 16384
          %209 = vsyncadd %s201, %s208
          %s210 = smul.addr %s205, 2
          %s211 = sadd.s32 %s206, %s210
          %s212 = smul.addr %s211, 128
          %s213 = scalar_lea.hbm %s0, %s212
          %s214 = sshll.u32 %s204, 4
          %s215 = int_to_ptr.vmem [resolvable:$true] %s214
          %220 = dma.hbm_to_vmem [thread:$0]  %s213, 16384, %s215, %s201, 256, 256, 16
        $region28: #{tpu_custom_call.1} parent=23 // pred_fallthru
          _
      $region24: #{tpu_custom_call.1} parent=5 // pred_fallthru
        _
      %p221 = scmp.le.s32.totalorder 1, %s16
      %p222 = scmp.lt.s32.totalorder %s16, 3
      %p223 = pnand %p221, %p222
      %p224 = pneg %p223
      // Predicated region
      $region29: #{tpu_custom_call.1} parent=5 // pred_check
        _
      $region30: #{tpu_custom_call.1} parent=5 // pred_check_branch
        %226 = sbr.rel (%p223) target = $region32
      $region31: #{tpu_custom_call.1} parent=5 // pred_region
        %s227 = ssub.s32 %s16, 1
        %s228 = sand.u32 %s50, 1
        %s229 = scalar_lea.sflag [#allocation4], %s228
        %s230 = sand.u32 %s50, 1
        %s231 = smul.addr %s230, 1024
        %s232 = scalar_lea.vmem [#allocation3], %s231
        // Predicated region
        $region33: #{tpu_custom_call.1} parent=31 // pred_check
          %p233 = pneg %p63
        $region34: #{tpu_custom_call.1} parent=31 // pred_check_branch
          %235 = sbr.rel (%p233) target = $region36
        $region35: #{tpu_custom_call.1} parent=31 // pred_region
          %236 = dma.done %s229, 16384
        $region36: #{tpu_custom_call.1} parent=31 // pred_fallthru
          _
        // Predicated region
        $region37: #{tpu_custom_call.1} parent=31 // pred_check
          %p237 = pneg %p91
        $region38: #{tpu_custom_call.1} parent=31 // pred_check_branch
          %239 = sbr.rel (%p237) target = $region40
        $region39: #{tpu_custom_call.1} parent=31 // pred_region
          %240 = dma.done [#allocation7], 24576
        $region40: #{tpu_custom_call.1} parent=31 // pred_fallthru
          _
        // Predicated region
        $region41: #{tpu_custom_call.1} parent=31 // pred_check
          %p241 = pneg %p117
        $region42: #{tpu_custom_call.1} parent=31 // pred_check_branch
          %243 = sbr.rel (%p241) target = $region44
        $region43: #{tpu_custom_call.1} parent=31 // pred_region
          %244 = dma.done [#allocation7], 96
        $region44: #{tpu_custom_call.1} parent=31 // pred_fallthru
          _
        %s245 = sand.u32 %s50, 1
        %s246 = scalar_lea.sflag [#allocation4], %s245
        %s247 = sand.u32 %s50, 1
        %s248 = smul.addr %s247, 1024
        %s249 = scalar_lea.vmem [#allocation3], %s248
        %p250 = pneg %p63
        %p251 = pneg %p60
        %p252 = pneg %p91
        %p253 = pneg %p88
        %p254 = pneg %p117
        %p255 = pneg %p114
        %p256 = pneg %p145
        %p257 = pneg %p142
        %s258 = sand.u32 %s132, 1
        %s259 = scalar_lea.sflag [#allocation5], %s258
        %s260 = sand.u32 %s132, 1
        %s261 = smul.addr %s260, 3072
        %s262 = scalar_lea.vmem [#allocation9], %s261
        %s263 = smul.u32 64, %s26
        %s264 = smul.u32 2, %s28
        %s265 = smul.u32 32, %s28
        %s266 = smul.u32 6, %s27
        %s267 = smul.u32 6, %s27
        %s268 = smul.u32 64, %s26
        %s269 = smul.u32 6, %s27
        %p270 = scmp.eq.s32.totalorder %s28, 0
        // Predicated region
        $region45: #{tpu_custom_call.1} parent=31 // pred_check
          %p271 = pneg %p270
        $region46: #{tpu_custom_call.1} parent=31 // pred_check_branch
          %273 = sbr.rel (%p271) target = $region48
        $region47: #{tpu_custom_call.1} parent=31 // pred_region
          %274 = vst [vmem:[#allocation2] sm:$0xff] 0.0
          %275 = vst [vmem:[#allocation2 + $0x8] sm:$0xff] 0.0
          %276 = vst [vmem:[#allocation2 + $0x10] sm:$0xff] 0.0
          %277 = vst [vmem:[#allocation2 + $0x18] sm:$0xff] 0.0
          %278 = vst [vmem:[#allocation2 + $0x20] sm:$0xff] 0.0
          %279 = vst [vmem:[#allocation2 + $0x28] sm:$0xff] 0.0
          %280 = vst [vmem:[#allocation2 + $0x30] sm:$0xff] 0.0
          %281 = vst [vmem:[#allocation2 + $0x38] sm:$0xff] 0.0
          %282 = vst [vmem:[#allocation2 + $0x40] sm:$0xff] 0.0
          %283 = vst [vmem:[#allocation2 + $0x48] sm:$0xff] 0.0
          %284 = vst [vmem:[#allocation2 + $0x50] sm:$0xff] 0.0
          %285 = vst [vmem:[#allocation2 + $0x58] sm:$0xff] 0.0
          %286 = vst [vmem:[#allocation2 + $0x60] sm:$0xff] 0.0
          %287 = vst [vmem:[#allocation2 + $0x68] sm:$0xff] 0.0
          %288 = vst [vmem:[#allocation2 + $0x70] sm:$0xff] 0.0
          %289 = vst [vmem:[#allocation2 + $0x78] sm:$0xff] 0.0
          %290 = vst [vmem:[#allocation2 + $0x80] sm:$0xff] 0.0
          %291 = vst [vmem:[#allocation2 + $0x88] sm:$0xff] 0.0
          %292 = vst [vmem:[#allocation2 + $0x90] sm:$0xff] 0.0
          %293 = vst [vmem:[#allocation2 + $0x98] sm:$0xff] 0.0
          %294 = vst [vmem:[#allocation2 + $0xa0] sm:$0xff] 0.0
          %295 = vst [vmem:[#allocation2 + $0xa8] sm:$0xff] 0.0
          %296 = vst [vmem:[#allocation2 + $0xb0] sm:$0xff] 0.0
          %297 = vst [vmem:[#allocation2 + $0xb8] sm:$0xff] 0.0
          %298 = vst [vmem:[#allocation2 + $0xc0] sm:$0xff] 0.0
          %299 = vst [vmem:[#allocation2 + $0xc8] sm:$0xff] 0.0
          %300 = vst [vmem:[#allocation2 + $0xd0] sm:$0xff] 0.0
          %301 = vst [vmem:[#allocation2 + $0xd8] sm:$0xff] 0.0
          %302 = vst [vmem:[#allocation2 + $0xe0] sm:$0xff] 0.0
          %303 = vst [vmem:[#allocation2 + $0xe8] sm:$0xff] 0.0
          %304 = vst [vmem:[#allocation2 + $0xf0] sm:$0xff] 0.0
          %305 = vst [vmem:[#allocation2 + $0xf8] sm:$0xff] 0.0
          %306 = vst [vmem:[#allocation2 + $0x100] sm:$0xff] 0.0
          %307 = vst [vmem:[#allocation2 + $0x108] sm:$0xff] 0.0
          %308 = vst [vmem:[#allocation2 + $0x110] sm:$0xff] 0.0
          %309 = vst [vmem:[#allocation2 + $0x118] sm:$0xff] 0.0
          %310 = vst [vmem:[#allocation2 + $0x120] sm:$0xff] 0.0
          %311 = vst [vmem:[#allocation2 + $0x128] sm:$0xff] 0.0
          %312 = vst [vmem:[#allocation2 + $0x130] sm:$0xff] 0.0
          %313 = vst [vmem:[#allocation2 + $0x138] sm:$0xff] 0.0
          %314 = vst [vmem:[#allocation2 + $0x140] sm:$0xff] 0.0
          %315 = vst [vmem:[#allocation2 + $0x148] sm:$0xff] 0.0
          %316 = vst [vmem:[#allocation2 + $0x150] sm:$0xff] 0.0
          %317 = vst [vmem:[#allocation2 + $0x158] sm:$0xff] 0.0
          %318 = vst [vmem:[#allocation2 + $0x160] sm:$0xff] 0.0
          %319 = vst [vmem:[#allocation2 + $0x168] sm:$0xff] 0.0
          %320 = vst [vmem:[#allocation2 + $0x170] sm:$0xff] 0.0
          %321 = vst [vmem:[#allocation2 + $0x178] sm:$0xff] 0.0
          %322 = vst [vmem:[#allocation2 + $0x180] sm:$0xff] 0.0
          %323 = vst [vmem:[#allocation2 + $0x188] sm:$0xff] 0.0
          %324 = vst [vmem:[#allocation2 + $0x190] sm:$0xff] 0.0
          %325 = vst [vmem:[#allocation2 + $0x198] sm:$0xff] 0.0
          %326 = vst [vmem:[#allocation2 + $0x1a0] sm:$0xff] 0.0
          %327 = vst [vmem:[#allocation2 + $0x1a8] sm:$0xff] 0.0
          %328 = vst [vmem:[#allocation2 + $0x1b0] sm:$0xff] 0.0
          %329 = vst [vmem:[#allocation2 + $0x1b8] sm:$0xff] 0.0
          %330 = vst [vmem:[#allocation2 + $0x1c0] sm:$0xff] 0.0
          %331 = vst [vmem:[#allocation2 + $0x1c8] sm:$0xff] 0.0
          %332 = vst [vmem:[#allocation2 + $0x1d0] sm:$0xff] 0.0
          %333 = vst [vmem:[#allocation2 + $0x1d8] sm:$0xff] 0.0
          %334 = vst [vmem:[#allocation2 + $0x1e0] sm:$0xff] 0.0
          %335 = vst [vmem:[#allocation2 + $0x1e8] sm:$0xff] 0.0
          %336 = vst [vmem:[#allocation2 + $0x1f0] sm:$0xff] 0.0
          %337 = vst [vmem:[#allocation2 + $0x1f8] sm:$0xff] 0.0
          %338 = vst [vmem:[#allocation2 + $0x200] sm:$0xff] 0.0
          %339 = vst [vmem:[#allocation2 + $0x208] sm:$0xff] 0.0
          %340 = vst [vmem:[#allocation2 + $0x210] sm:$0xff] 0.0
          %341 = vst [vmem:[#allocation2 + $0x218] sm:$0xff] 0.0
          %342 = vst [vmem:[#allocation2 + $0x220] sm:$0xff] 0.0
          %343 = vst [vmem:[#allocation2 + $0x228] sm:$0xff] 0.0
          %344 = vst [vmem:[#allocation2 + $0x230] sm:$0xff] 0.0
          %345 = vst [vmem:[#allocation2 + $0x238] sm:$0xff] 0.0
          %346 = vst [vmem:[#allocation2 + $0x240] sm:$0xff] 0.0
          %347 = vst [vmem:[#allocation2 + $0x248] sm:$0xff] 0.0
          %348 = vst [vmem:[#allocation2 + $0x250] sm:$0xff] 0.0
          %349 = vst [vmem:[#allocation2 + $0x258] sm:$0xff] 0.0
          %350 = vst [vmem:[#allocation2 + $0x260] sm:$0xff] 0.0
          %351 = vst [vmem:[#allocation2 + $0x268] sm:$0xff] 0.0
          %352 = vst [vmem:[#allocation2 + $0x270] sm:$0xff] 0.0
          %353 = vst [vmem:[#allocation2 + $0x278] sm:$0xff] 0.0
          %354 = vst [vmem:[#allocation2 + $0x280] sm:$0xff] 0.0
          %355 = vst [vmem:[#allocation2 + $0x288] sm:$0xff] 0.0
          %356 = vst [vmem:[#allocation2 + $0x290] sm:$0xff] 0.0
          %357 = vst [vmem:[#allocation2 + $0x298] sm:$0xff] 0.0
          %358 = vst [vmem:[#allocation2 + $0x2a0] sm:$0xff] 0.0
          %359 = vst [vmem:[#allocation2 + $0x2a8] sm:$0xff] 0.0
          %360 = vst [vmem:[#allocation2 + $0x2b0] sm:$0xff] 0.0
          %361 = vst [vmem:[#allocation2 + $0x2b8] sm:$0xff] 0.0
          %362 = vst [vmem:[#allocation2 + $0x2c0] sm:$0xff] 0.0
          %363 = vst [vmem:[#allocation2 + $0x2c8] sm:$0xff] 0.0
          %364 = vst [vmem:[#allocation2 + $0x2d0] sm:$0xff] 0.0
          %365 = vst [vmem:[#allocation2 + $0x2d8] sm:$0xff] 0.0
          %366 = vst [vmem:[#allocation2 + $0x2e0] sm:$0xff] 0.0
          %367 = vst [vmem:[#allocation2 + $0x2e8] sm:$0xff] 0.0
          %368 = vst [vmem:[#allocation2 + $0x2f0] sm:$0xff] 0.0
          %369 = vst [vmem:[#allocation2 + $0x2f8] sm:$0xff] 0.0
          %370 = vst [vmem:[#allocation2 + $0x300] sm:$0xff] 0.0
          %371 = vst [vmem:[#allocation2 + $0x308] sm:$0xff] 0.0
          %372 = vst [vmem:[#allocation2 + $0x310] sm:$0xff] 0.0
          %373 = vst [vmem:[#allocation2 + $0x318] sm:$0xff] 0.0
          %374 = vst [vmem:[#allocation2 + $0x320] sm:$0xff] 0.0
          %375 = vst [vmem:[#allocation2 + $0x328] sm:$0xff] 0.0
          %376 = vst [vmem:[#allocation2 + $0x330] sm:$0xff] 0.0
          %377 = vst [vmem:[#allocation2 + $0x338] sm:$0xff] 0.0
          %378 = vst [vmem:[#allocation2 + $0x340] sm:$0xff] 0.0
          %379 = vst [vmem:[#allocation2 + $0x348] sm:$0xff] 0.0
          %380 = vst [vmem:[#allocation2 + $0x350] sm:$0xff] 0.0
          %381 = vst [vmem:[#allocation2 + $0x358] sm:$0xff] 0.0
          %382 = vst [vmem:[#allocation2 + $0x360] sm:$0xff] 0.0
          %383 = vst [vmem:[#allocation2 + $0x368] sm:$0xff] 0.0
          %384 = vst [vmem:[#allocation2 + $0x370] sm:$0xff] 0.0
          %385 = vst [vmem:[#allocation2 + $0x378] sm:$0xff] 0.0
          %386 = vst [vmem:[#allocation2 + $0x380] sm:$0xff] 0.0
          %387 = vst [vmem:[#allocation2 + $0x388] sm:$0xff] 0.0
          %388 = vst [vmem:[#allocation2 + $0x390] sm:$0xff] 0.0
          %389 = vst [vmem:[#allocation2 + $0x398] sm:$0xff] 0.0
          %390 = vst [vmem:[#allocation2 + $0x3a0] sm:$0xff] 0.0
          %391 = vst [vmem:[#allocation2 + $0x3a8] sm:$0xff] 0.0
          %392 = vst [vmem:[#allocation2 + $0x3b0] sm:$0xff] 0.0
          %393 = vst [vmem:[#allocation2 + $0x3b8] sm:$0xff] 0.0
          %394 = vst [vmem:[#allocation2 + $0x3c0] sm:$0xff] 0.0
          %395 = vst [vmem:[#allocation2 + $0x3c8] sm:$0xff] 0.0
          %396 = vst [vmem:[#allocation2 + $0x3d0] sm:$0xff] 0.0
          %397 = vst [vmem:[#allocation2 + $0x3d8] sm:$0xff] 0.0
          %398 = vst [vmem:[#allocation2 + $0x3e0] sm:$0xff] 0.0
          %399 = vst [vmem:[#allocation2 + $0x3e8] sm:$0xff] 0.0
          %400 = vst [vmem:[#allocation2 + $0x3f0] sm:$0xff] 0.0
          %401 = vst [vmem:[#allocation2 + $0x3f8] sm:$0xff] 0.0
          %402 = vst [vmem:[#allocation2 + $0x400] sm:$0xff] 0.0
          %403 = vst [vmem:[#allocation2 + $0x408] sm:$0xff] 0.0
          %404 = vst [vmem:[#allocation2 + $0x410] sm:$0xff] 0.0
          %405 = vst [vmem:[#allocation2 + $0x418] sm:$0xff] 0.0
          %406 = vst [vmem:[#allocation2 + $0x420] sm:$0xff] 0.0
          %407 = vst [vmem:[#allocation2 + $0x428] sm:$0xff] 0.0
          %408 = vst [vmem:[#allocation2 + $0x430] sm:$0xff] 0.0
          %409 = vst [vmem:[#allocation2 + $0x438] sm:$0xff] 0.0
          %410 = vst [vmem:[#allocation2 + $0x440] sm:$0xff] 0.0
          %411 = vst [vmem:[#allocation2 + $0x448] sm:$0xff] 0.0
          %412 = vst [vmem:[#allocation2 + $0x450] sm:$0xff] 0.0
          %413 = vst [vmem:[#allocation2 + $0x458] sm:$0xff] 0.0
          %414 = vst [vmem:[#allocation2 + $0x460] sm:$0xff] 0.0
          %415 = vst [vmem:[#allocation2 + $0x468] sm:$0xff] 0.0
          %416 = vst [vmem:[#allocation2 + $0x470] sm:$0xff] 0.0
          %417 = vst [vmem:[#allocation2 + $0x478] sm:$0xff] 0.0
          %418 = vst [vmem:[#allocation2 + $0x480] sm:$0xff] 0.0
          %419 = vst [vmem:[#allocation2 + $0x488] sm:$0xff] 0.0
          %420 = vst [vmem:[#allocation2 + $0x490] sm:$0xff] 0.0
          %421 = vst [vmem:[#allocation2 + $0x498] sm:$0xff] 0.0
          %422 = vst [vmem:[#allocation2 + $0x4a0] sm:$0xff] 0.0
          %423 = vst [vmem:[#allocation2 + $0x4a8] sm:$0xff] 0.0
          %424 = vst [vmem:[#allocation2 + $0x4b0] sm:$0xff] 0.0
          %425 = vst [vmem:[#allocation2 + $0x4b8] sm:$0xff] 0.0
          %426 = vst [vmem:[#allocation2 + $0x4c0] sm:$0xff] 0.0
          %427 = vst [vmem:[#allocation2 + $0x4c8] sm:$0xff] 0.0
          %428 = vst [vmem:[#allocation2 + $0x4d0] sm:$0xff] 0.0
          %429 = vst [vmem:[#allocation2 + $0x4d8] sm:$0xff] 0.0
          %430 = vst [vmem:[#allocation2 + $0x4e0] sm:$0xff] 0.0
          %431 = vst [vmem:[#allocation2 + $0x4e8] sm:$0xff] 0.0
          %432 = vst [vmem:[#allocation2 + $0x4f0] sm:$0xff] 0.0
          %433 = vst [vmem:[#allocation2 + $0x4f8] sm:$0xff] 0.0
          %434 = vst [vmem:[#allocation2 + $0x500] sm:$0xff] 0.0
          %435 = vst [vmem:[#allocation2 + $0x508] sm:$0xff] 0.0
          %436 = vst [vmem:[#allocation2 + $0x510] sm:$0xff] 0.0
          %437 = vst [vmem:[#allocation2 + $0x518] sm:$0xff] 0.0
          %438 = vst [vmem:[#allocation2 + $0x520] sm:$0xff] 0.0
          %439 = vst [vmem:[#allocation2 + $0x528] sm:$0xff] 0.0
          %440 = vst [vmem:[#allocation2 + $0x530] sm:$0xff] 0.0
          %441 = vst [vmem:[#allocation2 + $0x538] sm:$0xff] 0.0
          %442 = vst [vmem:[#allocation2 + $0x540] sm:$0xff] 0.0
          %443 = vst [vmem:[#allocation2 + $0x548] sm:$0xff] 0.0
          %444 = vst [vmem:[#allocation2 + $0x550] sm:$0xff] 0.0
          %445 = vst [vmem:[#allocation2 + $0x558] sm:$0xff] 0.0
          %446 = vst [vmem:[#allocation2 + $0x560] sm:$0xff] 0.0
          %447 = vst [vmem:[#allocation2 + $0x568] sm:$0xff] 0.0
          %448 = vst [vmem:[#allocation2 + $0x570] sm:$0xff] 0.0
          %449 = vst [vmem:[#allocation2 + $0x578] sm:$0xff] 0.0
          %450 = vst [vmem:[#allocation2 + $0x580] sm:$0xff] 0.0
          %451 = vst [vmem:[#allocation2 + $0x588] sm:$0xff] 0.0
          %452 = vst [vmem:[#allocation2 + $0x590] sm:$0xff] 0.0
          %453 = vst [vmem:[#allocation2 + $0x598] sm:$0xff] 0.0
          %454 = vst [vmem:[#allocation2 + $0x5a0] sm:$0xff] 0.0
          %455 = vst [vmem:[#allocation2 + $0x5a8] sm:$0xff] 0.0
          %456 = vst [vmem:[#allocation2 + $0x5b0] sm:$0xff] 0.0
          %457 = vst [vmem:[#allocation2 + $0x5b8] sm:$0xff] 0.0
          %458 = vst [vmem:[#allocation2 + $0x5c0] sm:$0xff] 0.0
          %459 = vst [vmem:[#allocation2 + $0x5c8] sm:$0xff] 0.0
          %460 = vst [vmem:[#allocation2 + $0x5d0] sm:$0xff] 0.0
          %461 = vst [vmem:[#allocation2 + $0x5d8] sm:$0xff] 0.0
          %462 = vst [vmem:[#allocation2 + $0x5e0] sm:$0xff] 0.0
          %463 = vst [vmem:[#allocation2 + $0x5e8] sm:$0xff] 0.0
          %464 = vst [vmem:[#allocation2 + $0x5f0] sm:$0xff] 0.0
          %465 = vst [vmem:[#allocation2 + $0x5f8] sm:$0xff] 0.0
          %466 = vst [vmem:[#allocation2 + $0x600] sm:$0xff] 0.0
          %467 = vst [vmem:[#allocation2 + $0x608] sm:$0xff] 0.0
          %468 = vst [vmem:[#allocation2 + $0x610] sm:$0xff] 0.0
          %469 = vst [vmem:[#allocation2 + $0x618] sm:$0xff] 0.0
          %470 = vst [vmem:[#allocation2 + $0x620] sm:$0xff] 0.0
          %471 = vst [vmem:[#allocation2 + $0x628] sm:$0xff] 0.0
          %472 = vst [vmem:[#allocation2 + $0x630] sm:$0xff] 0.0
          %473 = vst [vmem:[#allocation2 + $0x638] sm:$0xff] 0.0
          %474 = vst [vmem:[#allocation2 + $0x640] sm:$0xff] 0.0
          %475 = vst [vmem:[#allocation2 + $0x648] sm:$0xff] 0.0
          %476 = vst [vmem:[#allocation2 + $0x650] sm:$0xff] 0.0
          %477 = vst [vmem:[#allocation2 + $0x658] sm:$0xff] 0.0
          %478 = vst [vmem:[#allocation2 + $0x660] sm:$0xff] 0.0
          %479 = vst [vmem:[#allocation2 + $0x668] sm:$0xff] 0.0
          %480 = vst [vmem:[#allocation2 + $0x670] sm:$0xff] 0.0
          %481 = vst [vmem:[#allocation2 + $0x678] sm:$0xff] 0.0
          %482 = vst [vmem:[#allocation2 + $0x680] sm:$0xff] 0.0
          %483 = vst [vmem:[#allocation2 + $0x688] sm:$0xff] 0.0
          %484 = vst [vmem:[#allocation2 + $0x690] sm:$0xff] 0.0
          %485 = vst [vmem:[#allocation2 + $0x698] sm:$0xff] 0.0
          %486 = vst [vmem:[#allocation2 + $0x6a0] sm:$0xff] 0.0
          %487 = vst [vmem:[#allocation2 + $0x6a8] sm:$0xff] 0.0
          %488 = vst [vmem:[#allocation2 + $0x6b0] sm:$0xff] 0.0
          %489 = vst [vmem:[#allocation2 + $0x6b8] sm:$0xff] 0.0
          %490 = vst [vmem:[#allocation2 + $0x6c0] sm:$0xff] 0.0
          %491 = vst [vmem:[#allocation2 + $0x6c8] sm:$0xff] 0.0
          %492 = vst [vmem:[#allocation2 + $0x6d0] sm:$0xff] 0.0
          %493 = vst [vmem:[#allocation2 + $0x6d8] sm:$0xff] 0.0
          %494 = vst [vmem:[#allocation2 + $0x6e0] sm:$0xff] 0.0
          %495 = vst [vmem:[#allocation2 + $0x6e8] sm:$0xff] 0.0
          %496 = vst [vmem:[#allocation2 + $0x6f0] sm:$0xff] 0.0
          %497 = vst [vmem:[#allocation2 + $0x6f8] sm:$0xff] 0.0
          %498 = vst [vmem:[#allocation2 + $0x700] sm:$0xff] 0.0
          %499 = vst [vmem:[#allocation2 + $0x708] sm:$0xff] 0.0
          %500 = vst [vmem:[#allocation2 + $0x710] sm:$0xff] 0.0
          %501 = vst [vmem:[#allocation2 + $0x718] sm:$0xff] 0.0
          %502 = vst [vmem:[#allocation2 + $0x720] sm:$0xff] 0.0
          %503 = vst [vmem:[#allocation2 + $0x728] sm:$0xff] 0.0
          %504 = vst [vmem:[#allocation2 + $0x730] sm:$0xff] 0.0
          %505 = vst [vmem:[#allocation2 + $0x738] sm:$0xff] 0.0
          %506 = vst [vmem:[#allocation2 + $0x740] sm:$0xff] 0.0
          %507 = vst [vmem:[#allocation2 + $0x748] sm:$0xff] 0.0
          %508 = vst [vmem:[#allocation2 + $0x750] sm:$0xff] 0.0
          %509 = vst [vmem:[#allocation2 + $0x758] sm:$0xff] 0.0
          %510 = vst [vmem:[#allocation2 + $0x760] sm:$0xff] 0.0
          %511 = vst [vmem:[#allocation2 + $0x768] sm:$0xff] 0.0
          %512 = vst [vmem:[#allocation2 + $0x770] sm:$0xff] 0.0
          %513 = vst [vmem:[#allocation2 + $0x778] sm:$0xff] 0.0
          %514 = vst [vmem:[#allocation2 + $0x780] sm:$0xff] 0.0
          %515 = vst [vmem:[#allocation2 + $0x788] sm:$0xff] 0.0
          %516 = vst [vmem:[#allocation2 + $0x790] sm:$0xff] 0.0
          %517 = vst [vmem:[#allocation2 + $0x798] sm:$0xff] 0.0
          %518 = vst [vmem:[#allocation2 + $0x7a0] sm:$0xff] 0.0
          %519 = vst [vmem:[#allocation2 + $0x7a8] sm:$0xff] 0.0
          %520 = vst [vmem:[#allocation2 + $0x7b0] sm:$0xff] 0.0
          %521 = vst [vmem:[#allocation2 + $0x7b8] sm:$0xff] 0.0
          %522 = vst [vmem:[#allocation2 + $0x7c0] sm:$0xff] 0.0
          %523 = vst [vmem:[#allocation2 + $0x7c8] sm:$0xff] 0.0
          %524 = vst [vmem:[#allocation2 + $0x7d0] sm:$0xff] 0.0
          %525 = vst [vmem:[#allocation2 + $0x7d8] sm:$0xff] 0.0
          %526 = vst [vmem:[#allocation2 + $0x7e0] sm:$0xff] 0.0
          %527 = vst [vmem:[#allocation2 + $0x7e8] sm:$0xff] 0.0
          %528 = vst [vmem:[#allocation2 + $0x7f0] sm:$0xff] 0.0
          %529 = vst [vmem:[#allocation2 + $0x7f8] sm:$0xff] 0.0
          %530 = vst [vmem:[#allocation2 + $0x800] sm:$0xff] 0.0
          %531 = vst [vmem:[#allocation2 + $0x808] sm:$0xff] 0.0
          %532 = vst [vmem:[#allocation2 + $0x810] sm:$0xff] 0.0
          %533 = vst [vmem:[#allocation2 + $0x818] sm:$0xff] 0.0
          %534 = vst [vmem:[#allocation2 + $0x820] sm:$0xff] 0.0
          %535 = vst [vmem:[#allocation2 + $0x828] sm:$0xff] 0.0
          %536 = vst [vmem:[#allocation2 + $0x830] sm:$0xff] 0.0
          %537 = vst [vmem:[#allocation2 + $0x838] sm:$0xff] 0.0
          %538 = vst [vmem:[#allocation2 + $0x840] sm:$0xff] 0.0
          %539 = vst [vmem:[#allocation2 + $0x848] sm:$0xff] 0.0
          %540 = vst [vmem:[#allocation2 + $0x850] sm:$0xff] 0.0
          %541 = vst [vmem:[#allocation2 + $0x858] sm:$0xff] 0.0
          %542 = vst [vmem:[#allocation2 + $0x860] sm:$0xff] 0.0
          %543 = vst [vmem:[#allocation2 + $0x868] sm:$0xff] 0.0
          %544 = vst [vmem:[#allocation2 + $0x870] sm:$0xff] 0.0
          %545 = vst [vmem:[#allocation2 + $0x878] sm:$0xff] 0.0
          %546 = vst [vmem:[#allocation2 + $0x880] sm:$0xff] 0.0
          %547 = vst [vmem:[#allocation2 + $0x888] sm:$0xff] 0.0
          %548 = vst [vmem:[#allocation2 + $0x890] sm:$0xff] 0.0
          %549 = vst [vmem:[#allocation2 + $0x898] sm:$0xff] 0.0
          %550 = vst [vmem:[#allocation2 + $0x8a0] sm:$0xff] 0.0
          %551 = vst [vmem:[#allocation2 + $0x8a8] sm:$0xff] 0.0
          %552 = vst [vmem:[#allocation2 + $0x8b0] sm:$0xff] 0.0
          %553 = vst [vmem:[#allocation2 + $0x8b8] sm:$0xff] 0.0
          %554 = vst [vmem:[#allocation2 + $0x8c0] sm:$0xff] 0.0
          %555 = vst [vmem:[#allocation2 + $0x8c8] sm:$0xff] 0.0
          %556 = vst [vmem:[#allocation2 + $0x8d0] sm:$0xff] 0.0
          %557 = vst [vmem:[#allocation2 + $0x8d8] sm:$0xff] 0.0
          %558 = vst [vmem:[#allocation2 + $0x8e0] sm:$0xff] 0.0
          %559 = vst [vmem:[#allocation2 + $0x8e8] sm:$0xff] 0.0
          %560 = vst [vmem:[#allocation2 + $0x8f0] sm:$0xff] 0.0
          %561 = vst [vmem:[#allocation2 + $0x8f8] sm:$0xff] 0.0
          %562 = vst [vmem:[#allocation2 + $0x900] sm:$0xff] 0.0
          %563 = vst [vmem:[#allocation2 + $0x908] sm:$0xff] 0.0
          %564 = vst [vmem:[#allocation2 + $0x910] sm:$0xff] 0.0
          %565 = vst [vmem:[#allocation2 + $0x918] sm:$0xff] 0.0
          %566 = vst [vmem:[#allocation2 + $0x920] sm:$0xff] 0.0
          %567 = vst [vmem:[#allocation2 + $0x928] sm:$0xff] 0.0
          %568 = vst [vmem:[#allocation2 + $0x930] sm:$0xff] 0.0
          %569 = vst [vmem:[#allocation2 + $0x938] sm:$0xff] 0.0
          %570 = vst [vmem:[#allocation2 + $0x940] sm:$0xff] 0.0
          %571 = vst [vmem:[#allocation2 + $0x948] sm:$0xff] 0.0
          %572 = vst [vmem:[#allocation2 + $0x950] sm:$0xff] 0.0
          %573 = vst [vmem:[#allocation2 + $0x958] sm:$0xff] 0.0
          %574 = vst [vmem:[#allocation2 + $0x960] sm:$0xff] 0.0
          %575 = vst [vmem:[#allocation2 + $0x968] sm:$0xff] 0.0
          %576 = vst [vmem:[#allocation2 + $0x970] sm:$0xff] 0.0
          %577 = vst [vmem:[#allocation2 + $0x978] sm:$0xff] 0.0
          %578 = vst [vmem:[#allocation2 + $0x980] sm:$0xff] 0.0
          %579 = vst [vmem:[#allocation2 + $0x988] sm:$0xff] 0.0
          %580 = vst [vmem:[#allocation2 + $0x990] sm:$0xff] 0.0
          %581 = vst [vmem:[#allocation2 + $0x998] sm:$0xff] 0.0
          %582 = vst [vmem:[#allocation2 + $0x9a0] sm:$0xff] 0.0
          %583 = vst [vmem:[#allocation2 + $0x9a8] sm:$0xff] 0.0
          %584 = vst [vmem:[#allocation2 + $0x9b0] sm:$0xff] 0.0
          %585 = vst [vmem:[#allocation2 + $0x9b8] sm:$0xff] 0.0
          %586 = vst [vmem:[#allocation2 + $0x9c0] sm:$0xff] 0.0
          %587 = vst [vmem:[#allocation2 + $0x9c8] sm:$0xff] 0.0
          %588 = vst [vmem:[#allocation2 + $0x9d0] sm:$0xff] 0.0
          %589 = vst [vmem:[#allocation2 + $0x9d8] sm:$0xff] 0.0
          %590 = vst [vmem:[#allocation2 + $0x9e0] sm:$0xff] 0.0
          %591 = vst [vmem:[#allocation2 + $0x9e8] sm:$0xff] 0.0
          %592 = vst [vmem:[#allocation2 + $0x9f0] sm:$0xff] 0.0
          %593 = vst [vmem:[#allocation2 + $0x9f8] sm:$0xff] 0.0
          %594 = vst [vmem:[#allocation2 + $0xa00] sm:$0xff] 0.0
          %595 = vst [vmem:[#allocation2 + $0xa08] sm:$0xff] 0.0
          %596 = vst [vmem:[#allocation2 + $0xa10] sm:$0xff] 0.0
          %597 = vst [vmem:[#allocation2 + $0xa18] sm:$0xff] 0.0
          %598 = vst [vmem:[#allocation2 + $0xa20] sm:$0xff] 0.0
          %599 = vst [vmem:[#allocation2 + $0xa28] sm:$0xff] 0.0
          %600 = vst [vmem:[#allocation2 + $0xa30] sm:$0xff] 0.0
          %601 = vst [vmem:[#allocation2 + $0xa38] sm:$0xff] 0.0
          %602 = vst [vmem:[#allocation2 + $0xa40] sm:$0xff] 0.0
          %603 = vst [vmem:[#allocation2 + $0xa48] sm:$0xff] 0.0
          %604 = vst [vmem:[#allocation2 + $0xa50] sm:$0xff] 0.0
          %605 = vst [vmem:[#allocation2 + $0xa58] sm:$0xff] 0.0
          %606 = vst [vmem:[#allocation2 + $0xa60] sm:$0xff] 0.0
          %607 = vst [vmem:[#allocation2 + $0xa68] sm:$0xff] 0.0
          %608 = vst [vmem:[#allocation2 + $0xa70] sm:$0xff] 0.0
          %609 = vst [vmem:[#allocation2 + $0xa78] sm:$0xff] 0.0
          %610 = vst [vmem:[#allocation2 + $0xa80] sm:$0xff] 0.0
          %611 = vst [vmem:[#allocation2 + $0xa88] sm:$0xff] 0.0
          %612 = vst [vmem:[#allocation2 + $0xa90] sm:$0xff] 0.0
          %613 = vst [vmem:[#allocation2 + $0xa98] sm:$0xff] 0.0
          %614 = vst [vmem:[#allocation2 + $0xaa0] sm:$0xff] 0.0
          %615 = vst [vmem:[#allocation2 + $0xaa8] sm:$0xff] 0.0
          %616 = vst [vmem:[#allocation2 + $0xab0] sm:$0xff] 0.0
          %617 = vst [vmem:[#allocation2 + $0xab8] sm:$0xff] 0.0
          %618 = vst [vmem:[#allocation2 + $0xac0] sm:$0xff] 0.0
          %619 = vst [vmem:[#allocation2 + $0xac8] sm:$0xff] 0.0
          %620 = vst [vmem:[#allocation2 + $0xad0] sm:$0xff] 0.0
          %621 = vst [vmem:[#allocation2 + $0xad8] sm:$0xff] 0.0
          %622 = vst [vmem:[#allocation2 + $0xae0] sm:$0xff] 0.0
          %623 = vst [vmem:[#allocation2 + $0xae8] sm:$0xff] 0.0
          %624 = vst [vmem:[#allocation2 + $0xaf0] sm:$0xff] 0.0
          %625 = vst [vmem:[#allocation2 + $0xaf8] sm:$0xff] 0.0
          %626 = vst [vmem:[#allocation2 + $0xb00] sm:$0xff] 0.0
          %627 = vst [vmem:[#allocation2 + $0xb08] sm:$0xff] 0.0
          %628 = vst [vmem:[#allocation2 + $0xb10] sm:$0xff] 0.0
          %629 = vst [vmem:[#allocation2 + $0xb18] sm:$0xff] 0.0
          %630 = vst [vmem:[#allocation2 + $0xb20] sm:$0xff] 0.0
          %631 = vst [vmem:[#allocation2 + $0xb28] sm:$0xff] 0.0
          %632 = vst [vmem:[#allocation2 + $0xb30] sm:$0xff] 0.0
          %633 = vst [vmem:[#allocation2 + $0xb38] sm:$0xff] 0.0
          %634 = vst [vmem:[#allocation2 + $0xb40] sm:$0xff] 0.0
          %635 = vst [vmem:[#allocation2 + $0xb48] sm:$0xff] 0.0
          %636 = vst [vmem:[#allocation2 + $0xb50] sm:$0xff] 0.0
          %637 = vst [vmem:[#allocation2 + $0xb58] sm:$0xff] 0.0
          %638 = vst [vmem:[#allocation2 + $0xb60] sm:$0xff] 0.0
          %639 = vst [vmem:[#allocation2 + $0xb68] sm:$0xff] 0.0
          %640 = vst [vmem:[#allocation2 + $0xb70] sm:$0xff] 0.0
          %641 = vst [vmem:[#allocation2 + $0xb78] sm:$0xff] 0.0
          %642 = vst [vmem:[#allocation2 + $0xb80] sm:$0xff] 0.0
          %643 = vst [vmem:[#allocation2 + $0xb88] sm:$0xff] 0.0
          %644 = vst [vmem:[#allocation2 + $0xb90] sm:$0xff] 0.0
          %645 = vst [vmem:[#allocation2 + $0xb98] sm:$0xff] 0.0
          %646 = vst [vmem:[#allocation2 + $0xba0] sm:$0xff] 0.0
          %647 = vst [vmem:[#allocation2 + $0xba8] sm:$0xff] 0.0
          %648 = vst [vmem:[#allocation2 + $0xbb0] sm:$0xff] 0.0
          %649 = vst [vmem:[#allocation2 + $0xbb8] sm:$0xff] 0.0
          %650 = vst [vmem:[#allocation2 + $0xbc0] sm:$0xff] 0.0
          %651 = vst [vmem:[#allocation2 + $0xbc8] sm:$0xff] 0.0
          %652 = vst [vmem:[#allocation2 + $0xbd0] sm:$0xff] 0.0
          %653 = vst [vmem:[#allocation2 + $0xbd8] sm:$0xff] 0.0
          %654 = vst [vmem:[#allocation2 + $0xbe0] sm:$0xff] 0.0
          %655 = vst [vmem:[#allocation2 + $0xbe8] sm:$0xff] 0.0
          %656 = vst [vmem:[#allocation2 + $0xbf0] sm:$0xff] 0.0
          %657 = vst [vmem:[#allocation2 + $0xbf8] sm:$0xff] 0.0
        $region48: #{tpu_custom_call.1} parent=31 // pred_fallthru
          _
        %v658 = vld [vmem:[#allocation2] sm:$0xff]
        %v659 = vld [vmem:[#allocation2 + $0x8] sm:$0xff]
        %v660 = vld [vmem:[#allocation2 + $0x10] sm:$0xff]
        %v661 = vld [vmem:[#allocation2 + $0x18] sm:$0xff]
        %v662 = vld [vmem:[#allocation2 + $0x20] sm:$0xff]
        %v663 = vld [vmem:[#allocation2 + $0x28] sm:$0xff]
        %v664 = vld [vmem:[#allocation2 + $0x30] sm:$0xff]
        %v665 = vld [vmem:[#allocation2 + $0x38] sm:$0xff]
        %v666 = vld [vmem:[#allocation2 + $0x40] sm:$0xff]
        %v667 = vld [vmem:[#allocation2 + $0x48] sm:$0xff]
        %v668 = vld [vmem:[#allocation2 + $0x50] sm:$0xff]
        %v669 = vld [vmem:[#allocation2 + $0x58] sm:$0xff]
        %v670 = vld [vmem:[#allocation2 + $0x60] sm:$0xff]
        %v671 = vld [vmem:[#allocation2 + $0x68] sm:$0xff]
        %v672 = vld [vmem:[#allocation2 + $0x70] sm:$0xff]
        %v673 = vld [vmem:[#allocation2 + $0x78] sm:$0xff]
        %v674 = vld [vmem:[#allocation2 + $0x80] sm:$0xff]
        %v675 = vld [vmem:[#allocation2 + $0x88] sm:$0xff]
        %v676 = vld [vmem:[#allocation2 + $0x90] sm:$0xff]
        %v677 = vld [vmem:[#allocation2 + $0x98] sm:$0xff]
        %v678 = vld [vmem:[#allocation2 + $0xa0] sm:$0xff]
        %v679 = vld [vmem:[#allocation2 + $0xa8] sm:$0xff]
        %v680 = vld [vmem:[#allocation2 + $0xb0] sm:$0xff]
        %v681 = vld [vmem:[#allocation2 + $0xb8] sm:$0xff]
        %v682 = vld [vmem:[#allocation2 + $0xc0] sm:$0xff]
        %v683 = vld [vmem:[#allocation2 + $0xc8] sm:$0xff]
        %v684 = vld [vmem:[#allocation2 + $0xd0] sm:$0xff]
        %v685 = vld [vmem:[#allocation2 + $0xd8] sm:$0xff]
        %v686 = vld [vmem:[#allocation2 + $0xe0] sm:$0xff]
        %v687 = vld [vmem:[#allocation2 + $0xe8] sm:$0xff]
        %v688 = vld [vmem:[#allocation2 + $0xf0] sm:$0xff]
        %v689 = vld [vmem:[#allocation2 + $0xf8] sm:$0xff]
        %v690 = vld [vmem:[#allocation2 + $0x100] sm:$0xff]
        %v691 = vld [vmem:[#allocation2 + $0x108] sm:$0xff]
        %v692 = vld [vmem:[#allocation2 + $0x110] sm:$0xff]
        %v693 = vld [vmem:[#allocation2 + $0x118] sm:$0xff]
        %v694 = vld [vmem:[#allocation2 + $0x120] sm:$0xff]
        %v695 = vld [vmem:[#allocation2 + $0x128] sm:$0xff]
        %v696 = vld [vmem:[#allocation2 + $0x130] sm:$0xff]
        %v697 = vld [vmem:[#allocation2 + $0x138] sm:$0xff]
        %v698 = vld [vmem:[#allocation2 + $0x140] sm:$0xff]
        %v699 = vld [vmem:[#allocation2 + $0x148] sm:$0xff]
        %v700 = vld [vmem:[#allocation2 + $0x150] sm:$0xff]
        %v701 = vld [vmem:[#allocation2 + $0x158] sm:$0xff]
        %v702 = vld [vmem:[#allocation2 + $0x160] sm:$0xff]
        %v703 = vld [vmem:[#allocation2 + $0x168] sm:$0xff]
        %v704 = vld [vmem:[#allocation2 + $0x170] sm:$0xff]
        %v705 = vld [vmem:[#allocation2 + $0x178] sm:$0xff]
        %v706 = vld [vmem:[#allocation2 + $0x180] sm:$0xff]
        %v707 = vld [vmem:[#allocation2 + $0x188] sm:$0xff]
        %v708 = vld [vmem:[#allocation2 + $0x190] sm:$0xff]
        %v709 = vld [vmem:[#allocation2 + $0x198] sm:$0xff]
        %v710 = vld [vmem:[#allocation2 + $0x1a0] sm:$0xff]
        %v711 = vld [vmem:[#allocation2 + $0x1a8] sm:$0xff]
        %v712 = vld [vmem:[#allocation2 + $0x1b0] sm:$0xff]
        %v713 = vld [vmem:[#allocation2 + $0x1b8] sm:$0xff]
        %v714 = vld [vmem:[#allocation2 + $0x1c0] sm:$0xff]
        %v715 = vld [vmem:[#allocation2 + $0x1c8] sm:$0xff]
        %v716 = vld [vmem:[#allocation2 + $0x1d0] sm:$0xff]
        %v717 = vld [vmem:[#allocation2 + $0x1d8] sm:$0xff]
        %v718 = vld [vmem:[#allocation2 + $0x1e0] sm:$0xff]
        %v719 = vld [vmem:[#allocation2 + $0x1e8] sm:$0xff]
        %v720 = vld [vmem:[#allocation2 + $0x1f0] sm:$0xff]
        %v721 = vld [vmem:[#allocation2 + $0x1f8] sm:$0xff]
        %v722 = vld [vmem:[#allocation2 + $0x200] sm:$0xff]
        %v723 = vld [vmem:[#allocation2 + $0x208] sm:$0xff]
        %v724 = vld [vmem:[#allocation2 + $0x210] sm:$0xff]
        %v725 = vld [vmem:[#allocation2 + $0x218] sm:$0xff]
        %v726 = vld [vmem:[#allocation2 + $0x220] sm:$0xff]
        %v727 = vld [vmem:[#allocation2 + $0x228] sm:$0xff]
        %v728 = vld [vmem:[#allocation2 + $0x230] sm:$0xff]
        %v729 = vld [vmem:[#allocation2 + $0x238] sm:$0xff]
        %v730 = vld [vmem:[#allocation2 + $0x240] sm:$0xff]
        %v731 = vld [vmem:[#allocation2 + $0x248] sm:$0xff]
        %v732 = vld [vmem:[#allocation2 + $0x250] sm:$0xff]
        %v733 = vld [vmem:[#allocation2 + $0x258] sm:$0xff]
        %v734 = vld [vmem:[#allocation2 + $0x260] sm:$0xff]
        %v735 = vld [vmem:[#allocation2 + $0x268] sm:$0xff]
        %v736 = vld [vmem:[#allocation2 + $0x270] sm:$0xff]
        %v737 = vld [vmem:[#allocation2 + $0x278] sm:$0xff]
        %v738 = vld [vmem:[#allocation2 + $0x280] sm:$0xff]
        %v739 = vld [vmem:[#allocation2 + $0x288] sm:$0xff]
        %v740 = vld [vmem:[#allocation2 + $0x290] sm:$0xff]
        %v741 = vld [vmem:[#allocation2 + $0x298] sm:$0xff]
        %v742 = vld [vmem:[#allocation2 + $0x2a0] sm:$0xff]
        %v743 = vld [vmem:[#allocation2 + $0x2a8] sm:$0xff]
        %v744 = vld [vmem:[#allocation2 + $0x2b0] sm:$0xff]
        %v745 = vld [vmem:[#allocation2 + $0x2b8] sm:$0xff]
        %v746 = vld [vmem:[#allocation2 + $0x2c0] sm:$0xff]
        %v747 = vld [vmem:[#allocation2 + $0x2c8] sm:$0xff]
        %v748 = vld [vmem:[#allocation2 + $0x2d0] sm:$0xff]
        %v749 = vld [vmem:[#allocation2 + $0x2d8] sm:$0xff]
        %v750 = vld [vmem:[#allocation2 + $0x2e0] sm:$0xff]
        %v751 = vld [vmem:[#allocation2 + $0x2e8] sm:$0xff]
        %v752 = vld [vmem:[#allocation2 + $0x2f0] sm:$0xff]
        %v753 = vld [vmem:[#allocation2 + $0x2f8] sm:$0xff]
        %v754 = vld [vmem:[#allocation2 + $0x300] sm:$0xff]
        %v755 = vld [vmem:[#allocation2 + $0x308] sm:$0xff]
        %v756 = vld [vmem:[#allocation2 + $0x310] sm:$0xff]
        %v757 = vld [vmem:[#allocation2 + $0x318] sm:$0xff]
        %v758 = vld [vmem:[#allocation2 + $0x320] sm:$0xff]
        %v759 = vld [vmem:[#allocation2 + $0x328] sm:$0xff]
        %v760 = vld [vmem:[#allocation2 + $0x330] sm:$0xff]
        %v761 = vld [vmem:[#allocation2 + $0x338] sm:$0xff]
        %v762 = vld [vmem:[#allocation2 + $0x340] sm:$0xff]
        %v763 = vld [vmem:[#allocation2 + $0x348] sm:$0xff]
        %v764 = vld [vmem:[#allocation2 + $0x350] sm:$0xff]
        %v765 = vld [vmem:[#allocation2 + $0x358] sm:$0xff]
        %v766 = vld [vmem:[#allocation2 + $0x360] sm:$0xff]
        %v767 = vld [vmem:[#allocation2 + $0x368] sm:$0xff]
        %v768 = vld [vmem:[#allocation2 + $0x370] sm:$0xff]
        %v769 = vld [vmem:[#allocation2 + $0x378] sm:$0xff]
        %v770 = vld [vmem:[#allocation2 + $0x380] sm:$0xff]
        %v771 = vld [vmem:[#allocation2 + $0x388] sm:$0xff]
        %v772 = vld [vmem:[#allocation2 + $0x390] sm:$0xff]
        %v773 = vld [vmem:[#allocation2 + $0x398] sm:$0xff]
        %v774 = vld [vmem:[#allocation2 + $0x3a0] sm:$0xff]
        %v775 = vld [vmem:[#allocation2 + $0x3a8] sm:$0xff]
        %v776 = vld [vmem:[#allocation2 + $0x3b0] sm:$0xff]
        %v777 = vld [vmem:[#allocation2 + $0x3b8] sm:$0xff]
        %v778 = vld [vmem:[#allocation2 + $0x3c0] sm:$0xff]
        %v779 = vld [vmem:[#allocation2 + $0x3c8] sm:$0xff]
        %v780 = vld [vmem:[#allocation2 + $0x3d0] sm:$0xff]
        %v781 = vld [vmem:[#allocation2 + $0x3d8] sm:$0xff]
        %v782 = vld [vmem:[#allocation2 + $0x3e0] sm:$0xff]
        %v783 = vld [vmem:[#allocation2 + $0x3e8] sm:$0xff]
        %v784 = vld [vmem:[#allocation2 + $0x3f0] sm:$0xff]
        %v785 = vld [vmem:[#allocation2 + $0x3f8] sm:$0xff]
        %v786 = vld [vmem:[#allocation2 + $0x400] sm:$0xff]
        %v787 = vld [vmem:[#allocation2 + $0x408] sm:$0xff]
        %v788 = vld [vmem:[#allocation2 + $0x410] sm:$0xff]
        %v789 = vld [vmem:[#allocation2 + $0x418] sm:$0xff]
        %v790 = vld [vmem:[#allocation2 + $0x420] sm:$0xff]
        %v791 = vld [vmem:[#allocation2 + $0x428] sm:$0xff]
        %v792 = vld [vmem:[#allocation2 + $0x430] sm:$0xff]
        %v793 = vld [vmem:[#allocation2 + $0x438] sm:$0xff]
        %v794 = vld [vmem:[#allocation2 + $0x440] sm:$0xff]
        %v795 = vld [vmem:[#allocation2 + $0x448] sm:$0xff]
        %v796 = vld [vmem:[#allocation2 + $0x450] sm:$0xff]
        %v797 = vld [vmem:[#allocation2 + $0x458] sm:$0xff]
        %v798 = vld [vmem:[#allocation2 + $0x460] sm:$0xff]
        %v799 = vld [vmem:[#allocation2 + $0x468] sm:$0xff]
        %v800 = vld [vmem:[#allocation2 + $0x470] sm:$0xff]
        %v801 = vld [vmem:[#allocation2 + $0x478] sm:$0xff]
        %v802 = vld [vmem:[#allocation2 + $0x480] sm:$0xff]
        %v803 = vld [vmem:[#allocation2 + $0x488] sm:$0xff]
        %v804 = vld [vmem:[#allocation2 + $0x490] sm:$0xff]
        %v805 = vld [vmem:[#allocation2 + $0x498] sm:$0xff]
        %v806 = vld [vmem:[#allocation2 + $0x4a0] sm:$0xff]
        %v807 = vld [vmem:[#allocation2 + $0x4a8] sm:$0xff]
        %v808 = vld [vmem:[#allocation2 + $0x4b0] sm:$0xff]
        %v809 = vld [vmem:[#allocation2 + $0x4b8] sm:$0xff]
        %v810 = vld [vmem:[#allocation2 + $0x4c0] sm:$0xff]
        %v811 = vld [vmem:[#allocation2 + $0x4c8] sm:$0xff]
        %v812 = vld [vmem:[#allocation2 + $0x4d0] sm:$0xff]
        %v813 = vld [vmem:[#allocation2 + $0x4d8] sm:$0xff]
        %v814 = vld [vmem:[#allocation2 + $0x4e0] sm:$0xff]
        %v815 = vld [vmem:[#allocation2 + $0x4e8] sm:$0xff]
        %v816 = vld [vmem:[#allocation2 + $0x4f0] sm:$0xff]
        %v817 = vld [vmem:[#allocation2 + $0x4f8] sm:$0xff]
        %v818 = vld [vmem:[#allocation2 + $0x500] sm:$0xff]
        %v819 = vld [vmem:[#allocation2 + $0x508] sm:$0xff]
        %v820 = vld [vmem:[#allocation2 + $0x510] sm:$0xff]
        %v821 = vld [vmem:[#allocation2 + $0x518] sm:$0xff]
        %v822 = vld [vmem:[#allocation2 + $0x520] sm:$0xff]
        %v823 = vld [vmem:[#allocation2 + $0x528] sm:$0xff]
        %v824 = vld [vmem:[#allocation2 + $0x530] sm:$0xff]
        %v825 = vld [vmem:[#allocation2 + $0x538] sm:$0xff]
        %v826 = vld [vmem:[#allocation2 + $0x540] sm:$0xff]
        %v827 = vld [vmem:[#allocation2 + $0x548] sm:$0xff]
        %v828 = vld [vmem:[#allocation2 + $0x550] sm:$0xff]
        %v829 = vld [vmem:[#allocation2 + $0x558] sm:$0xff]
        %v830 = vld [vmem:[#allocation2 + $0x560] sm:$0xff]
        %v831 = vld [vmem:[#allocation2 + $0x568] sm:$0xff]
        %v832 = vld [vmem:[#allocation2 + $0x570] sm:$0xff]
        %v833 = vld [vmem:[#allocation2 + $0x578] sm:$0xff]
        %v834 = vld [vmem:[#allocation2 + $0x580] sm:$0xff]
        %v835 = vld [vmem:[#allocation2 + $0x588] sm:$0xff]
        %v836 = vld [vmem:[#allocation2 + $0x590] sm:$0xff]
        %v837 = vld [vmem:[#allocation2 + $0x598] sm:$0xff]
        %v838 = vld [vmem:[#allocation2 + $0x5a0] sm:$0xff]
        %v839 = vld [vmem:[#allocation2 + $0x5a8] sm:$0xff]
        %v840 = vld [vmem:[#allocation2 + $0x5b0] sm:$0xff]
        %v841 = vld [vmem:[#allocation2 + $0x5b8] sm:$0xff]
        %v842 = vld [vmem:[#allocation2 + $0x5c0] sm:$0xff]
        %v843 = vld [vmem:[#allocation2 + $0x5c8] sm:$0xff]
        %v844 = vld [vmem:[#allocation2 + $0x5d0] sm:$0xff]
        %v845 = vld [vmem:[#allocation2 + $0x5d8] sm:$0xff]
        %v846 = vld [vmem:[#allocation2 + $0x5e0] sm:$0xff]
        %v847 = vld [vmem:[#allocation2 + $0x5e8] sm:$0xff]
        %v848 = vld [vmem:[#allocation2 + $0x5f0] sm:$0xff]
        %v849 = vld [vmem:[#allocation2 + $0x5f8] sm:$0xff]
        %v850 = vld [vmem:[#allocation2 + $0x600] sm:$0xff]
        %v851 = vld [vmem:[#allocation2 + $0x608] sm:$0xff]
        %v852 = vld [vmem:[#allocation2 + $0x610] sm:$0xff]
        %v853 = vld [vmem:[#allocation2 + $0x618] sm:$0xff]
        %v854 = vld [vmem:[#allocation2 + $0x620] sm:$0xff]
        %v855 = vld [vmem:[#allocation2 + $0x628] sm:$0xff]
        %v856 = vld [vmem:[#allocation2 + $0x630] sm:$0xff]
        %v857 = vld [vmem:[#allocation2 + $0x638] sm:$0xff]
        %v858 = vld [vmem:[#allocation2 + $0x640] sm:$0xff]
        %v859 = vld [vmem:[#allocation2 + $0x648] sm:$0xff]
        %v860 = vld [vmem:[#allocation2 + $0x650] sm:$0xff]
        %v861 = vld [vmem:[#allocation2 + $0x658] sm:$0xff]
        %v862 = vld [vmem:[#allocation2 + $0x660] sm:$0xff]
        %v863 = vld [vmem:[#allocation2 + $0x668] sm:$0xff]
        %v864 = vld [vmem:[#allocation2 + $0x670] sm:$0xff]
        %v865 = vld [vmem:[#allocation2 + $0x678] sm:$0xff]
        %v866 = vld [vmem:[#allocation2 + $0x680] sm:$0xff]
        %v867 = vld [vmem:[#allocation2 + $0x688] sm:$0xff]
        %v868 = vld [vmem:[#allocation2 + $0x690] sm:$0xff]
        %v869 = vld [vmem:[#allocation2 + $0x698] sm:$0xff]
        %v870 = vld [vmem:[#allocation2 + $0x6a0] sm:$0xff]
        %v871 = vld [vmem:[#allocation2 + $0x6a8] sm:$0xff]
        %v872 = vld [vmem:[#allocation2 + $0x6b0] sm:$0xff]
        %v873 = vld [vmem:[#allocation2 + $0x6b8] sm:$0xff]
        %v874 = vld [vmem:[#allocation2 + $0x6c0] sm:$0xff]
        %v875 = vld [vmem:[#allocation2 + $0x6c8] sm:$0xff]
        %v876 = vld [vmem:[#allocation2 + $0x6d0] sm:$0xff]
        %v877 = vld [vmem:[#allocation2 + $0x6d8] sm:$0xff]
        %v878 = vld [vmem:[#allocation2 + $0x6e0] sm:$0xff]
        %v879 = vld [vmem:[#allocation2 + $0x6e8] sm:$0xff]
        %v880 = vld [vmem:[#allocation2 + $0x6f0] sm:$0xff]
        %v881 = vld [vmem:[#allocation2 + $0x6f8] sm:$0xff]
        %v882 = vld [vmem:[#allocation2 + $0x700] sm:$0xff]
        %v883 = vld [vmem:[#allocation2 + $0x708] sm:$0xff]
        %v884 = vld [vmem:[#allocation2 + $0x710] sm:$0xff]
        %v885 = vld [vmem:[#allocation2 + $0x718] sm:$0xff]
        %v886 = vld [vmem:[#allocation2 + $0x720] sm:$0xff]
        %v887 = vld [vmem:[#allocation2 + $0x728] sm:$0xff]
        %v888 = vld [vmem:[#allocation2 + $0x730] sm:$0xff]
        %v889 = vld [vmem:[#allocation2 + $0x738] sm:$0xff]
        %v890 = vld [vmem:[#allocation2 + $0x740] sm:$0xff]
        %v891 = vld [vmem:[#allocation2 + $0x748] sm:$0xff]
        %v892 = vld [vmem:[#allocation2 + $0x750] sm:$0xff]
        %v893 = vld [vmem:[#allocation2 + $0x758] sm:$0xff]
        %v894 = vld [vmem:[#allocation2 + $0x760] sm:$0xff]
        %v895 = vld [vmem:[#allocation2 + $0x768] sm:$0xff]
        %v896 = vld [vmem:[#allocation2 + $0x770] sm:$0xff]
        %v897 = vld [vmem:[#allocation2 + $0x778] sm:$0xff]
        %v898 = vld [vmem:[#allocation2 + $0x780] sm:$0xff]
        %v899 = vld [vmem:[#allocation2 + $0x788] sm:$0xff]
        %v900 = vld [vmem:[#allocation2 + $0x790] sm:$0xff]
        %v901 = vld [vmem:[#allocation2 + $0x798] sm:$0xff]
        %v902 = vld [vmem:[#allocation2 + $0x7a0] sm:$0xff]
        %v903 = vld [vmem:[#allocation2 + $0x7a8] sm:$0xff]
        %v904 = vld [vmem:[#allocation2 + $0x7b0] sm:$0xff]
        %v905 = vld [vmem:[#allocation2 + $0x7b8] sm:$0xff]
        %v906 = vld [vmem:[#allocation2 + $0x7c0] sm:$0xff]
        %v907 = vld [vmem:[#allocation2 + $0x7c8] sm:$0xff]
        %v908 = vld [vmem:[#allocation2 + $0x7d0] sm:$0xff]
        %v909 = vld [vmem:[#allocation2 + $0x7d8] sm:$0xff]
        %v910 = vld [vmem:[#allocation2 + $0x7e0] sm:$0xff]
        %v911 = vld [vmem:[#allocation2 + $0x7e8] sm:$0xff]
        %v912 = vld [vmem:[#allocation2 + $0x7f0] sm:$0xff]
        %v913 = vld [vmem:[#allocation2 + $0x7f8] sm:$0xff]
        %v914 = vld [vmem:[#allocation2 + $0x800] sm:$0xff]
        %v915 = vld [vmem:[#allocation2 + $0x808] sm:$0xff]
        %v916 = vld [vmem:[#allocation2 + $0x810] sm:$0xff]
        %v917 = vld [vmem:[#allocation2 + $0x818] sm:$0xff]
        %v918 = vld [vmem:[#allocation2 + $0x820] sm:$0xff]
        %v919 = vld [vmem:[#allocation2 + $0x828] sm:$0xff]
        %v920 = vld [vmem:[#allocation2 + $0x830] sm:$0xff]
        %v921 = vld [vmem:[#allocation2 + $0x838] sm:$0xff]
        %v922 = vld [vmem:[#allocation2 + $0x840] sm:$0xff]
        %v923 = vld [vmem:[#allocation2 + $0x848] sm:$0xff]
        %v924 = vld [vmem:[#allocation2 + $0x850] sm:$0xff]
        %v925 = vld [vmem:[#allocation2 + $0x858] sm:$0xff]
        %v926 = vld [vmem:[#allocation2 + $0x860] sm:$0xff]
        %v927 = vld [vmem:[#allocation2 + $0x868] sm:$0xff]
        %v928 = vld [vmem:[#allocation2 + $0x870] sm:$0xff]
        %v929 = vld [vmem:[#allocation2 + $0x878] sm:$0xff]
        %v930 = vld [vmem:[#allocation2 + $0x880] sm:$0xff]
        %v931 = vld [vmem:[#allocation2 + $0x888] sm:$0xff]
        %v932 = vld [vmem:[#allocation2 + $0x890] sm:$0xff]
        %v933 = vld [vmem:[#allocation2 + $0x898] sm:$0xff]
        %v934 = vld [vmem:[#allocation2 + $0x8a0] sm:$0xff]
        %v935 = vld [vmem:[#allocation2 + $0x8a8] sm:$0xff]
        %v936 = vld [vmem:[#allocation2 + $0x8b0] sm:$0xff]
        %v937 = vld [vmem:[#allocation2 + $0x8b8] sm:$0xff]
        %v938 = vld [vmem:[#allocation2 + $0x8c0] sm:$0xff]
        %v939 = vld [vmem:[#allocation2 + $0x8c8] sm:$0xff]
        %v940 = vld [vmem:[#allocation2 + $0x8d0] sm:$0xff]
        %v941 = vld [vmem:[#allocation2 + $0x8d8] sm:$0xff]
        %v942 = vld [vmem:[#allocation2 + $0x8e0] sm:$0xff]
        %v943 = vld [vmem:[#allocation2 + $0x8e8] sm:$0xff]
        %v944 = vld [vmem:[#allocation2 + $0x8f0] sm:$0xff]
        %v945 = vld [vmem:[#allocation2 + $0x8f8] sm:$0xff]
        %v946 = vld [vmem:[#allocation2 + $0x900] sm:$0xff]
        %v947 = vld [vmem:[#allocation2 + $0x908] sm:$0xff]
        %v948 = vld [vmem:[#allocation2 + $0x910] sm:$0xff]
        %v949 = vld [vmem:[#allocation2 + $0x918] sm:$0xff]
        %v950 = vld [vmem:[#allocation2 + $0x920] sm:$0xff]
        %v951 = vld [vmem:[#allocation2 + $0x928] sm:$0xff]
        %v952 = vld [vmem:[#allocation2 + $0x930] sm:$0xff]
        %v953 = vld [vmem:[#allocation2 + $0x938] sm:$0xff]
        %v954 = vld [vmem:[#allocation2 + $0x940] sm:$0xff]
        %v955 = vld [vmem:[#allocation2 + $0x948] sm:$0xff]
        %v956 = vld [vmem:[#allocation2 + $0x950] sm:$0xff]
        %v957 = vld [vmem:[#allocation2 + $0x958] sm:$0xff]
        %v958 = vld [vmem:[#allocation2 + $0x960] sm:$0xff]
        %v959 = vld [vmem:[#allocation2 + $0x968] sm:$0xff]
        %v960 = vld [vmem:[#allocation2 + $0x970] sm:$0xff]
        %v961 = vld [vmem:[#allocation2 + $0x978] sm:$0xff]
        %v962 = vld [vmem:[#allocation2 + $0x980] sm:$0xff]
        %v963 = vld [vmem:[#allocation2 + $0x988] sm:$0xff]
        %v964 = vld [vmem:[#allocation2 + $0x990] sm:$0xff]
        %v965 = vld [vmem:[#allocation2 + $0x998] sm:$0xff]
        %v966 = vld [vmem:[#allocation2 + $0x9a0] sm:$0xff]
        %v967 = vld [vmem:[#allocation2 + $0x9a8] sm:$0xff]
        %v968 = vld [vmem:[#allocation2 + $0x9b0] sm:$0xff]
        %v969 = vld [vmem:[#allocation2 + $0x9b8] sm:$0xff]
        %v970 = vld [vmem:[#allocation2 + $0x9c0] sm:$0xff]
        %v971 = vld [vmem:[#allocation2 + $0x9c8] sm:$0xff]
        %v972 = vld [vmem:[#allocation2 + $0x9d0] sm:$0xff]
        %v973 = vld [vmem:[#allocation2 + $0x9d8] sm:$0xff]
        %v974 = vld [vmem:[#allocation2 + $0x9e0] sm:$0xff]
        %v975 = vld [vmem:[#allocation2 + $0x9e8] sm:$0xff]
        %v976 = vld [vmem:[#allocation2 + $0x9f0] sm:$0xff]
        %v977 = vld [vmem:[#allocation2 + $0x9f8] sm:$0xff]
        %v978 = vld [vmem:[#allocation2 + $0xa00] sm:$0xff]
        %v979 = vld [vmem:[#allocation2 + $0xa08] sm:$0xff]
        %v980 = vld [vmem:[#allocation2 + $0xa10] sm:$0xff]
        %v981 = vld [vmem:[#allocation2 + $0xa18] sm:$0xff]
        %v982 = vld [vmem:[#allocation2 + $0xa20] sm:$0xff]
        %v983 = vld [vmem:[#allocation2 + $0xa28] sm:$0xff]
        %v984 = vld [vmem:[#allocation2 + $0xa30] sm:$0xff]
        %v985 = vld [vmem:[#allocation2 + $0xa38] sm:$0xff]
        %v986 = vld [vmem:[#allocation2 + $0xa40] sm:$0xff]
        %v987 = vld [vmem:[#allocation2 + $0xa48] sm:$0xff]
        %v988 = vld [vmem:[#allocation2 + $0xa50] sm:$0xff]
        %v989 = vld [vmem:[#allocation2 + $0xa58] sm:$0xff]
        %v990 = vld [vmem:[#allocation2 + $0xa60] sm:$0xff]
        %v991 = vld [vmem:[#allocation2 + $0xa68] sm:$0xff]
        %v992 = vld [vmem:[#allocation2 + $0xa70] sm:$0xff]
        %v993 = vld [vmem:[#allocation2 + $0xa78] sm:$0xff]
        %v994 = vld [vmem:[#allocation2 + $0xa80] sm:$0xff]
        %v995 = vld [vmem:[#allocation2 + $0xa88] sm:$0xff]
        %v996 = vld [vmem:[#allocation2 + $0xa90] sm:$0xff]
        %v997 = vld [vmem:[#allocation2 + $0xa98] sm:$0xff]
        %v998 = vld [vmem:[#allocation2 + $0xaa0] sm:$0xff]
        %v999 = vld [vmem:[#allocation2 + $0xaa8] sm:$0xff]
        %v1000 = vld [vmem:[#allocation2 + $0xab0] sm:$0xff]
        %v1001 = vld [vmem:[#allocation2 + $0xab8] sm:$0xff]
        %v1002 = vld [vmem:[#allocation2 + $0xac0] sm:$0xff]
        %v1003 = vld [vmem:[#allocation2 + $0xac8] sm:$0xff]
        %v1004 = vld [vmem:[#allocation2 + $0xad0] sm:$0xff]
        %v1005 = vld [vmem:[#allocation2 + $0xad8] sm:$0xff]
        %v1006 = vld [vmem:[#allocation2 + $0xae0] sm:$0xff]
        %v1007 = vld [vmem:[#allocation2 + $0xae8] sm:$0xff]
        %v1008 = vld [vmem:[#allocation2 + $0xaf0] sm:$0xff]
        %v1009 = vld [vmem:[#allocation2 + $0xaf8] sm:$0xff]
        %v1010 = vld [vmem:[#allocation2 + $0xb00] sm:$0xff]
        %v1011 = vld [vmem:[#allocation2 + $0xb08] sm:$0xff]
        %v1012 = vld [vmem:[#allocation2 + $0xb10] sm:$0xff]
        %v1013 = vld [vmem:[#allocation2 + $0xb18] sm:$0xff]
        %v1014 = vld [vmem:[#allocation2 + $0xb20] sm:$0xff]
        %v1015 = vld [vmem:[#allocation2 + $0xb28] sm:$0xff]
        %v1016 = vld [vmem:[#allocation2 + $0xb30] sm:$0xff]
        %v1017 = vld [vmem:[#allocation2 + $0xb38] sm:$0xff]
        %v1018 = vld [vmem:[#allocation2 + $0xb40] sm:$0xff]
        %v1019 = vld [vmem:[#allocation2 + $0xb48] sm:$0xff]
        %v1020 = vld [vmem:[#allocation2 + $0xb50] sm:$0xff]
        %v1021 = vld [vmem:[#allocation2 + $0xb58] sm:$0xff]
        %v1022 = vld [vmem:[#allocation2 + $0xb60] sm:$0xff]
        %v1023 = vld [vmem:[#allocation2 + $0xb68] sm:$0xff]
        %v1024 = vld [vmem:[#allocation2 + $0xb70] sm:$0xff]
        %v1025 = vld [vmem:[#allocation2 + $0xb78] sm:$0xff]
        %v1026 = vld [vmem:[#allocation2 + $0xb80] sm:$0xff]
        %v1027 = vld [vmem:[#allocation2 + $0xb88] sm:$0xff]
        %v1028 = vld [vmem:[#allocation2 + $0xb90] sm:$0xff]
        %v1029 = vld [vmem:[#allocation2 + $0xb98] sm:$0xff]
        %v1030 = vld [vmem:[#allocation2 + $0xba0] sm:$0xff]
        %v1031 = vld [vmem:[#allocation2 + $0xba8] sm:$0xff]
        %v1032 = vld [vmem:[#allocation2 + $0xbb0] sm:$0xff]
        %v1033 = vld [vmem:[#allocation2 + $0xbb8] sm:$0xff]
        %v1034 = vld [vmem:[#allocation2 + $0xbc0] sm:$0xff]
        %v1035 = vld [vmem:[#allocation2 + $0xbc8] sm:$0xff]
        %v1036 = vld [vmem:[#allocation2 + $0xbd0] sm:$0xff]
        %v1037 = vld [vmem:[#allocation2 + $0xbd8] sm:$0xff]
        %v1038 = vld [vmem:[#allocation2 + $0xbe0] sm:$0xff]
        %v1039 = vld [vmem:[#allocation2 + $0xbe8] sm:$0xff]
        %v1040 = vld [vmem:[#allocation2 + $0xbf0] sm:$0xff]
        %v1041 = vld [vmem:[#allocation2 + $0xbf8] sm:$0xff]
        %v1042 = vld [vmem:[%s232] sm:$0xff]
        %v1043 = vld [vmem:[%s232 + $0x8] sm:$0xff]
        %v1044 = vld [vmem:[%s232 + $0x10] sm:$0xff]
        %v1045 = vld [vmem:[%s232 + $0x18] sm:$0xff]
        %v1046 = vld [vmem:[%s232 + $0x20] sm:$0xff]
        %v1047 = vld [vmem:[%s232 + $0x28] sm:$0xff]
        %v1048 = vld [vmem:[%s232 + $0x30] sm:$0xff]
        %v1049 = vld [vmem:[%s232 + $0x38] sm:$0xff]
        %v1050 = vld [vmem:[%s232 + $0x40] sm:$0xff]
        %v1051 = vld [vmem:[%s232 + $0x48] sm:$0xff]
        %v1052 = vld [vmem:[%s232 + $0x50] sm:$0xff]
        %v1053 = vld [vmem:[%s232 + $0x58] sm:$0xff]
        %v1054 = vld [vmem:[%s232 + $0x60] sm:$0xff]
        %v1055 = vld [vmem:[%s232 + $0x68] sm:$0xff]
        %v1056 = vld [vmem:[%s232 + $0x70] sm:$0xff]
        %v1057 = vld [vmem:[%s232 + $0x78] sm:$0xff]
        %v1058 = vld [vmem:[%s232 + $0x80] sm:$0xff]
        %v1059 = vld [vmem:[%s232 + $0x88] sm:$0xff]
        %v1060 = vld [vmem:[%s232 + $0x90] sm:$0xff]
        %v1061 = vld [vmem:[%s232 + $0x98] sm:$0xff]
        %v1062 = vld [vmem:[%s232 + $0xa0] sm:$0xff]
        %v1063 = vld [vmem:[%s232 + $0xa8] sm:$0xff]
        %v1064 = vld [vmem:[%s232 + $0xb0] sm:$0xff]
        %v1065 = vld [vmem:[%s232 + $0xb8] sm:$0xff]
        %v1066 = vld [vmem:[%s232 + $0xc0] sm:$0xff]
        %v1067 = vld [vmem:[%s232 + $0xc8] sm:$0xff]
        %v1068 = vld [vmem:[%s232 + $0xd0] sm:$0xff]
        %v1069 = vld [vmem:[%s232 + $0xd8] sm:$0xff]
        %v1070 = vld [vmem:[%s232 + $0xe0] sm:$0xff]
        %v1071 = vld [vmem:[%s232 + $0xe8] sm:$0xff]
        %v1072 = vld [vmem:[%s232 + $0xf0] sm:$0xff]
        %v1073 = vld [vmem:[%s232 + $0xf8] sm:$0xff]
        %v1074 = vld [vmem:[%s232 + $0x100] sm:$0xff]
        %v1075 = vld [vmem:[%s232 + $0x108] sm:$0xff]
        %v1076 = vld [vmem:[%s232 + $0x110] sm:$0xff]
        %v1077 = vld [vmem:[%s232 + $0x118] sm:$0xff]
        %v1078 = vld [vmem:[%s232 + $0x120] sm:$0xff]
        %v1079 = vld [vmem:[%s232 + $0x128] sm:$0xff]
        %v1080 = vld [vmem:[%s232 + $0x130] sm:$0xff]
        %v1081 = vld [vmem:[%s232 + $0x138] sm:$0xff]
        %v1082 = vld [vmem:[%s232 + $0x140] sm:$0xff]
        %v1083 = vld [vmem:[%s232 + $0x148] sm:$0xff]
        %v1084 = vld [vmem:[%s232 + $0x150] sm:$0xff]
        %v1085 = vld [vmem:[%s232 + $0x158] sm:$0xff]
        %v1086 = vld [vmem:[%s232 + $0x160] sm:$0xff]
        %v1087 = vld [vmem:[%s232 + $0x168] sm:$0xff]
        %v1088 = vld [vmem:[%s232 + $0x170] sm:$0xff]
        %v1089 = vld [vmem:[%s232 + $0x178] sm:$0xff]
        %v1090 = vld [vmem:[%s232 + $0x180] sm:$0xff]
        %v1091 = vld [vmem:[%s232 + $0x188] sm:$0xff]
        %v1092 = vld [vmem:[%s232 + $0x190] sm:$0xff]
        %v1093 = vld [vmem:[%s232 + $0x198] sm:$0xff]
        %v1094 = vld [vmem:[%s232 + $0x1a0] sm:$0xff]
        %v1095 = vld [vmem:[%s232 + $0x1a8] sm:$0xff]
        %v1096 = vld [vmem:[%s232 + $0x1b0] sm:$0xff]
        %v1097 = vld [vmem:[%s232 + $0x1b8] sm:$0xff]
        %v1098 = vld [vmem:[%s232 + $0x1c0] sm:$0xff]
        %v1099 = vld [vmem:[%s232 + $0x1c8] sm:$0xff]
        %v1100 = vld [vmem:[%s232 + $0x1d0] sm:$0xff]
        %v1101 = vld [vmem:[%s232 + $0x1d8] sm:$0xff]
        %v1102 = vld [vmem:[%s232 + $0x1e0] sm:$0xff]
        %v1103 = vld [vmem:[%s232 + $0x1e8] sm:$0xff]
        %v1104 = vld [vmem:[%s232 + $0x1f0] sm:$0xff]
        %v1105 = vld [vmem:[%s232 + $0x1f8] sm:$0xff]
        %v1106 = vld [vmem:[%s232 + $0x200] sm:$0xff]
        %v1107 = vld [vmem:[%s232 + $0x208] sm:$0xff]
        %v1108 = vld [vmem:[%s232 + $0x210] sm:$0xff]
        %v1109 = vld [vmem:[%s232 + $0x218] sm:$0xff]
        %v1110 = vld [vmem:[%s232 + $0x220] sm:$0xff]
        %v1111 = vld [vmem:[%s232 + $0x228] sm:$0xff]
        %v1112 = vld [vmem:[%s232 + $0x230] sm:$0xff]
        %v1113 = vld [vmem:[%s232 + $0x238] sm:$0xff]
        %v1114 = vld [vmem:[%s232 + $0x240] sm:$0xff]
        %v1115 = vld [vmem:[%s232 + $0x248] sm:$0xff]
        %v1116 = vld [vmem:[%s232 + $0x250] sm:$0xff]
        %v1117 = vld [vmem:[%s232 + $0x258] sm:$0xff]
        %v1118 = vld [vmem:[%s232 + $0x260] sm:$0xff]
        %v1119 = vld [vmem:[%s232 + $0x268] sm:$0xff]
        %v1120 = vld [vmem:[%s232 + $0x270] sm:$0xff]
        %v1121 = vld [vmem:[%s232 + $0x278] sm:$0xff]
        %v1122 = vld [vmem:[%s232 + $0x280] sm:$0xff]
        %v1123 = vld [vmem:[%s232 + $0x288] sm:$0xff]
        %v1124 = vld [vmem:[%s232 + $0x290] sm:$0xff]
        %v1125 = vld [vmem:[%s232 + $0x298] sm:$0xff]
        %v1126 = vld [vmem:[%s232 + $0x2a0] sm:$0xff]
        %v1127 = vld [vmem:[%s232 + $0x2a8] sm:$0xff]
        %v1128 = vld [vmem:[%s232 + $0x2b0] sm:$0xff]
        %v1129 = vld [vmem:[%s232 + $0x2b8] sm:$0xff]
        %v1130 = vld [vmem:[%s232 + $0x2c0] sm:$0xff]
        %v1131 = vld [vmem:[%s232 + $0x2c8] sm:$0xff]
        %v1132 = vld [vmem:[%s232 + $0x2d0] sm:$0xff]
        %v1133 = vld [vmem:[%s232 + $0x2d8] sm:$0xff]
        %v1134 = vld [vmem:[%s232 + $0x2e0] sm:$0xff]
        %v1135 = vld [vmem:[%s232 + $0x2e8] sm:$0xff]
        %v1136 = vld [vmem:[%s232 + $0x2f0] sm:$0xff]
        %v1137 = vld [vmem:[%s232 + $0x2f8] sm:$0xff]
        %v1138 = vld [vmem:[%s232 + $0x300] sm:$0xff]
        %v1139 = vld [vmem:[%s232 + $0x308] sm:$0xff]
        %v1140 = vld [vmem:[%s232 + $0x310] sm:$0xff]
        %v1141 = vld [vmem:[%s232 + $0x318] sm:$0xff]
        %v1142 = vld [vmem:[%s232 + $0x320] sm:$0xff]
        %v1143 = vld [vmem:[%s232 + $0x328] sm:$0xff]
        %v1144 = vld [vmem:[%s232 + $0x330] sm:$0xff]
        %v1145 = vld [vmem:[%s232 + $0x338] sm:$0xff]
        %v1146 = vld [vmem:[%s232 + $0x340] sm:$0xff]
        %v1147 = vld [vmem:[%s232 + $0x348] sm:$0xff]
        %v1148 = vld [vmem:[%s232 + $0x350] sm:$0xff]
        %v1149 = vld [vmem:[%s232 + $0x358] sm:$0xff]
        %v1150 = vld [vmem:[%s232 + $0x360] sm:$0xff]
        %v1151 = vld [vmem:[%s232 + $0x368] sm:$0xff]
        %v1152 = vld [vmem:[%s232 + $0x370] sm:$0xff]
        %v1153 = vld [vmem:[%s232 + $0x378] sm:$0xff]
        %v1154 = vld [vmem:[%s232 + $0x380] sm:$0xff]
        %v1155 = vld [vmem:[%s232 + $0x388] sm:$0xff]
        %v1156 = vld [vmem:[%s232 + $0x390] sm:$0xff]
        %v1157 = vld [vmem:[%s232 + $0x398] sm:$0xff]
        %v1158 = vld [vmem:[%s232 + $0x3a0] sm:$0xff]
        %v1159 = vld [vmem:[%s232 + $0x3a8] sm:$0xff]
        %v1160 = vld [vmem:[%s232 + $0x3b0] sm:$0xff]
        %v1161 = vld [vmem:[%s232 + $0x3b8] sm:$0xff]
        %v1162 = vld [vmem:[%s232 + $0x3c0] sm:$0xff]
        %v1163 = vld [vmem:[%s232 + $0x3c8] sm:$0xff]
        %v1164 = vld [vmem:[%s232 + $0x3d0] sm:$0xff]
        %v1165 = vld [vmem:[%s232 + $0x3d8] sm:$0xff]
        %v1166 = vld [vmem:[%s232 + $0x3e0] sm:$0xff]
        %v1167 = vld [vmem:[%s232 + $0x3e8] sm:$0xff]
        %v1168 = vld [vmem:[%s232 + $0x3f0] sm:$0xff]
        %v1169 = vld [vmem:[%s232 + $0x3f8] sm:$0xff]
        %v1170 = vld [vmem:[#allocation6] sm:$0xff]
        %v1171 = vld [vmem:[#allocation6 + $0x8] sm:$0xff]
        %v1172 = vld [vmem:[#allocation6 + $0x10] sm:$0xff]
        %v1173 = vld [vmem:[#allocation6 + $0x18] sm:$0xff]
        %v1174 = vld [vmem:[#allocation6 + $0x20] sm:$0xff]
        %v1175 = vld [vmem:[#allocation6 + $0x28] sm:$0xff]
        %v1176 = vld [vmem:[#allocation6 + $0x30] sm:$0xff]
        %v1177 = vld [vmem:[#allocation6 + $0x38] sm:$0xff]
        %v1178 = vld [vmem:[#allocation6 + $0x40] sm:$0xff]
        %v1179 = vld [vmem:[#allocation6 + $0x48] sm:$0xff]
        %v1180 = vld [vmem:[#allocation6 + $0x50] sm:$0xff]
        %v1181 = vld [vmem:[#allocation6 + $0x58] sm:$0xff]
        %v1182 = vld [vmem:[#allocation6 + $0x60] sm:$0xff]
        %v1183 = vld [vmem:[#allocation6 + $0x68] sm:$0xff]
        %v1184 = vld [vmem:[#allocation6 + $0x70] sm:$0xff]
        %v1185 = vld [vmem:[#allocation6 + $0x78] sm:$0xff]
        %v1186 = vld [vmem:[#allocation6 + $0x80] sm:$0xff]
        %v1187 = vld [vmem:[#allocation6 + $0x88] sm:$0xff]
        %v1188 = vld [vmem:[#allocation6 + $0x90] sm:$0xff]
        %v1189 = vld [vmem:[#allocation6 + $0x98] sm:$0xff]
        %v1190 = vld [vmem:[#allocation6 + $0xa0] sm:$0xff]
        %v1191 = vld [vmem:[#allocation6 + $0xa8] sm:$0xff]
        %v1192 = vld [vmem:[#allocation6 + $0xb0] sm:$0xff]
        %v1193 = vld [vmem:[#allocation6 + $0xb8] sm:$0xff]
        %v1194 = vld [vmem:[#allocation6 + $0xc0] sm:$0xff]
        %v1195 = vld [vmem:[#allocation6 + $0xc8] sm:$0xff]
        %v1196 = vld [vmem:[#allocation6 + $0xd0] sm:$0xff]
        %v1197 = vld [vmem:[#allocation6 + $0xd8] sm:$0xff]
        %v1198 = vld [vmem:[#allocation6 + $0xe0] sm:$0xff]
        %v1199 = vld [vmem:[#allocation6 + $0xe8] sm:$0xff]
        %v1200 = vld [vmem:[#allocation6 + $0xf0] sm:$0xff]
        %v1201 = vld [vmem:[#allocation6 + $0xf8] sm:$0xff]
        %v1202 = vld [vmem:[#allocation6 + $0x100] sm:$0xff]
        %v1203 = vld [vmem:[#allocation6 + $0x108] sm:$0xff]
        %v1204 = vld [vmem:[#allocation6 + $0x110] sm:$0xff]
        %v1205 = vld [vmem:[#allocation6 + $0x118] sm:$0xff]
        %v1206 = vld [vmem:[#allocation6 + $0x120] sm:$0xff]
        %v1207 = vld [vmem:[#allocation6 + $0x128] sm:$0xff]
        %v1208 = vld [vmem:[#allocation6 + $0x130] sm:$0xff]
        %v1209 = vld [vmem:[#allocation6 + $0x138] sm:$0xff]
        %v1210 = vld [vmem:[#allocation6 + $0x140] sm:$0xff]
        %v1211 = vld [vmem:[#allocation6 + $0x148] sm:$0xff]
        %v1212 = vld [vmem:[#allocation6 + $0x150] sm:$0xff]
        %v1213 = vld [vmem:[#allocation6 + $0x158] sm:$0xff]
        %v1214 = vld [vmem:[#allocation6 + $0x160] sm:$0xff]
        %v1215 = vld [vmem:[#allocation6 + $0x168] sm:$0xff]
        %v1216 = vld [vmem:[#allocation6 + $0x170] sm:$0xff]
        %v1217 = vld [vmem:[#allocation6 + $0x178] sm:$0xff]
        %v1218 = vld [vmem:[#allocation6 + $0x180] sm:$0xff]
        %v1219 = vld [vmem:[#allocation6 + $0x188] sm:$0xff]
        %v1220 = vld [vmem:[#allocation6 + $0x190] sm:$0xff]
        %v1221 = vld [vmem:[#allocation6 + $0x198] sm:$0xff]
        %v1222 = vld [vmem:[#allocation6 + $0x1a0] sm:$0xff]
        %v1223 = vld [vmem:[#allocation6 + $0x1a8] sm:$0xff]
        %v1224 = vld [vmem:[#allocation6 + $0x1b0] sm:$0xff]
        %v1225 = vld [vmem:[#allocation6 + $0x1b8] sm:$0xff]
        %v1226 = vld [vmem:[#allocation6 + $0x1c0] sm:$0xff]
        %v1227 = vld [vmem:[#allocation6 + $0x1c8] sm:$0xff]
        %v1228 = vld [vmem:[#allocation6 + $0x1d0] sm:$0xff]
        %v1229 = vld [vmem:[#allocation6 + $0x1d8] sm:$0xff]
        %v1230 = vld [vmem:[#allocation6 + $0x1e0] sm:$0xff]
        %v1231 = vld [vmem:[#allocation6 + $0x1e8] sm:$0xff]
        %v1232 = vld [vmem:[#allocation6 + $0x1f0] sm:$0xff]
        %v1233 = vld [vmem:[#allocation6 + $0x1f8] sm:$0xff]
        %v1234 = vld [vmem:[#allocation6 + $0x200] sm:$0xff]
        %v1235 = vld [vmem:[#allocation6 + $0x208] sm:$0xff]
        %v1236 = vld [vmem:[#allocation6 + $0x210] sm:$0xff]
        %v1237 = vld [vmem:[#allocation6 + $0x218] sm:$0xff]
        %v1238 = vld [vmem:[#allocation6 + $0x220] sm:$0xff]
        %v1239 = vld [vmem:[#allocation6 + $0x228] sm:$0xff]
        %v1240 = vld [vmem:[#allocation6 + $0x230] sm:$0xff]
        %v1241 = vld [vmem:[#allocation6 + $0x238] sm:$0xff]
        %v1242 = vld [vmem:[#allocation6 + $0x240] sm:$0xff]
        %v1243 = vld [vmem:[#allocation6 + $0x248] sm:$0xff]
        %v1244 = vld [vmem:[#allocation6 + $0x250] sm:$0xff]
        %v1245 = vld [vmem:[#allocation6 + $0x258] sm:$0xff]
        %v1246 = vld [vmem:[#allocation6 + $0x260] sm:$0xff]
        %v1247 = vld [vmem:[#allocation6 + $0x268] sm:$0xff]
        %v1248 = vld [vmem:[#allocation6 + $0x270] sm:$0xff]
        %v1249 = vld [vmem:[#allocation6 + $0x278] sm:$0xff]
        %v1250 = vld [vmem:[#allocation6 + $0x280] sm:$0xff]
        %v1251 = vld [vmem:[#allocation6 + $0x288] sm:$0xff]
        %v1252 = vld [vmem:[#allocation6 + $0x290] sm:$0xff]
        %v1253 = vld [vmem:[#allocation6 + $0x298] sm:$0xff]
        %v1254 = vld [vmem:[#allocation6 + $0x2a0] sm:$0xff]
        %v1255 = vld [vmem:[#allocation6 + $0x2a8] sm:$0xff]
        %v1256 = vld [vmem:[#allocation6 + $0x2b0] sm:$0xff]
        %v1257 = vld [vmem:[#allocation6 + $0x2b8] sm:$0xff]
        %v1258 = vld [vmem:[#allocation6 + $0x2c0] sm:$0xff]
        %v1259 = vld [vmem:[#allocation6 + $0x2c8] sm:$0xff]
        %v1260 = vld [vmem:[#allocation6 + $0x2d0] sm:$0xff]
        %v1261 = vld [vmem:[#allocation6 + $0x2d8] sm:$0xff]
        %v1262 = vld [vmem:[#allocation6 + $0x2e0] sm:$0xff]
        %v1263 = vld [vmem:[#allocation6 + $0x2e8] sm:$0xff]
        %v1264 = vld [vmem:[#allocation6 + $0x2f0] sm:$0xff]
        %v1265 = vld [vmem:[#allocation6 + $0x2f8] sm:$0xff]
        %v1266 = vld [vmem:[#allocation6 + $0x300] sm:$0xff]
        %v1267 = vld [vmem:[#allocation6 + $0x308] sm:$0xff]
        %v1268 = vld [vmem:[#allocation6 + $0x310] sm:$0xff]
        %v1269 = vld [vmem:[#allocation6 + $0x318] sm:$0xff]
        %v1270 = vld [vmem:[#allocation6 + $0x320] sm:$0xff]
        %v1271 = vld [vmem:[#allocation6 + $0x328] sm:$0xff]
        %v1272 = vld [vmem:[#allocation6 + $0x330] sm:$0xff]
        %v1273 = vld [vmem:[#allocation6 + $0x338] sm:$0xff]
        %v1274 = vld [vmem:[#allocation6 + $0x340] sm:$0xff]
        %v1275 = vld [vmem:[#allocation6 + $0x348] sm:$0xff]
        %v1276 = vld [vmem:[#allocation6 + $0x350] sm:$0xff]
        %v1277 = vld [vmem:[#allocation6 + $0x358] sm:$0xff]
        %v1278 = vld [vmem:[#allocation6 + $0x360] sm:$0xff]
        %v1279 = vld [vmem:[#allocation6 + $0x368] sm:$0xff]
        %v1280 = vld [vmem:[#allocation6 + $0x370] sm:$0xff]
        %v1281 = vld [vmem:[#allocation6 + $0x378] sm:$0xff]
        %v1282 = vld [vmem:[#allocation6 + $0x380] sm:$0xff]
        %v1283 = vld [vmem:[#allocation6 + $0x388] sm:$0xff]
        %v1284 = vld [vmem:[#allocation6 + $0x390] sm:$0xff]
        %v1285 = vld [vmem:[#allocation6 + $0x398] sm:$0xff]
        %v1286 = vld [vmem:[#allocation6 + $0x3a0] sm:$0xff]
        %v1287 = vld [vmem:[#allocation6 + $0x3a8] sm:$0xff]
        %v1288 = vld [vmem:[#allocation6 + $0x3b0] sm:$0xff]
        %v1289 = vld [vmem:[#allocation6 + $0x3b8] sm:$0xff]
        %v1290 = vld [vmem:[#allocation6 + $0x3c0] sm:$0xff]
        %v1291 = vld [vmem:[#allocation6 + $0x3c8] sm:$0xff]
        %v1292 = vld [vmem:[#allocation6 + $0x3d0] sm:$0xff]
        %v1293 = vld [vmem:[#allocation6 + $0x3d8] sm:$0xff]
        %v1294 = vld [vmem:[#allocation6 + $0x3e0] sm:$0xff]
        %v1295 = vld [vmem:[#allocation6 + $0x3e8] sm:$0xff]
        %v1296 = vld [vmem:[#allocation6 + $0x3f0] sm:$0xff]
        %v1297 = vld [vmem:[#allocation6 + $0x3f8] sm:$0xff]
        %v1298 = vld [vmem:[#allocation6 + $0x400] sm:$0xff]
        %v1299 = vld [vmem:[#allocation6 + $0x408] sm:$0xff]
        %v1300 = vld [vmem:[#allocation6 + $0x410] sm:$0xff]
        %v1301 = vld [vmem:[#allocation6 + $0x418] sm:$0xff]
        %v1302 = vld [vmem:[#allocation6 + $0x420] sm:$0xff]
        %v1303 = vld [vmem:[#allocation6 + $0x428] sm:$0xff]
        %v1304 = vld [vmem:[#allocation6 + $0x430] sm:$0xff]
        %v1305 = vld [vmem:[#allocation6 + $0x438] sm:$0xff]
        %v1306 = vld [vmem:[#allocation6 + $0x440] sm:$0xff]
        %v1307 = vld [vmem:[#allocation6 + $0x448] sm:$0xff]
        %v1308 = vld [vmem:[#allocation6 + $0x450] sm:$0xff]
        %v1309 = vld [vmem:[#allocation6 + $0x458] sm:$0xff]
        %v1310 = vld [vmem:[#allocation6 + $0x460] sm:$0xff]
        %v1311 = vld [vmem:[#allocation6 + $0x468] sm:$0xff]
        %v1312 = vld [vmem:[#allocation6 + $0x470] sm:$0xff]
        %v1313 = vld [vmem:[#allocation6 + $0x478] sm:$0xff]
        %v1314 = vld [vmem:[#allocation6 + $0x480] sm:$0xff]
        %v1315 = vld [vmem:[#allocation6 + $0x488] sm:$0xff]
        %v1316 = vld [vmem:[#allocation6 + $0x490] sm:$0xff]
        %v1317 = vld [vmem:[#allocation6 + $0x498] sm:$0xff]
        %v1318 = vld [vmem:[#allocation6 + $0x4a0] sm:$0xff]
        %v1319 = vld [vmem:[#allocation6 + $0x4a8] sm:$0xff]
        %v1320 = vld [vmem:[#allocation6 + $0x4b0] sm:$0xff]
        %v1321 = vld [vmem:[#allocation6 + $0x4b8] sm:$0xff]
        %v1322 = vld [vmem:[#allocation6 + $0x4c0] sm:$0xff]
        %v1323 = vld [vmem:[#allocation6 + $0x4c8] sm:$0xff]
        %v1324 = vld [vmem:[#allocation6 + $0x4d0] sm:$0xff]
        %v1325 = vld [vmem:[#allocation6 + $0x4d8] sm:$0xff]
        %v1326 = vld [vmem:[#allocation6 + $0x4e0] sm:$0xff]
        %v1327 = vld [vmem:[#allocation6 + $0x4e8] sm:$0xff]
        %v1328 = vld [vmem:[#allocation6 + $0x4f0] sm:$0xff]
        %v1329 = vld [vmem:[#allocation6 + $0x4f8] sm:$0xff]
        %v1330 = vld [vmem:[#allocation6 + $0x500] sm:$0xff]
        %v1331 = vld [vmem:[#allocation6 + $0x508] sm:$0xff]
        %v1332 = vld [vmem:[#allocation6 + $0x510] sm:$0xff]
        %v1333 = vld [vmem:[#allocation6 + $0x518] sm:$0xff]
        %v1334 = vld [vmem:[#allocation6 + $0x520] sm:$0xff]
        %v1335 = vld [vmem:[#allocation6 + $0x528] sm:$0xff]
        %v1336 = vld [vmem:[#allocation6 + $0x530] sm:$0xff]
        %v1337 = vld [vmem:[#allocation6 + $0x538] sm:$0xff]
        %v1338 = vld [vmem:[#allocation6 + $0x540] sm:$0xff]
        %v1339 = vld [vmem:[#allocation6 + $0x548] sm:$0xff]
        %v1340 = vld [vmem:[#allocation6 + $0x550] sm:$0xff]
        %v1341 = vld [vmem:[#allocation6 + $0x558] sm:$0xff]
        %v1342 = vld [vmem:[#allocation6 + $0x560] sm:$0xff]
        %v1343 = vld [vmem:[#allocation6 + $0x568] sm:$0xff]
        %v1344 = vld [vmem:[#allocation6 + $0x570] sm:$0xff]
        %v1345 = vld [vmem:[#allocation6 + $0x578] sm:$0xff]
        %v1346 = vld [vmem:[#allocation6 + $0x580] sm:$0xff]
        %v1347 = vld [vmem:[#allocation6 + $0x588] sm:$0xff]
        %v1348 = vld [vmem:[#allocation6 + $0x590] sm:$0xff]
        %v1349 = vld [vmem:[#allocation6 + $0x598] sm:$0xff]
        %v1350 = vld [vmem:[#allocation6 + $0x5a0] sm:$0xff]
        %v1351 = vld [vmem:[#allocation6 + $0x5a8] sm:$0xff]
        %v1352 = vld [vmem:[#allocation6 + $0x5b0] sm:$0xff]
        %v1353 = vld [vmem:[#allocation6 + $0x5b8] sm:$0xff]
        %v1354 = vld [vmem:[#allocation6 + $0x5c0] sm:$0xff]
        %v1355 = vld [vmem:[#allocation6 + $0x5c8] sm:$0xff]
        %v1356 = vld [vmem:[#allocation6 + $0x5d0] sm:$0xff]
        %v1357 = vld [vmem:[#allocation6 + $0x5d8] sm:$0xff]
        %v1358 = vld [vmem:[#allocation6 + $0x5e0] sm:$0xff]
        %v1359 = vld [vmem:[#allocation6 + $0x5e8] sm:$0xff]
        %v1360 = vld [vmem:[#allocation6 + $0x5f0] sm:$0xff]
        %v1361 = vld [vmem:[#allocation6 + $0x5f8] sm:$0xff]
        %1362 = vmatprep.subr.mxu0 %v1171
        %1363 = vmatpush1.msra.mxu0 %v1170
        %1364 = vmatprep.subr.mxu0 %v1177
        %1365 = vmatpush1.msra.mxu0 %v1176
        %1366 = vmatprep.subr.mxu0 %v1183
        %1367 = vmatpush1.msra.mxu0 %v1182
        %1368 = vmatprep.subr.mxu0 %v1189
        %1369 = vmatpush1.msra.mxu0 %v1188
        %1370 = vmatprep.subr.mxu0 %v1195
        %1371 = vmatpush1.msra.mxu0 %v1194
        %1372 = vmatprep.subr.mxu0 %v1201
        %1373 = vmatpush1.msra.mxu0 %v1200
        %1374 = vmatprep.subr.mxu0 %v1207
        %1375 = vmatpush1.msra.mxu0 %v1206
        %1376 = vmatprep.subr.mxu0 %v1213
        %1377 = vmatpush1.msra.mxu0 %v1212
        %1378 = vmatprep.subr.mxu0 %v1219
        %1379 = vmatpush1.msra.mxu0 %v1218
        %1380 = vmatprep.subr.mxu0 %v1225
        %1381 = vmatpush1.msra.mxu0 %v1224
        %1382 = vmatprep.subr.mxu0 %v1231
        %1383 = vmatpush1.msra.mxu0 %v1230
        %1384 = vmatprep.subr.mxu0 %v1237
        %1385 = vmatpush1.msra.mxu0 %v1236
        %1386 = vmatprep.subr.mxu0 %v1243
        %1387 = vmatpush1.msra.mxu0 %v1242
        %1388 = vmatprep.subr.mxu0 %v1249
        %1389 = vmatpush1.msra.mxu0 %v1248
        %1390 = vmatprep.subr.mxu0 %v1255
        %1391 = vmatpush1.msra.mxu0 %v1254
        %1392 = vmatprep.subr.mxu0 %v1261
        %1393 = vmatpush1.msra.mxu0 %v1260
        %1394 = vmatprep.subr.mxu0 %v1267
        %1395 = vmatpush1.msra.mxu0 %v1266
        %1396 = vmatprep.subr.mxu0 %v1273
        %1397 = vmatpush1.msra.mxu0 %v1272
        %1398 = vmatprep.subr.mxu0 %v1279
        %1399 = vmatpush1.msra.mxu0 %v1278
        %1400 = vmatprep.subr.mxu0 %v1285
        %1401 = vmatpush1.msra.mxu0 %v1284
        %1402 = vmatprep.subr.mxu0 %v1291
        %1403 = vmatpush1.msra.mxu0 %v1290
        %1404 = vmatprep.subr.mxu0 %v1297
        %1405 = vmatpush1.msra.mxu0 %v1296
        %1406 = vmatprep.subr.mxu0 %v1303
        %1407 = vmatpush1.msra.mxu0 %v1302
        %1408 = vmatprep.subr.mxu0 %v1309
        %1409 = vmatpush1.msra.mxu0 %v1308
        %1410 = vmatprep.subr.mxu0 %v1315
        %1411 = vmatpush1.msra.mxu0 %v1314
        %1412 = vmatprep.subr.mxu0 %v1321
        %1413 = vmatpush1.msra.mxu0 %v1320
        %1414 = vmatprep.subr.mxu0 %v1327
        %1415 = vmatpush1.msra.mxu0 %v1326
        %1416 = vmatprep.subr.mxu0 %v1333
        %1417 = vmatpush1.msra.mxu0 %v1332
        %1418 = vmatprep.subr.mxu0 %v1339
        %1419 = vmatpush1.msra.mxu0 %v1338
        %1420 = vmatprep.subr.mxu0 %v1345
        %1421 = vmatpush1.msra.mxu0 %v1344
        %1422 = vmatprep.subr.mxu0 %v1351
        %1423 = vmatpush1.msra.mxu0 %v1350
        %1424 = vmatprep.subr.mxu0 %v1357
        %1425 = vmatpush1.msra.mxu0 %v1356
        %1426 = vmatprep.mubr.f32.mxu0 %v1043
        %1427 = vmatmul.mubr.f32.gmra.mrb[0].mxu0 %v1042
        %v1428 = vpop.f32.mrb[0].mxu0
        %v1429 = vadd.f32 0.0, %v1428
        %v1430 = vpop.f32.mrb[0].mxu0
        %v1431 = vadd.f32 0.0, %v1430
        %1432 = vmatprep.mubr.f32.mxu0 %v1045
        %1433 = vmatmul.mubr.f32.gmra.mrb[0].mxu0 %v1044
        %v1434 = vpop.f32.mrb[0].mxu0
        %v1435 = vadd.f32 0.0, %v1434
        %v1436 = vpop.f32.mrb[0].mxu0
        %v1437 = vadd.f32 0.0, %v1436
        %1438 = vmatprep.mubr.f32.mxu0 %v1047
        %1439 = vmatmul.mubr.f32.gmra.mrb[0].mxu0 %v1046
        %v1440 = vpop.f32.mrb[0].mxu0
        %v1441 = vadd.f32 0.0, %v1440
        %v1442 = vpop.f32.mrb[0].mxu0
        %v1443 = vadd.f32 0.0, %v1442
        %1444 = vmatprep.mubr.f32.mxu0 %v1049
        %1445 = vmatmul.mubr.f32.gmra.mrb[0].mxu0 %v1048
        %v1446 = vpop.f32.mrb[0].mxu0
        %v1447 = vadd.f32 0.0, %v1446
        %v1448 = vpop.f32.mrb[0].mxu0
        %v1449 = vadd.f32 0.0, %v1448
        %1450 = vmatprep.mubr.f32.mxu0 %v1051
        %1451 = vmatmul.mubr.f32.gmra.mrb[0].mxu0 %v1050
        %v1452 = vpop.f32.mrb[0].mxu0
        %v1453 = vadd.f32 0.0, %v1452
        %v1454 = vpop.f32.mrb[0].mxu0
        %v1455 = vadd.f32 0.0, %v1454
        %1456 = vmatprep.mubr.f32.mxu0 %v1053
        %1457 = vmatmul.mubr.f32.gmra.mrb[0].mxu0 %v1052
        %v1458 = vpop.f32.mrb[0].mxu0
        %v1459 = vadd.f32 0.0, %v1458
        %v1460 = vpop.f32.mrb[0].mxu0
        %v1461 = vadd.f32 0.0, %v1460
        %1462 = vmatprep.mubr.f32.mxu0 %v1055
        %1463 = vmatmul.mubr.f32.gmra.mrb[0].mxu0 %v1054
        %v1464 = vpop.f32.mrb[0].mxu0
        %v1465 = vadd.f32 0.0, %v1464
        %v1466 = vpop.f32.mrb[0].mxu0
        %v1467 = vadd.f32 0.0, %v1466
        %1468 = vmatprep.mubr.f32.mxu0 %v1057
        %1469 = vmatmul.mubr.f32.gmra.mrb[0].mxu0 %v1056
        %v1470 = vpop.f32.mrb[0].mxu0
        %v1471 = vadd.f32 0.0, %v1470
        %v1472 = vpop.f32.mrb[0].mxu0
        %v1473 = vadd.f32 0.0, %v1472
        %1474 = vmatprep.mubr.f32.mxu0 %v1059
        %1475 = vmatmul.mubr.f32.gmra.mrb[0].mxu0 %v1058
        %v1476 = vpop.f32.mrb[0].mxu0
        %v1477 = vadd.f32 0.0, %v1476
        %v1478 = vpop.f32.mrb[0].mxu0
        %v1479 = vadd.f32 0.0, %v1478
        %1480 = vmatprep.mubr.f32.mxu0 %v1061
        %1481 = vmatmul.mubr.f32.gmra.mrb[0].mxu0 %v1060
        %v1482 = vpop.f32.mrb[0].mxu0
        %v1483 = vadd.f32 0.0, %v1482
        %v1484 = vpop.f32.mrb[0].mxu0
        %v1485 = vadd.f32 0.0, %v1484
        %1486 = vmatprep.mubr.f32.mxu0 %v1063
        %1487 = vmatmul.mubr.f32.gmra.mrb[0].mxu0 %v1062
        %v1488 = vpop.f32.mrb[0].mxu0
        %v1489 = vadd.f32 0.0, %v1488
        %v1490 = vpop.f32.mrb[0].mxu0
        %v1491 = vadd.f32 0.0, %v1490
        %1492 = vmatprep.mubr.f32.mxu0 %v1065
        %1493 = vmatmul.mubr.f32.gmra.mrb[0].mxu0 %v1064
        %v1494 = vpop.f32.mrb[0].mxu0
        %v1495 = vadd.f32 0.0, %v1494
        %v1496 = vpop.f32.mrb[0].mxu0
        %v1497 = vadd.f32 0.0, %v1496
        %1498 = vmatprep.mubr.f32.mxu0 %v1067
        %1499 = vmatmul.mubr.f32.gmra.mrb[0].mxu0 %v1066
        %v1500 = vpop.f32.mrb[0].mxu0
        %v1501 = vadd.f32 0.0, %v1500
        %v1502 = vpop.f32.mrb[0].mxu0
        %v1503 = vadd.f32 0.0, %v1502
        %1504 = vmatprep.mubr.f32.mxu0 %v1069
        %1505 = vmatmul.mubr.f32.gmra.mrb[0].mxu0 %v1068
        %v1506 = vpop.f32.mrb[0].mxu0
        %v1507 = vadd.f32 0.0, %v1506
        %v1508 = vpop.f32.mrb[0].mxu0
        %v1509 = vadd.f32 0.0, %v1508
        %1510 = vmatprep.mubr.f32.mxu0 %v1071
        %1511 = vmatmul.mubr.f32.gmra.mrb[0].mxu0 %v1070
        %v1512 = vpop.f32.mrb[0].mxu0
        %v1513 = vadd.f32 0.0, %v1512
        %v1514 = vpop.f32.mrb[0].mxu0
        %v1515 = vadd.f32 0.0, %v1514
        %1516 = vmatprep.mubr.f32.mxu0 %v1073
        %1517 = vmatmul.mubr.f32.gmra.mrb[0].mxu0 %v1072
        %v1518 = vpop.f32.mrb[0].mxu0
        %v1519 = vadd.f32 0.0, %v1518
        %v1520 = vpop.f32.mrb[0].mxu0
        %v1521 = vadd.f32 0.0, %v1520
        %1522 = vmatprep.mubr.f32.mxu0 %v1075
        %1523 = vmatmul.mubr.f32.gmra.mrb[0].mxu0 %v1074
        %v1524 = vpop.f32.mrb[0].mxu0
        %v1525 = vadd.f32 0.0, %v1524
        %v1526 = vpop.f32.mrb[0].mxu0
        %v1527 = vadd.f32 0.0, %v1526
        %1528 = vmatprep.mubr.f32.mxu0 %v1077
        %1529 = vmatmul.mubr.f32.gmra.mrb[0].mxu0 %v1076
        %v1530 = vpop.f32.mrb[0].mxu0
        %v1531 = vadd.f32 0.0, %v1530
        %v1532 = vpop.f32.mrb[0].mxu0
        %v1533 = vadd.f32 0.0, %v1532
        %1534 = vmatprep.mubr.f32.mxu0 %v1079
        %1535 = vmatmul.mubr.f32.gmra.mrb[0].mxu0 %v1078
        %v1536 = vpop.f32.mrb[0].mxu0
        %v1537 = vadd.f32 0.0, %v1536
        %v1538 = vpop.f32.mrb[0].mxu0
        %v1539 = vadd.f32 0.0, %v1538
        %1540 = vmatprep.mubr.f32.mxu0 %v1081
        %1541 = vmatmul.mubr.f32.gmra.mrb[0].mxu0 %v1080
        %v1542 = vpop.f32.mrb[0].mxu0
        %v1543 = vadd.f32 0.0, %v1542
        %v1544 = vpop.f32.mrb[0].mxu0
        %v1545 = vadd.f32 0.0, %v1544
        %1546 = vmatprep.mubr.f32.mxu0 %v1083
        %1547 = vmatmul.mubr.f32.gmra.mrb[0].mxu0 %v1082
        %v1548 = vpop.f32.mrb[0].mxu0
        %v1549 = vadd.f32 0.0, %v1548
        %v1550 = vpop.f32.mrb[0].mxu0
        %v1551 = vadd.f32 0.0, %v1550
        %1552 = vmatprep.mubr.f32.mxu0 %v1085
        %1553 = vmatmul.mubr.f32.gmra.mrb[0].mxu0 %v1084
        %v1554 = vpop.f32.mrb[0].mxu0
        %v1555 = vadd.f32 0.0, %v1554
        %v1556 = vpop.f32.mrb[0].mxu0
        %v1557 = vadd.f32 0.0, %v1556
        %1558 = vmatprep.mubr.f32.mxu0 %v1087
        %1559 = vmatmul.mubr.f32.gmra.mrb[0].mxu0 %v1086
        %v1560 = vpop.f32.mrb[0].mxu0
        %v1561 = vadd.f32 0.0, %v1560
        %v1562 = vpop.f32.mrb[0].mxu0
        %v1563 = vadd.f32 0.0, %v1562
        %1564 = vmatprep.mubr.f32.mxu0 %v1089
        %1565 = vmatmul.mubr.f32.gmra.mrb[0].mxu0 %v1088
        %v1566 = vpop.f32.mrb[0].mxu0
        %v1567 = vadd.f32 0.0, %v1566
        %v1568 = vpop.f32.mrb[0].mxu0
        %v1569 = vadd.f32 0.0, %v1568
        %1570 = vmatprep.mubr.f32.mxu0 %v1091
        %1571 = vmatmul.mubr.f32.gmra.mrb[0].mxu0 %v1090
        %v1572 = vpop.f32.mrb[0].mxu0
        %v1573 = vadd.f32 0.0, %v1572
        %v1574 = vpop.f32.mrb[0].mxu0
        %v1575 = vadd.f32 0.0, %v1574
        %1576 = vmatprep.mubr.f32.mxu0 %v1093
        %1577 = vmatmul.mubr.f32.gmra.mrb[0].mxu0 %v1092
        %v1578 = vpop.f32.mrb[0].mxu0
        %v1579 = vadd.f32 0.0, %v1578
        %v1580 = vpop.f32.mrb[0].mxu0
        %v1581 = vadd.f32 0.0, %v1580
        %1582 = vmatprep.mubr.f32.mxu0 %v1095
        %1583 = vmatmul.mubr.f32.gmra.mrb[0].mxu0 %v1094
        %v1584 = vpop.f32.mrb[0].mxu0
        %v1585 = vadd.f32 0.0, %v1584
        %v1586 = vpop.f32.mrb[0].mxu0
        %v1587 = vadd.f32 0.0, %v1586
        %1588 = vmatprep.mubr.f32.mxu0 %v1097
        %1589 = vmatmul.mubr.f32.gmra.mrb[0].mxu0 %v1096
        %v1590 = vpop.f32.mrb[0].mxu0
        %v1591 = vadd.f32 0.0, %v1590
        %v1592 = vpop.f32.mrb[0].mxu0
        %v1593 = vadd.f32 0.0, %v1592
        %1594 = vmatprep.mubr.f32.mxu0 %v1099
        %1595 = vmatmul.mubr.f32.gmra.mrb[0].mxu0 %v1098
        %v1596 = vpop.f32.mrb[0].mxu0
        %v1597 = vadd.f32 0.0, %v1596
        %v1598 = vpop.f32.mrb[0].mxu0
        %v1599 = vadd.f32 0.0, %v1598
        %1600 = vmatprep.mubr.f32.mxu0 %v1101
        %1601 = vmatmul.mubr.f32.gmra.mrb[0].mxu0 %v1100
        %v1602 = vpop.f32.mrb[0].mxu0
        %v1603 = vadd.f32 0.0, %v1602
        %v1604 = vpop.f32.mrb[0].mxu0
        %v1605 = vadd.f32 0.0, %v1604
        %1606 = vmatprep.mubr.f32.mxu0 %v1103
        %1607 = vmatmul.mubr.f32.gmra.mrb[0].mxu0 %v1102
        %v1608 = vpop.f32.mrb[0].mxu0
        %v1609 = vadd.f32 0.0, %v1608
        %v1610 = vpop.f32.mrb[0].mxu0
        %v1611 = vadd.f32 0.0, %v1610
        %1612 = vmatprep.mubr.f32.mxu0 %v1105
        %1613 = vmatmul.mubr.f32.gmra.mrb[0].mxu0 %v1104
        %v1614 = vpop.f32.mrb[0].mxu0
        %v1615 = vadd.f32 0.0, %v1614
        %v1616 = vpop.f32.mrb[0].mxu0
        %v1617 = vadd.f32 0.0, %v1616
        %1618 = vmatprep.mubr.f32.mxu0 %v1107
        %1619 = vmatmul.mubr.f32.gmra.mrb[0].mxu0 %v1106
        %v1620 = vpop.f32.mrb[0].mxu0
        %v1621 = vadd.f32 0.0, %v1620
        %v1622 = vpop.f32.mrb[0].mxu0
        %v1623 = vadd.f32 0.0, %v1622
        %1624 = vmatprep.mubr.f32.mxu0 %v1109
        %1625 = vmatmul.mubr.f32.gmra.mrb[0].mxu0 %v1108
        %v1626 = vpop.f32.mrb[0].mxu0
        %v1627 = vadd.f32 0.0, %v1626
        %v1628 = vpop.f32.mrb[0].mxu0
        %v1629 = vadd.f32 0.0, %v1628
        %1630 = vmatprep.mubr.f32.mxu0 %v1111
        %1631 = vmatmul.mubr.f32.gmra.mrb[0].mxu0 %v1110
        %v1632 = vpop.f32.mrb[0].mxu0
        %v1633 = vadd.f32 0.0, %v1632
        %v1634 = vpop.f32.mrb[0].mxu0
        %v1635 = vadd.f32 0.0, %v1634
        %1636 = vmatprep.mubr.f32.mxu0 %v1113
        %1637 = vmatmul.mubr.f32.gmra.mrb[0].mxu0 %v1112
        %v1638 = vpop.f32.mrb[0].mxu0
        %v1639 = vadd.f32 0.0, %v1638
        %v1640 = vpop.f32.mrb[0].mxu0
        %v1641 = vadd.f32 0.0, %v1640
        %1642 = vmatprep.mubr.f32.mxu0 %v1115
        %1643 = vmatmul.mubr.f32.gmra.mrb[0].mxu0 %v1114
        %v1644 = vpop.f32.mrb[0].mxu0
        %v1645 = vadd.f32 0.0, %v1644
        %v1646 = vpop.f32.mrb[0].mxu0
        %v1647 = vadd.f32 0.0, %v1646
        %1648 = vmatprep.mubr.f32.mxu0 %v1117
        %1649 = vmatmul.mubr.f32.gmra.mrb[0].mxu0 %v1116
        %v1650 = vpop.f32.mrb[0].mxu0
        %v1651 = vadd.f32 0.0, %v1650
        %v1652 = vpop.f32.mrb[0].mxu0
        %v1653 = vadd.f32 0.0, %v1652
        %1654 = vmatprep.mubr.f32.mxu0 %v1119
        %1655 = vmatmul.mubr.f32.gmra.mrb[0].mxu0 %v1118
        %v1656 = vpop.f32.mrb[0].mxu0
        %v1657 = vadd.f32 0.0, %v1656
        %v1658 = vpop.f32.mrb[0].mxu0
        %v1659 = vadd.f32 0.0, %v1658
        %1660 = vmatprep.mubr.f32.mxu0 %v1121
        %1661 = vmatmul.mubr.f32.gmra.mrb[0].mxu0 %v1120
        %v1662 = vpop.f32.mrb[0].mxu0
        %v1663 = vadd.f32 0.0, %v1662
        %v1664 = vpop.f32.mrb[0].mxu0
        %v1665 = vadd.f32 0.0, %v1664
        %1666 = vmatprep.mubr.f32.mxu0 %v1123
        %1667 = vmatmul.mubr.f32.gmra.mrb[0].mxu0 %v1122
        %v1668 = vpop.f32.mrb[0].mxu0
        %v1669 = vadd.f32 0.0, %v1668
        %v1670 = vpop.f32.mrb[0].mxu0
        %v1671 = vadd.f32 0.0, %v1670
        %1672 = vmatprep.mubr.f32.mxu0 %v1125
        %1673 = vmatmul.mubr.f32.gmra.mrb[0].mxu0 %v1124
        %v1674 = vpop.f32.mrb[0].mxu0
        %v1675 = vadd.f32 0.0, %v1674
        %v1676 = vpop.f32.mrb[0].mxu0
        %v1677 = vadd.f32 0.0, %v1676
        %1678 = vmatprep.mubr.f32.mxu0 %v1127
        %1679 = vmatmul.mubr.f32.gmra.mrb[0].mxu0 %v1126
        %v1680 = vpop.f32.mrb[0].mxu0
        %v1681 = vadd.f32 0.0, %v1680
        %v1682 = vpop.f32.mrb[0].mxu0
        %v1683 = vadd.f32 0.0, %v1682
        %1684 = vmatprep.mubr.f32.mxu0 %v1129
        %1685 = vmatmul.mubr.f32.gmra.mrb[0].mxu0 %v1128
        %v1686 = vpop.f32.mrb[0].mxu0
        %v1687 = vadd.f32 0.0, %v1686
        %v1688 = vpop.f32.mrb[0].mxu0
        %v1689 = vadd.f32 0.0, %v1688
        %1690 = vmatprep.mubr.f32.mxu0 %v1131
        %1691 = vmatmul.mubr.f32.gmra.mrb[0].mxu0 %v1130
        %v1692 = vpop.f32.mrb[0].mxu0
        %v1693 = vadd.f32 0.0, %v1692
        %v1694 = vpop.f32.mrb[0].mxu0
        %v1695 = vadd.f32 0.0, %v1694
        %1696 = vmatprep.mubr.f32.mxu0 %v1133
        %1697 = vmatmul.mubr.f32.gmra.mrb[0].mxu0 %v1132
        %v1698 = vpop.f32.mrb[0].mxu0
        %v1699 = vadd.f32 0.0, %v1698
        %v1700 = vpop.f32.mrb[0].mxu0
        %v1701 = vadd.f32 0.0, %v1700
        %1702 = vmatprep.mubr.f32.mxu0 %v1135
        %1703 = vmatmul.mubr.f32.gmra.mrb[0].mxu0 %v1134
        %v1704 = vpop.f32.mrb[0].mxu0
        %v1705 = vadd.f32 0.0, %v1704
        %v1706 = vpop.f32.mrb[0].mxu0
        %v1707 = vadd.f32 0.0, %v1706
        %1708 = vmatprep.mubr.f32.mxu0 %v1137
        %1709 = vmatmul.mubr.f32.gmra.mrb[0].mxu0 %v1136
        %v1710 = vpop.f32.mrb[0].mxu0
        %v1711 = vadd.f32 0.0, %v1710
        %v1712 = vpop.f32.mrb[0].mxu0
        %v1713 = vadd.f32 0.0, %v1712
        %1714 = vmatprep.mubr.f32.mxu0 %v1139
        %1715 = vmatmul.mubr.f32.gmra.mrb[0].mxu0 %v1138
        %v1716 = vpop.f32.mrb[0].mxu0
        %v1717 = vadd.f32 0.0, %v1716
        %v1718 = vpop.f32.mrb[0].mxu0
        %v1719 = vadd.f32 0.0, %v1718
        %1720 = vmatprep.mubr.f32.mxu0 %v1141
        %1721 = vmatmul.mubr.f32.gmra.mrb[0].mxu0 %v1140
        %v1722 = vpop.f32.mrb[0].mxu0
        %v1723 = vadd.f32 0.0, %v1722
        %v1724 = vpop.f32.mrb[0].mxu0
        %v1725 = vadd.f32 0.0, %v1724
        %1726 = vmatprep.mubr.f32.mxu0 %v1143
        %1727 = vmatmul.mubr.f32.gmra.mrb[0].mxu0 %v1142
        %v1728 = vpop.f32.mrb[0].mxu0
        %v1729 = vadd.f32 0.0, %v1728
        %v1730 = vpop.f32.mrb[0].mxu0
        %v1731 = vadd.f32 0.0, %v1730
        %1732 = vmatprep.mubr.f32.mxu0 %v1145
        %1733 = vmatmul.mubr.f32.gmra.mrb[0].mxu0 %v1144
        %v1734 = vpop.f32.mrb[0].mxu0
        %v1735 = vadd.f32 0.0, %v1734
        %v1736 = vpop.f32.mrb[0].mxu0
        %v1737 = vadd.f32 0.0, %v1736
        %1738 = vmatprep.mubr.f32.mxu0 %v1147
        %1739 = vmatmul.mubr.f32.gmra.mrb[0].mxu0 %v1146
        %v1740 = vpop.f32.mrb[0].mxu0
        %v1741 = vadd.f32 0.0, %v1740
        %v1742 = vpop.f32.mrb[0].mxu0
        %v1743 = vadd.f32 0.0, %v1742
        %1744 = vmatprep.mubr.f32.mxu0 %v1149
        %1745 = vmatmul.mubr.f32.gmra.mrb[0].mxu0 %v1148
        %v1746 = vpop.f32.mrb[0].mxu0
        %v1747 = vadd.f32 0.0, %v1746
        %v1748 = vpop.f32.mrb[0].mxu0
        %v1749 = vadd.f32 0.0, %v1748
        %1750 = vmatprep.mubr.f32.mxu0 %v1151
        %1751 = vmatmul.mubr.f32.gmra.mrb[0].mxu0 %v1150
        %v1752 = vpop.f32.mrb[0].mxu0
        %v1753 = vadd.f32 0.0, %v1752
        %v1754 = vpop.f32.mrb[0].mxu0
        %v1755 = vadd.f32 0.0, %v1754
        %1756 = vmatprep.mubr.f32.mxu0 %v1153
        %1757 = vmatmul.mubr.f32.gmra.mrb[0].mxu0 %v1152
        %v1758 = vpop.f32.mrb[0].mxu0
        %v1759 = vadd.f32 0.0, %v1758
        %v1760 = vpop.f32.mrb[0].mxu0
        %v1761 = vadd.f32 0.0, %v1760
        %1762 = vmatprep.mubr.f32.mxu0 %v1155
        %1763 = vmatmul.mubr.f32.gmra.mrb[0].mxu0 %v1154
        %v1764 = vpop.f32.mrb[0].mxu0
        %v1765 = vadd.f32 0.0, %v1764
        %v1766 = vpop.f32.mrb[0].mxu0
        %v1767 = vadd.f32 0.0, %v1766
        %1768 = vmatprep.mubr.f32.mxu0 %v1157
        %1769 = vmatmul.mubr.f32.gmra.mrb[0].mxu0 %v1156
        %v1770 = vpop.f32.mrb[0].mxu0
        %v1771 = vadd.f32 0.0, %v1770
        %v1772 = vpop.f32.mrb[0].mxu0
        %v1773 = vadd.f32 0.0, %v1772
        %1774 = vmatprep.mubr.f32.mxu0 %v1159
        %1775 = vmatmul.mubr.f32.gmra.mrb[0].mxu0 %v1158
        %v1776 = vpop.f32.mrb[0].mxu0
        %v1777 = vadd.f32 0.0, %v1776
        %v1778 = vpop.f32.mrb[0].mxu0
        %v1779 = vadd.f32 0.0, %v1778
        %1780 = vmatprep.mubr.f32.mxu0 %v1161
        %1781 = vmatmul.mubr.f32.gmra.mrb[0].mxu0 %v1160
        %v1782 = vpop.f32.mrb[0].mxu0
        %v1783 = vadd.f32 0.0, %v1782
        %v1784 = vpop.f32.mrb[0].mxu0
        %v1785 = vadd.f32 0.0, %v1784
        %1786 = vmatprep.mubr.f32.mxu0 %v1163
        %1787 = vmatmul.mubr.f32.gmra.mrb[0].mxu0 %v1162
        %v1788 = vpop.f32.mrb[0].mxu0
        %v1789 = vadd.f32 0.0, %v1788
        %v1790 = vpop.f32.mrb[0].mxu0
        %v1791 = vadd.f32 0.0, %v1790
        %1792 = vmatprep.mubr.f32.mxu0 %v1165
        %1793 = vmatmul.mubr.f32.gmra.mrb[0].mxu0 %v1164
        %v1794 = vpop.f32.mrb[0].mxu0
        %v1795 = vadd.f32 0.0, %v1794
        %v1796 = vpop.f32.mrb[0].mxu0
        %v1797 = vadd.f32 0.0, %v1796
        %1798 = vmatprep.mubr.f32.mxu0 %v1167
        %1799 = vmatmul.mubr.f32.gmra.mrb[0].mxu0 %v1166
        %v1800 = vpop.f32.mrb[0].mxu0
        %v1801 = vadd.f32 0.0, %v1800
        %v1802 = vpop.f32.mrb[0].mxu0
        %v1803 = vadd.f32 0.0, %v1802
        %1804 = vmatprep.mubr.f32.mxu0 %v1169
        %1805 = vmatmul.mubr.f32.gmra.mrb[0].mxu0 %v1168
        %v1806 = vpop.f32.mrb[0].mxu0
        %v1807 = vadd.f32 0.0, %v1806
        %v1808 = vpop.f32.mrb[0].mxu0
        %v1809 = vadd.f32 0.0, %v1808
        %1810 = vdwg.mxu0
        %1811 = vmatprep.subr.mxu0 %v1173
        %1812 = vmatpush1.msra.mxu0 %v1172
        %1813 = vmatprep.subr.mxu0 %v1179
        %1814 = vmatpush1.msra.mxu0 %v1178
        %1815 = vmatprep.subr.mxu0 %v1185
        %1816 = vmatpush1.msra.mxu0 %v1184
        %1817 = vmatprep.subr.mxu0 %v1191
        %1818 = vmatpush1.msra.mxu0 %v1190
        %1819 = vmatprep.subr.mxu0 %v1197
        %1820 = vmatpush1.msra.mxu0 %v1196
        %1821 = vmatprep.subr.mxu0 %v1203
        %1822 = vmatpush1.msra.mxu0 %v1202
        %1823 = vmatprep.subr.mxu0 %v1209
        %1824 = vmatpush1.msra.mxu0 %v1208
        %1825 = vmatprep.subr.mxu0 %v1215
        %1826 = vmatpush1.msra.mxu0 %v1214
        %1827 = vmatprep.subr.mxu0 %v1221
        %1828 = vmatpush1.msra.mxu0 %v1220
        %1829 = vmatprep.subr.mxu0 %v1227
        %1830 = vmatpush1.msra.mxu0 %v1226
        %1831 = vmatprep.subr.mxu0 %v1233
        %1832 = vmatpush1.msra.mxu0 %v1232
        %1833 = vmatprep.subr.mxu0 %v1239
        %1834 = vmatpush1.msra.mxu0 %v1238
        %1835 = vmatprep.subr.mxu0 %v1245
        %1836 = vmatpush1.msra.mxu0 %v1244
        %1837 = vmatprep.subr.mxu0 %v1251
        %1838 = vmatpush1.msra.mxu0 %v1250
        %1839 = vmatprep.subr.mxu0 %v1257
        %1840 = vmatpush1.msra.mxu0 %v1256
        %1841 = vmatprep.subr.mxu0 %v1263
        %1842 = vmatpush1.msra.mxu0 %v1262
        %1843 = vmatprep.subr.mxu0 %v1269
        %1844 = vmatpush1.msra.mxu0 %v1268
        %1845 = vmatprep.subr.mxu0 %v1275
        %1846 = vmatpush1.msra.mxu0 %v1274
        %1847 = vmatprep.subr.mxu0 %v1281
        %1848 = vmatpush1.msra.mxu0 %v1280
        %1849 = vmatprep.subr.mxu0 %v1287
        %1850 = vmatpush1.msra.mxu0 %v1286
        %1851 = vmatprep.subr.mxu0 %v1293
        %1852 = vmatpush1.msra.mxu0 %v1292
        %1853 = vmatprep.subr.mxu0 %v1299
        %1854 = vmatpush1.msra.mxu0 %v1298
        %1855 = vmatprep.subr.mxu0 %v1305
        %1856 = vmatpush1.msra.mxu0 %v1304
        %1857 = vmatprep.subr.mxu0 %v1311
        %1858 = vmatpush1.msra.mxu0 %v1310
        %1859 = vmatprep.subr.mxu0 %v1317
        %1860 = vmatpush1.msra.mxu0 %v1316
        %1861 = vmatprep.subr.mxu0 %v1323
        %1862 = vmatpush1.msra.mxu0 %v1322
        %1863 = vmatprep.subr.mxu0 %v1329
        %1864 = vmatpush1.msra.mxu0 %v1328
        %1865 = vmatprep.subr.mxu0 %v1335
        %1866 = vmatpush1.msra.mxu0 %v1334
        %1867 = vmatprep.subr.mxu0 %v1341
        %1868 = vmatpush1.msra.mxu0 %v1340
        %1869 = vmatprep.subr.mxu0 %v1347
        %1870 = vmatpush1.msra.mxu0 %v1346
        %1871 = vmatprep.subr.mxu0 %v1353
        %1872 = vmatpush1.msra.mxu0 %v1352
        %1873 = vmatprep.subr.mxu0 %v1359
        %1874 = vmatpush1.msra.mxu0 %v1358
        %1875 = vmatprep.mubr.f32.mxu0 %v1043
        %1876 = vmatmul.mubr.f32.gmra.mrb[0].mxu0 %v1042
        %v1877 = vpop.f32.mrb[0].mxu0
        %v1878 = vadd.f32 0.0, %v1877
        %v1879 = vpop.f32.mrb[0].mxu0
        %v1880 = vadd.f32 0.0, %v1879
        %1881 = vmatprep.mubr.f32.mxu0 %v1045
        %1882 = vmatmul.mubr.f32.gmra.mrb[0].mxu0 %v1044
        %v1883 = vpop.f32.mrb[0].mxu0
        %v1884 = vadd.f32 0.0, %v1883
        %v1885 = vpop.f32.mrb[0].mxu0
        %v1886 = vadd.f32 0.0, %v1885
        %1887 = vmatprep.mubr.f32.mxu0 %v1047
        %1888 = vmatmul.mubr.f32.gmra.mrb[0].mxu0 %v1046
        %v1889 = vpop.f32.mrb[0].mxu0
        %v1890 = vadd.f32 0.0, %v1889
        %v1891 = vpop.f32.mrb[0].mxu0
        %v1892 = vadd.f32 0.0, %v1891
        %1893 = vmatprep.mubr.f32.mxu0 %v1049
        %1894 = vmatmul.mubr.f32.gmra.mrb[0].mxu0 %v1048
        %v1895 = vpop.f32.mrb[0].mxu0
        %v1896 = vadd.f32 0.0, %v1895
        %v1897 = vpop.f32.mrb[0].mxu0
        %v1898 = vadd.f32 0.0, %v1897
        %1899 = vmatprep.mubr.f32.mxu0 %v1051
        %1900 = vmatmul.mubr.f32.gmra.mrb[0].mxu0 %v1050
        %v1901 = vpop.f32.mrb[0].mxu0
        %v1902 = vadd.f32 0.0, %v1901
        %v1903 = vpop.f32.mrb[0].mxu0
        %v1904 = vadd.f32 0.0, %v1903
        %1905 = vmatprep.mubr.f32.mxu0 %v1053
        %1906 = vmatmul.mubr.f32.gmra.mrb[0].mxu0 %v1052
        %v1907 = vpop.f32.mrb[0].mxu0
        %v1908 = vadd.f32 0.0, %v1907
        %v1909 = vpop.f32.mrb[0].mxu0
        %v1910 = vadd.f32 0.0, %v1909
        %1911 = vmatprep.mubr.f32.mxu0 %v1055
        %1912 = vmatmul.mubr.f32.gmra.mrb[0].mxu0 %v1054
        %v1913 = vpop.f32.mrb[0].mxu0
        %v1914 = vadd.f32 0.0, %v1913
        %v1915 = vpop.f32.mrb[0].mxu0
        %v1916 = vadd.f32 0.0, %v1915
        %1917 = vmatprep.mubr.f32.mxu0 %v1057
        %1918 = vmatmul.mubr.f32.gmra.mrb[0].mxu0 %v1056
        %v1919 = vpop.f32.mrb[0].mxu0
        %v1920 = vadd.f32 0.0, %v1919
        %v1921 = vpop.f32.mrb[0].mxu0
        %v1922 = vadd.f32 0.0, %v1921
        %1923 = vmatprep.mubr.f32.mxu0 %v1059
        %1924 = vmatmul.mubr.f32.gmra.mrb[0].mxu0 %v1058
        %v1925 = vpop.f32.mrb[0].mxu0
        %v1926 = vadd.f32 0.0, %v1925
        %v1927 = vpop.f32.mrb[0].mxu0
        %v1928 = vadd.f32 0.0, %v1927
        %1929 = vmatprep.mubr.f32.mxu0 %v1061
        %1930 = vmatmul.mubr.f32.gmra.mrb[0].mxu0 %v1060
        %v1931 = vpop.f32.mrb[0].mxu0
        %v1932 = vadd.f32 0.0, %v1931
        %v1933 = vpop.f32.mrb[0].mxu0
        %v1934 = vadd.f32 0.0, %v1933
        %1935 = vmatprep.mubr.f32.mxu0 %v1063
        %1936 = vmatmul.mubr.f32.gmra.mrb[0].mxu0 %v1062
        %v1937 = vpop.f32.mrb[0].mxu0
        %v1938 = vadd.f32 0.0, %v1937
        %v1939 = vpop.f32.mrb[0].mxu0
        %v1940 = vadd.f32 0.0, %v1939
        %1941 = vmatprep.mubr.f32.mxu0 %v1065
        %1942 = vmatmul.mubr.f32.gmra.mrb[0].mxu0 %v1064
        %v1943 = vpop.f32.mrb[0].mxu0
        %v1944 = vadd.f32 0.0, %v1943
        %v1945 = vpop.f32.mrb[0].mxu0
        %v1946 = vadd.f32 0.0, %v1945
        %1947 = vmatprep.mubr.f32.mxu0 %v1067
        %1948 = vmatmul.mubr.f32.gmra.mrb[0].mxu0 %v1066
        %v1949 = vpop.f32.mrb[0].mxu0
        %v1950 = vadd.f32 0.0, %v1949
        %v1951 = vpop.f32.mrb[0].mxu0
        %v1952 = vadd.f32 0.0, %v1951
        %1953 = vmatprep.mubr.f32.mxu0 %v1069
        %1954 = vmatmul.mubr.f32.gmra.mrb[0].mxu0 %v1068
        %v1955 = vpop.f32.mrb[0].mxu0
        %v1956 = vadd.f32 0.0, %v1955
        %v1957 = vpop.f32.mrb[0].mxu0
        %v1958 = vadd.f32 0.0, %v1957
        %1959 = vmatprep.mubr.f32.mxu0 %v1071
        %1960 = vmatmul.mubr.f32.gmra.mrb[0].mxu0 %v1070
        %v1961 = vpop.f32.mrb[0].mxu0
        %v1962 = vadd.f32 0.0, %v1961
        %v1963 = vpop.f32.mrb[0].mxu0
        %v1964 = vadd.f32 0.0, %v1963
        %1965 = vmatprep.mubr.f32.mxu0 %v1073
        %1966 = vmatmul.mubr.f32.gmra.mrb[0].mxu0 %v1072
        %v1967 = vpop.f32.mrb[0].mxu0
        %v1968 = vadd.f32 0.0, %v1967
        %v1969 = vpop.f32.mrb[0].mxu0
        %v1970 = vadd.f32 0.0, %v1969
        %1971 = vmatprep.mubr.f32.mxu0 %v1075
        %1972 = vmatmul.mubr.f32.gmra.mrb[0].mxu0 %v1074
        %v1973 = vpop.f32.mrb[0].mxu0
        %v1974 = vadd.f32 0.0, %v1973
        %v1975 = vpop.f32.mrb[0].mxu0
        %v1976 = vadd.f32 0.0, %v1975
        %1977 = vmatprep.mubr.f32.mxu0 %v1077
        %1978 = vmatmul.mubr.f32.gmra.mrb[0].mxu0 %v1076
        %v1979 = vpop.f32.mrb[0].mxu0
        %v1980 = vadd.f32 0.0, %v1979
        %v1981 = vpop.f32.mrb[0].mxu0
        %v1982 = vadd.f32 0.0, %v1981
        %1983 = vmatprep.mubr.f32.mxu0 %v1079
        %1984 = vmatmul.mubr.f32.gmra.mrb[0].mxu0 %v1078
        %v1985 = vpop.f32.mrb[0].mxu0
        %v1986 = vadd.f32 0.0, %v1985
        %v1987 = vpop.f32.mrb[0].mxu0
        %v1988 = vadd.f32 0.0, %v1987
        %1989 = vmatprep.mubr.f32.mxu0 %v1081
        %1990 = vmatmul.mubr.f32.gmra.mrb[0].mxu0 %v1080
        %v1991 = vpop.f32.mrb[0].mxu0
        %v1992 = vadd.f32 0.0, %v1991
        %v1993 = vpop.f32.mrb[0].mxu0
        %v1994 = vadd.f32 0.0, %v1993
        %1995 = vmatprep.mubr.f32.mxu0 %v1083
        %1996 = vmatmul.mubr.f32.gmra.mrb[0].mxu0 %v1082
        %v1997 = vpop.f32.mrb[0].mxu0
        %v1998 = vadd.f32 0.0, %v1997
        %v1999 = vpop.f32.mrb[0].mxu0
        %v2000 = vadd.f32 0.0, %v1999
        %2001 = vmatprep.mubr.f32.mxu0 %v1085
        %2002 = vmatmul.mubr.f32.gmra.mrb[0].mxu0 %v1084
        %v2003 = vpop.f32.mrb[0].mxu0
        %v2004 = vadd.f32 0.0, %v2003
        %v2005 = vpop.f32.mrb[0].mxu0
        %v2006 = vadd.f32 0.0, %v2005
        %2007 = vmatprep.mubr.f32.mxu0 %v1087
        %2008 = vmatmul.mubr.f32.gmra.mrb[0].mxu0 %v1086
        %v2009 = vpop.f32.mrb[0].mxu0
        %v2010 = vadd.f32 0.0, %v2009
        %v2011 = vpop.f32.mrb[0].mxu0
        %v2012 = vadd.f32 0.0, %v2011
        %2013 = vmatprep.mubr.f32.mxu0 %v1089
        %2014 = vmatmul.mubr.f32.gmra.mrb[0].mxu0 %v1088
        %v2015 = vpop.f32.mrb[0].mxu0
        %v2016 = vadd.f32 0.0, %v2015
        %v2017 = vpop.f32.mrb[0].mxu0
        %v2018 = vadd.f32 0.0, %v2017
        %2019 = vmatprep.mubr.f32.mxu0 %v1091
        %2020 = vmatmul.mubr.f32.gmra.mrb[0].mxu0 %v1090
        %v2021 = vpop.f32.mrb[0].mxu0
        %v2022 = vadd.f32 0.0, %v2021
        %v2023 = vpop.f32.mrb[0].mxu0
        %v2024 = vadd.f32 0.0, %v2023
        %2025 = vmatprep.mubr.f32.mxu0 %v1093
        %2026 = vmatmul.mubr.f32.gmra.mrb[0].mxu0 %v1092
        %v2027 = vpop.f32.mrb[0].mxu0
        %v2028 = vadd.f32 0.0, %v2027
        %v2029 = vpop.f32.mrb[0].mxu0
        %v2030 = vadd.f32 0.0, %v2029
        %2031 = vmatprep.mubr.f32.mxu0 %v1095
        %2032 = vmatmul.mubr.f32.gmra.mrb[0].mxu0 %v1094
        %v2033 = vpop.f32.mrb[0].mxu0
        %v2034 = vadd.f32 0.0, %v2033
        %v2035 = vpop.f32.mrb[0].mxu0
        %v2036 = vadd.f32 0.0, %v2035
        %2037 = vmatprep.mubr.f32.mxu0 %v1097
        %2038 = vmatmul.mubr.f32.gmra.mrb[0].mxu0 %v1096
        %v2039 = vpop.f32.mrb[0].mxu0
        %v2040 = vadd.f32 0.0, %v2039
        %v2041 = vpop.f32.mrb[0].mxu0
        %v2042 = vadd.f32 0.0, %v2041
        %2043 = vmatprep.mubr.f32.mxu0 %v1099
        %2044 = vmatmul.mubr.f32.gmra.mrb[0].mxu0 %v1098
        %v2045 = vpop.f32.mrb[0].mxu0
        %v2046 = vadd.f32 0.0, %v2045
        %v2047 = vpop.f32.mrb[0].mxu0
        %v2048 = vadd.f32 0.0, %v2047
        %2049 = vmatprep.mubr.f32.mxu0 %v1101
        %2050 = vmatmul.mubr.f32.gmra.mrb[0].mxu0 %v1100
        %v2051 = vpop.f32.mrb[0].mxu0
        %v2052 = vadd.f32 0.0, %v2051
        %v2053 = vpop.f32.mrb[0].mxu0
        %v2054 = vadd.f32 0.0, %v2053
        %2055 = vmatprep.mubr.f32.mxu0 %v1103
        %2056 = vmatmul.mubr.f32.gmra.mrb[0].mxu0 %v1102
        %v2057 = vpop.f32.mrb[0].mxu0
        %v2058 = vadd.f32 0.0, %v2057
        %v2059 = vpop.f32.mrb[0].mxu0
        %v2060 = vadd.f32 0.0, %v2059
        %2061 = vmatprep.mubr.f32.mxu0 %v1105
        %2062 = vmatmul.mubr.f32.gmra.mrb[0].mxu0 %v1104
        %v2063 = vpop.f32.mrb[0].mxu0
        %v2064 = vadd.f32 0.0, %v2063
        %v2065 = vpop.f32.mrb[0].mxu0
        %v2066 = vadd.f32 0.0, %v2065
        %2067 = vmatprep.mubr.f32.mxu0 %v1107
        %2068 = vmatmul.mubr.f32.gmra.mrb[0].mxu0 %v1106
        %v2069 = vpop.f32.mrb[0].mxu0
        %v2070 = vadd.f32 0.0, %v2069
        %v2071 = vpop.f32.mrb[0].mxu0
        %v2072 = vadd.f32 0.0, %v2071
        %2073 = vmatprep.mubr.f32.mxu0 %v1109
        %2074 = vmatmul.mubr.f32.gmra.mrb[0].mxu0 %v1108
        %v2075 = vpop.f32.mrb[0].mxu0
        %v2076 = vadd.f32 0.0, %v2075
        %v2077 = vpop.f32.mrb[0].mxu0
        %v2078 = vadd.f32 0.0, %v2077
        %2079 = vmatprep.mubr.f32.mxu0 %v1111
        %2080 = vmatmul.mubr.f32.gmra.mrb[0].mxu0 %v1110
        %v2081 = vpop.f32.mrb[0].mxu0
        %v2082 = vadd.f32 0.0, %v2081
        %v2083 = vpop.f32.mrb[0].mxu0
        %v2084 = vadd.f32 0.0, %v2083
        %2085 = vmatprep.mubr.f32.mxu0 %v1113
        %2086 = vmatmul.mubr.f32.gmra.mrb[0].mxu0 %v1112
        %v2087 = vpop.f32.mrb[0].mxu0
        %v2088 = vadd.f32 0.0, %v2087
        %v2089 = vpop.f32.mrb[0].mxu0
        %v2090 = vadd.f32 0.0, %v2089
        %2091 = vmatprep.mubr.f32.mxu0 %v1115
        %2092 = vmatmul.mubr.f32.gmra.mrb[0].mxu0 %v1114
        %v2093 = vpop.f32.mrb[0].mxu0
        %v2094 = vadd.f32 0.0, %v2093
        %v2095 = vpop.f32.mrb[0].mxu0
        %v2096 = vadd.f32 0.0, %v2095
        %2097 = vmatprep.mubr.f32.mxu0 %v1117
        %2098 = vmatmul.mubr.f32.gmra.mrb[0].mxu0 %v1116
        %v2099 = vpop.f32.mrb[0].mxu0
        %v2100 = vadd.f32 0.0, %v2099
        %v2101 = vpop.f32.mrb[0].mxu0
        %v2102 = vadd.f32 0.0, %v2101
        %2103 = vmatprep.mubr.f32.mxu0 %v1119
        %2104 = vmatmul.mubr.f32.gmra.mrb[0].mxu0 %v1118
        %v2105 = vpop.f32.mrb[0].mxu0
        %v2106 = vadd.f32 0.0, %v2105
        %v2107 = vpop.f32.mrb[0].mxu0
        %v2108 = vadd.f32 0.0, %v2107
        %2109 = vmatprep.mubr.f32.mxu0 %v1121
        %2110 = vmatmul.mubr.f32.gmra.mrb[0].mxu0 %v1120
        %v2111 = vpop.f32.mrb[0].mxu0
        %v2112 = vadd.f32 0.0, %v2111
        %v2113 = vpop.f32.mrb[0].mxu0
        %v2114 = vadd.f32 0.0, %v2113
        %2115 = vmatprep.mubr.f32.mxu0 %v1123
        %2116 = vmatmul.mubr.f32.gmra.mrb[0].mxu0 %v1122
        %v2117 = vpop.f32.mrb[0].mxu0
        %v2118 = vadd.f32 0.0, %v2117
        %v2119 = vpop.f32.mrb[0].mxu0
        %v2120 = vadd.f32 0.0, %v2119
        %2121 = vmatprep.mubr.f32.mxu0 %v1125
        %2122 = vmatmul.mubr.f32.gmra.mrb[0].mxu0 %v1124
        %v2123 = vpop.f32.mrb[0].mxu0
        %v2124 = vadd.f32 0.0, %v2123
        %v2125 = vpop.f32.mrb[0].mxu0
        %v2126 = vadd.f32 0.0, %v2125
        %2127 = vmatprep.mubr.f32.mxu0 %v1127
        %2128 = vmatmul.mubr.f32.gmra.mrb[0].mxu0 %v1126
        %v2129 = vpop.f32.mrb[0].mxu0
        %v2130 = vadd.f32 0.0, %v2129
        %v2131 = vpop.f32.mrb[0].mxu0
        %v2132 = vadd.f32 0.0, %v2131
        %2133 = vmatprep.mubr.f32.mxu0 %v1129
        %2134 = vmatmul.mubr.f32.gmra.mrb[0].mxu0 %v1128
        %v2135 = vpop.f32.mrb[0].mxu0
        %v2136 = vadd.f32 0.0, %v2135
        %v2137 = vpop.f32.mrb[0].mxu0
        %v2138 = vadd.f32 0.0, %v2137
        %2139 = vmatprep.mubr.f32.mxu0 %v1131
        %2140 = vmatmul.mubr.f32.gmra.mrb[0].mxu0 %v1130
        %v2141 = vpop.f32.mrb[0].mxu0
        %v2142 = vadd.f32 0.0, %v2141
        %v2143 = vpop.f32.mrb[0].mxu0
        %v2144 = vadd.f32 0.0, %v2143
        %2145 = vmatprep.mubr.f32.mxu0 %v1133
        %2146 = vmatmul.mubr.f32.gmra.mrb[0].mxu0 %v1132
        %v2147 = vpop.f32.mrb[0].mxu0
        %v2148 = vadd.f32 0.0, %v2147
        %v2149 = vpop.f32.mrb[0].mxu0
        %v2150 = vadd.f32 0.0, %v2149
        %2151 = vmatprep.mubr.f32.mxu0 %v1135
        %2152 = vmatmul.mubr.f32.gmra.mrb[0].mxu0 %v1134
        %v2153 = vpop.f32.mrb[0].mxu0
        %v2154 = vadd.f32 0.0, %v2153
        %v2155 = vpop.f32.mrb[0].mxu0
        %v2156 = vadd.f32 0.0, %v2155
        %2157 = vmatprep.mubr.f32.mxu0 %v1137
        %2158 = vmatmul.mubr.f32.gmra.mrb[0].mxu0 %v1136
        %v2159 = vpop.f32.mrb[0].mxu0
        %v2160 = vadd.f32 0.0, %v2159
        %v2161 = vpop.f32.mrb[0].mxu0
        %v2162 = vadd.f32 0.0, %v2161
        %2163 = vmatprep.mubr.f32.mxu0 %v1139
        %2164 = vmatmul.mubr.f32.gmra.mrb[0].mxu0 %v1138
        %v2165 = vpop.f32.mrb[0].mxu0
        %v2166 = vadd.f32 0.0, %v2165
        %v2167 = vpop.f32.mrb[0].mxu0
        %v2168 = vadd.f32 0.0, %v2167
        %2169 = vmatprep.mubr.f32.mxu0 %v1141
        %2170 = vmatmul.mubr.f32.gmra.mrb[0].mxu0 %v1140
        %v2171 = vpop.f32.mrb[0].mxu0
        %v2172 = vadd.f32 0.0, %v2171
        %v2173 = vpop.f32.mrb[0].mxu0
        %v2174 = vadd.f32 0.0, %v2173
        %2175 = vmatprep.mubr.f32.mxu0 %v1143
        %2176 = vmatmul.mubr.f32.gmra.mrb[0].mxu0 %v1142
        %v2177 = vpop.f32.mrb[0].mxu0
        %v2178 = vadd.f32 0.0, %v2177
        %v2179 = vpop.f32.mrb[0].mxu0
        %v2180 = vadd.f32 0.0, %v2179
        %2181 = vmatprep.mubr.f32.mxu0 %v1145
        %2182 = vmatmul.mubr.f32.gmra.mrb[0].mxu0 %v1144
        %v2183 = vpop.f32.mrb[0].mxu0
        %v2184 = vadd.f32 0.0, %v2183
        %v2185 = vpop.f32.mrb[0].mxu0
        %v2186 = vadd.f32 0.0, %v2185
        %2187 = vmatprep.mubr.f32.mxu0 %v1147
        %2188 = vmatmul.mubr.f32.gmra.mrb[0].mxu0 %v1146
        %v2189 = vpop.f32.mrb[0].mxu0
        %v2190 = vadd.f32 0.0, %v2189
        %v2191 = vpop.f32.mrb[0].mxu0
        %v2192 = vadd.f32 0.0, %v2191
        %2193 = vmatprep.mubr.f32.mxu0 %v1149
        %2194 = vmatmul.mubr.f32.gmra.mrb[0].mxu0 %v1148
        %v2195 = vpop.f32.mrb[0].mxu0
        %v2196 = vadd.f32 0.0, %v2195
        %v2197 = vpop.f32.mrb[0].mxu0
        %v2198 = vadd.f32 0.0, %v2197
        %2199 = vmatprep.mubr.f32.mxu0 %v1151
        %2200 = vmatmul.mubr.f32.gmra.mrb[0].mxu0 %v1150
        %v2201 = vpop.f32.mrb[0].mxu0
        %v2202 = vadd.f32 0.0, %v2201
        %v2203 = vpop.f32.mrb[0].mxu0
        %v2204 = vadd.f32 0.0, %v2203
        %2205 = vmatprep.mubr.f32.mxu0 %v1153
        %2206 = vmatmul.mubr.f32.gmra.mrb[0].mxu0 %v1152
        %v2207 = vpop.f32.mrb[0].mxu0
        %v2208 = vadd.f32 0.0, %v2207
        %v2209 = vpop.f32.mrb[0].mxu0
        %v2210 = vadd.f32 0.0, %v2209
        %2211 = vmatprep.mubr.f32.mxu0 %v1155
        %2212 = vmatmul.mubr.f32.gmra.mrb[0].mxu0 %v1154
        %v2213 = vpop.f32.mrb[0].mxu0
        %v2214 = vadd.f32 0.0, %v2213
        %v2215 = vpop.f32.mrb[0].mxu0
        %v2216 = vadd.f32 0.0, %v2215
        %2217 = vmatprep.mubr.f32.mxu0 %v1157
        %2218 = vmatmul.mubr.f32.gmra.mrb[0].mxu0 %v1156
        %v2219 = vpop.f32.mrb[0].mxu0
        %v2220 = vadd.f32 0.0, %v2219
        %v2221 = vpop.f32.mrb[0].mxu0
        %v2222 = vadd.f32 0.0, %v2221
        %2223 = vmatprep.mubr.f32.mxu0 %v1159
        %2224 = vmatmul.mubr.f32.gmra.mrb[0].mxu0 %v1158
        %v2225 = vpop.f32.mrb[0].mxu0
        %v2226 = vadd.f32 0.0, %v2225
        %v2227 = vpop.f32.mrb[0].mxu0
        %v2228 = vadd.f32 0.0, %v2227
        %2229 = vmatprep.mubr.f32.mxu0 %v1161
        %2230 = vmatmul.mubr.f32.gmra.mrb[0].mxu0 %v1160
        %v2231 = vpop.f32.mrb[0].mxu0
        %v2232 = vadd.f32 0.0, %v2231
        %v2233 = vpop.f32.mrb[0].mxu0
        %v2234 = vadd.f32 0.0, %v2233
        %2235 = vmatprep.mubr.f32.mxu0 %v1163
        %2236 = vmatmul.mubr.f32.gmra.mrb[0].mxu0 %v1162
        %v2237 = vpop.f32.mrb[0].mxu0
        %v2238 = vadd.f32 0.0, %v2237
        %v2239 = vpop.f32.mrb[0].mxu0
        %v2240 = vadd.f32 0.0, %v2239
        %2241 = vmatprep.mubr.f32.mxu0 %v1165
        %2242 = vmatmul.mubr.f32.gmra.mrb[0].mxu0 %v1164
        %v2243 = vpop.f32.mrb[0].mxu0
        %v2244 = vadd.f32 0.0, %v2243
        %v2245 = vpop.f32.mrb[0].mxu0
        %v2246 = vadd.f32 0.0, %v2245
        %2247 = vmatprep.mubr.f32.mxu0 %v1167
        %2248 = vmatmul.mubr.f32.gmra.mrb[0].mxu0 %v1166
        %v2249 = vpop.f32.mrb[0].mxu0
        %v2250 = vadd.f32 0.0, %v2249
        %v2251 = vpop.f32.mrb[0].mxu0
        %v2252 = vadd.f32 0.0, %v2251
        %2253 = vmatprep.mubr.f32.mxu0 %v1169
        %2254 = vmatmul.mubr.f32.gmra.mrb[0].mxu0 %v1168
        %v2255 = vpop.f32.mrb[0].mxu0
        %v2256 = vadd.f32 0.0, %v2255
        %v2257 = vpop.f32.mrb[0].mxu0
        %v2258 = vadd.f32 0.0, %v2257
        %2259 = vdwg.mxu0
        %2260 = vmatprep.subr.mxu0 %v1175
        %2261 = vmatpush1.msra.mxu0 %v1174
        %2262 = vmatprep.subr.mxu0 %v1181
        %2263 = vmatpush1.msra.mxu0 %v1180
        %2264 = vmatprep.subr.mxu0 %v1187
        %2265 = vmatpush1.msra.mxu0 %v1186
        %2266 = vmatprep.subr.mxu0 %v1193
        %2267 = vmatpush1.msra.mxu0 %v1192
        %2268 = vmatprep.subr.mxu0 %v1199
        %2269 = vmatpush1.msra.mxu0 %v1198
        %2270 = vmatprep.subr.mxu0 %v1205
        %2271 = vmatpush1.msra.mxu0 %v1204
        %2272 = vmatprep.subr.mxu0 %v1211
        %2273 = vmatpush1.msra.mxu0 %v1210
        %2274 = vmatprep.subr.mxu0 %v1217
        %2275 = vmatpush1.msra.mxu0 %v1216
        %2276 = vmatprep.subr.mxu0 %v1223
        %2277 = vmatpush1.msra.mxu0 %v1222
        %2278 = vmatprep.subr.mxu0 %v1229
        %2279 = vmatpush1.msra.mxu0 %v1228
        %2280 = vmatprep.subr.mxu0 %v1235
        %2281 = vmatpush1.msra.mxu0 %v1234
        %2282 = vmatprep.subr.mxu0 %v1241
        %2283 = vmatpush1.msra.mxu0 %v1240
        %2284 = vmatprep.subr.mxu0 %v1247
        %2285 = vmatpush1.msra.mxu0 %v1246
        %2286 = vmatprep.subr.mxu0 %v1253
        %2287 = vmatpush1.msra.mxu0 %v1252
        %2288 = vmatprep.subr.mxu0 %v1259
        %2289 = vmatpush1.msra.mxu0 %v1258
        %2290 = vmatprep.subr.mxu0 %v1265
        %2291 = vmatpush1.msra.mxu0 %v1264
        %2292 = vmatprep.subr.mxu0 %v1271
        %2293 = vmatpush1.msra.mxu0 %v1270
        %2294 = vmatprep.subr.mxu0 %v1277
        %2295 = vmatpush1.msra.mxu0 %v1276
        %2296 = vmatprep.subr.mxu0 %v1283
        %2297 = vmatpush1.msra.mxu0 %v1282
        %2298 = vmatprep.subr.mxu0 %v1289
        %2299 = vmatpush1.msra.mxu0 %v1288
        %2300 = vmatprep.subr.mxu0 %v1295
        %2301 = vmatpush1.msra.mxu0 %v1294
        %2302 = vmatprep.subr.mxu0 %v1301
        %2303 = vmatpush1.msra.mxu0 %v1300
        %2304 = vmatprep.subr.mxu0 %v1307
        %2305 = vmatpush1.msra.mxu0 %v1306
        %2306 = vmatprep.subr.mxu0 %v1313
        %2307 = vmatpush1.msra.mxu0 %v1312
        %2308 = vmatprep.subr.mxu0 %v1319
        %2309 = vmatpush1.msra.mxu0 %v1318
        %2310 = vmatprep.subr.mxu0 %v1325
        %2311 = vmatpush1.msra.mxu0 %v1324
        %2312 = vmatprep.subr.mxu0 %v1331
        %2313 = vmatpush1.msra.mxu0 %v1330
        %2314 = vmatprep.subr.mxu0 %v1337
        %2315 = vmatpush1.msra.mxu0 %v1336
        %2316 = vmatprep.subr.mxu0 %v1343
        %2317 = vmatpush1.msra.mxu0 %v1342
        %2318 = vmatprep.subr.mxu0 %v1349
        %2319 = vmatpush1.msra.mxu0 %v1348
        %2320 = vmatprep.subr.mxu0 %v1355
        %2321 = vmatpush1.msra.mxu0 %v1354
        %2322 = vmatprep.subr.mxu0 %v1361
        %2323 = vmatpush1.msra.mxu0 %v1360
        %2324 = vmatprep.mubr.f32.mxu0 %v1043
        %2325 = vmatmul.mubr.f32.gmra.mrb[0].mxu0 %v1042
        %v2326 = vpop.f32.mrb[0].mxu0
        %v2327 = vadd.f32 0.0, %v2326
        %v2328 = vpop.f32.mrb[0].mxu0
        %v2329 = vadd.f32 0.0, %v2328
        %2330 = vmatprep.mubr.f32.mxu0 %v1045
        %2331 = vmatmul.mubr.f32.gmra.mrb[0].mxu0 %v1044
        %v2332 = vpop.f32.mrb[0].mxu0
        %v2333 = vadd.f32 0.0, %v2332
        %v2334 = vpop.f32.mrb[0].mxu0
        %v2335 = vadd.f32 0.0, %v2334
        %2336 = vmatprep.mubr.f32.mxu0 %v1047
        %2337 = vmatmul.mubr.f32.gmra.mrb[0].mxu0 %v1046
        %v2338 = vpop.f32.mrb[0].mxu0
        %v2339 = vadd.f32 0.0, %v2338
        %v2340 = vpop.f32.mrb[0].mxu0
        %v2341 = vadd.f32 0.0, %v2340
        %2342 = vmatprep.mubr.f32.mxu0 %v1049
        %2343 = vmatmul.mubr.f32.gmra.mrb[0].mxu0 %v1048
        %v2344 = vpop.f32.mrb[0].mxu0
        %v2345 = vadd.f32 0.0, %v2344
        %v2346 = vpop.f32.mrb[0].mxu0
        %v2347 = vadd.f32 0.0, %v2346
        %2348 = vmatprep.mubr.f32.mxu0 %v1051
        %2349 = vmatmul.mubr.f32.gmra.mrb[0].mxu0 %v1050
        %v2350 = vpop.f32.mrb[0].mxu0
        %v2351 = vadd.f32 0.0, %v2350
        %v2352 = vpop.f32.mrb[0].mxu0
        %v2353 = vadd.f32 0.0, %v2352
        %2354 = vmatprep.mubr.f32.mxu0 %v1053
        %2355 = vmatmul.mubr.f32.gmra.mrb[0].mxu0 %v1052
        %v2356 = vpop.f32.mrb[0].mxu0
        %v2357 = vadd.f32 0.0, %v2356
        %v2358 = vpop.f32.mrb[0].mxu0
        %v2359 = vadd.f32 0.0, %v2358
        %2360 = vmatprep.mubr.f32.mxu0 %v1055
        %2361 = vmatmul.mubr.f32.gmra.mrb[0].mxu0 %v1054
        %v2362 = vpop.f32.mrb[0].mxu0
        %v2363 = vadd.f32 0.0, %v2362
        %v2364 = vpop.f32.mrb[0].mxu0
        %v2365 = vadd.f32 0.0, %v2364
        %2366 = vmatprep.mubr.f32.mxu0 %v1057
        %2367 = vmatmul.mubr.f32.gmra.mrb[0].mxu0 %v1056
        %v2368 = vpop.f32.mrb[0].mxu0
        %v2369 = vadd.f32 0.0, %v2368
        %v2370 = vpop.f32.mrb[0].mxu0
        %v2371 = vadd.f32 0.0, %v2370
        %2372 = vmatprep.mubr.f32.mxu0 %v1059
        %2373 = vmatmul.mubr.f32.gmra.mrb[0].mxu0 %v1058
        %v2374 = vpop.f32.mrb[0].mxu0
        %v2375 = vadd.f32 0.0, %v2374
        %v2376 = vpop.f32.mrb[0].mxu0
        %v2377 = vadd.f32 0.0, %v2376
        %2378 = vmatprep.mubr.f32.mxu0 %v1061
        %2379 = vmatmul.mubr.f32.gmra.mrb[0].mxu0 %v1060
        %v2380 = vpop.f32.mrb[0].mxu0
        %v2381 = vadd.f32 0.0, %v2380
        %v2382 = vpop.f32.mrb[0].mxu0
        %v2383 = vadd.f32 0.0, %v2382
        %2384 = vmatprep.mubr.f32.mxu0 %v1063
        %2385 = vmatmul.mubr.f32.gmra.mrb[0].mxu0 %v1062
        %v2386 = vpop.f32.mrb[0].mxu0
        %v2387 = vadd.f32 0.0, %v2386
        %v2388 = vpop.f32.mrb[0].mxu0
        %v2389 = vadd.f32 0.0, %v2388
        %2390 = vmatprep.mubr.f32.mxu0 %v1065
        %2391 = vmatmul.mubr.f32.gmra.mrb[0].mxu0 %v1064
        %v2392 = vpop.f32.mrb[0].mxu0
        %v2393 = vadd.f32 0.0, %v2392
        %v2394 = vpop.f32.mrb[0].mxu0
        %v2395 = vadd.f32 0.0, %v2394
        %2396 = vmatprep.mubr.f32.mxu0 %v1067
        %2397 = vmatmul.mubr.f32.gmra.mrb[0].mxu0 %v1066
        %v2398 = vpop.f32.mrb[0].mxu0
        %v2399 = vadd.f32 0.0, %v2398
        %v2400 = vpop.f32.mrb[0].mxu0
        %v2401 = vadd.f32 0.0, %v2400
        %2402 = vmatprep.mubr.f32.mxu0 %v1069
        %2403 = vmatmul.mubr.f32.gmra.mrb[0].mxu0 %v1068
        %v2404 = vpop.f32.mrb[0].mxu0
        %v2405 = vadd.f32 0.0, %v2404
        %v2406 = vpop.f32.mrb[0].mxu0
        %v2407 = vadd.f32 0.0, %v2406
        %2408 = vmatprep.mubr.f32.mxu0 %v1071
        %2409 = vmatmul.mubr.f32.gmra.mrb[0].mxu0 %v1070
        %v2410 = vpop.f32.mrb[0].mxu0
        %v2411 = vadd.f32 0.0, %v2410
        %v2412 = vpop.f32.mrb[0].mxu0
        %v2413 = vadd.f32 0.0, %v2412
        %2414 = vmatprep.mubr.f32.mxu0 %v1073
        %2415 = vmatmul.mubr.f32.gmra.mrb[0].mxu0 %v1072
        %v2416 = vpop.f32.mrb[0].mxu0
        %v2417 = vadd.f32 0.0, %v2416
        %v2418 = vpop.f32.mrb[0].mxu0
        %v2419 = vadd.f32 0.0, %v2418
        %2420 = vmatprep.mubr.f32.mxu0 %v1075
        %2421 = vmatmul.mubr.f32.gmra.mrb[0].mxu0 %v1074
        %v2422 = vpop.f32.mrb[0].mxu0
        %v2423 = vadd.f32 0.0, %v2422
        %v2424 = vpop.f32.mrb[0].mxu0
        %v2425 = vadd.f32 0.0, %v2424
        %2426 = vmatprep.mubr.f32.mxu0 %v1077
        %2427 = vmatmul.mubr.f32.gmra.mrb[0].mxu0 %v1076
        %v2428 = vpop.f32.mrb[0].mxu0
        %v2429 = vadd.f32 0.0, %v2428
        %v2430 = vpop.f32.mrb[0].mxu0
        %v2431 = vadd.f32 0.0, %v2430
        %2432 = vmatprep.mubr.f32.mxu0 %v1079
        %2433 = vmatmul.mubr.f32.gmra.mrb[0].mxu0 %v1078
        %v2434 = vpop.f32.mrb[0].mxu0
        %v2435 = vadd.f32 0.0, %v2434
        %v2436 = vpop.f32.mrb[0].mxu0
        %v2437 = vadd.f32 0.0, %v2436
        %2438 = vmatprep.mubr.f32.mxu0 %v1081
        %2439 = vmatmul.mubr.f32.gmra.mrb[0].mxu0 %v1080
        %v2440 = vpop.f32.mrb[0].mxu0
        %v2441 = vadd.f32 0.0, %v2440
        %v2442 = vpop.f32.mrb[0].mxu0
        %v2443 = vadd.f32 0.0, %v2442
        %2444 = vmatprep.mubr.f32.mxu0 %v1083
        %2445 = vmatmul.mubr.f32.gmra.mrb[0].mxu0 %v1082
        %v2446 = vpop.f32.mrb[0].mxu0
        %v2447 = vadd.f32 0.0, %v2446
        %v2448 = vpop.f32.mrb[0].mxu0
        %v2449 = vadd.f32 0.0, %v2448
        %2450 = vmatprep.mubr.f32.mxu0 %v1085
        %2451 = vmatmul.mubr.f32.gmra.mrb[0].mxu0 %v1084
        %v2452 = vpop.f32.mrb[0].mxu0
        %v2453 = vadd.f32 0.0, %v2452
        %v2454 = vpop.f32.mrb[0].mxu0
        %v2455 = vadd.f32 0.0, %v2454
        %2456 = vmatprep.mubr.f32.mxu0 %v1087
        %2457 = vmatmul.mubr.f32.gmra.mrb[0].mxu0 %v1086
        %v2458 = vpop.f32.mrb[0].mxu0
        %v2459 = vadd.f32 0.0, %v2458
        %v2460 = vpop.f32.mrb[0].mxu0
        %v2461 = vadd.f32 0.0, %v2460
        %2462 = vmatprep.mubr.f32.mxu0 %v1089
        %2463 = vmatmul.mubr.f32.gmra.mrb[0].mxu0 %v1088
        %v2464 = vpop.f32.mrb[0].mxu0
        %v2465 = vadd.f32 0.0, %v2464
        %v2466 = vpop.f32.mrb[0].mxu0
        %v2467 = vadd.f32 0.0, %v2466
        %2468 = vmatprep.mubr.f32.mxu0 %v1091
        %2469 = vmatmul.mubr.f32.gmra.mrb[0].mxu0 %v1090
        %v2470 = vpop.f32.mrb[0].mxu0
        %v2471 = vadd.f32 0.0, %v2470
        %v2472 = vpop.f32.mrb[0].mxu0
        %v2473 = vadd.f32 0.0, %v2472
        %2474 = vmatprep.mubr.f32.mxu0 %v1093
        %2475 = vmatmul.mubr.f32.gmra.mrb[0].mxu0 %v1092
        %v2476 = vpop.f32.mrb[0].mxu0
        %v2477 = vadd.f32 0.0, %v2476
        %v2478 = vpop.f32.mrb[0].mxu0
        %v2479 = vadd.f32 0.0, %v2478
        %2480 = vmatprep.mubr.f32.mxu0 %v1095
        %2481 = vmatmul.mubr.f32.gmra.mrb[0].mxu0 %v1094
        %v2482 = vpop.f32.mrb[0].mxu0
        %v2483 = vadd.f32 0.0, %v2482
        %v2484 = vpop.f32.mrb[0].mxu0
        %v2485 = vadd.f32 0.0, %v2484
        %2486 = vmatprep.mubr.f32.mxu0 %v1097
        %2487 = vmatmul.mubr.f32.gmra.mrb[0].mxu0 %v1096
        %v2488 = vpop.f32.mrb[0].mxu0
        %v2489 = vadd.f32 0.0, %v2488
        %v2490 = vpop.f32.mrb[0].mxu0
        %v2491 = vadd.f32 0.0, %v2490
        %2492 = vmatprep.mubr.f32.mxu0 %v1099
        %2493 = vmatmul.mubr.f32.gmra.mrb[0].mxu0 %v1098
        %v2494 = vpop.f32.mrb[0].mxu0
        %v2495 = vadd.f32 0.0, %v2494
        %v2496 = vpop.f32.mrb[0].mxu0
        %v2497 = vadd.f32 0.0, %v2496
        %2498 = vmatprep.mubr.f32.mxu0 %v1101
        %2499 = vmatmul.mubr.f32.gmra.mrb[0].mxu0 %v1100
        %v2500 = vpop.f32.mrb[0].mxu0
        %v2501 = vadd.f32 0.0, %v2500
        %v2502 = vpop.f32.mrb[0].mxu0
        %v2503 = vadd.f32 0.0, %v2502
        %2504 = vmatprep.mubr.f32.mxu0 %v1103
        %2505 = vmatmul.mubr.f32.gmra.mrb[0].mxu0 %v1102
        %v2506 = vpop.f32.mrb[0].mxu0
        %v2507 = vadd.f32 0.0, %v2506
        %v2508 = vpop.f32.mrb[0].mxu0
        %v2509 = vadd.f32 0.0, %v2508
        %2510 = vmatprep.mubr.f32.mxu0 %v1105
        %2511 = vmatmul.mubr.f32.gmra.mrb[0].mxu0 %v1104
        %v2512 = vpop.f32.mrb[0].mxu0
        %v2513 = vadd.f32 0.0, %v2512
        %v2514 = vpop.f32.mrb[0].mxu0
        %v2515 = vadd.f32 0.0, %v2514
        %2516 = vmatprep.mubr.f32.mxu0 %v1107
        %2517 = vmatmul.mubr.f32.gmra.mrb[0].mxu0 %v1106
        %v2518 = vpop.f32.mrb[0].mxu0
        %v2519 = vadd.f32 0.0, %v2518
        %v2520 = vpop.f32.mrb[0].mxu0
        %v2521 = vadd.f32 0.0, %v2520
        %2522 = vmatprep.mubr.f32.mxu0 %v1109
        %2523 = vmatmul.mubr.f32.gmra.mrb[0].mxu0 %v1108
        %v2524 = vpop.f32.mrb[0].mxu0
        %v2525 = vadd.f32 0.0, %v2524
        %v2526 = vpop.f32.mrb[0].mxu0
        %v2527 = vadd.f32 0.0, %v2526
        %2528 = vmatprep.mubr.f32.mxu0 %v1111
        %2529 = vmatmul.mubr.f32.gmra.mrb[0].mxu0 %v1110
        %v2530 = vpop.f32.mrb[0].mxu0
        %v2531 = vadd.f32 0.0, %v2530
        %v2532 = vpop.f32.mrb[0].mxu0
        %v2533 = vadd.f32 0.0, %v2532
        %2534 = vmatprep.mubr.f32.mxu0 %v1113
        %2535 = vmatmul.mubr.f32.gmra.mrb[0].mxu0 %v1112
        %v2536 = vpop.f32.mrb[0].mxu0
        %v2537 = vadd.f32 0.0, %v2536
        %v2538 = vpop.f32.mrb[0].mxu0
        %v2539 = vadd.f32 0.0, %v2538
        %2540 = vmatprep.mubr.f32.mxu0 %v1115
        %2541 = vmatmul.mubr.f32.gmra.mrb[0].mxu0 %v1114
        %v2542 = vpop.f32.mrb[0].mxu0
        %v2543 = vadd.f32 0.0, %v2542
        %v2544 = vpop.f32.mrb[0].mxu0
        %v2545 = vadd.f32 0.0, %v2544
        %2546 = vmatprep.mubr.f32.mxu0 %v1117
        %2547 = vmatmul.mubr.f32.gmra.mrb[0].mxu0 %v1116
        %v2548 = vpop.f32.mrb[0].mxu0
        %v2549 = vadd.f32 0.0, %v2548
        %v2550 = vpop.f32.mrb[0].mxu0
        %v2551 = vadd.f32 0.0, %v2550
        %2552 = vmatprep.mubr.f32.mxu0 %v1119
        %2553 = vmatmul.mubr.f32.gmra.mrb[0].mxu0 %v1118
        %v2554 = vpop.f32.mrb[0].mxu0
        %v2555 = vadd.f32 0.0, %v2554
        %v2556 = vpop.f32.mrb[0].mxu0
        %v2557 = vadd.f32 0.0, %v2556
        %2558 = vmatprep.mubr.f32.mxu0 %v1121
        %2559 = vmatmul.mubr.f32.gmra.mrb[0].mxu0 %v1120
        %v2560 = vpop.f32.mrb[0].mxu0
        %v2561 = vadd.f32 0.0, %v2560
        %v2562 = vpop.f32.mrb[0].mxu0
        %v2563 = vadd.f32 0.0, %v2562
        %2564 = vmatprep.mubr.f32.mxu0 %v1123
        %2565 = vmatmul.mubr.f32.gmra.mrb[0].mxu0 %v1122
        %v2566 = vpop.f32.mrb[0].mxu0
        %v2567 = vadd.f32 0.0, %v2566
        %v2568 = vpop.f32.mrb[0].mxu0
        %v2569 = vadd.f32 0.0, %v2568
        %2570 = vmatprep.mubr.f32.mxu0 %v1125
        %2571 = vmatmul.mubr.f32.gmra.mrb[0].mxu0 %v1124
        %v2572 = vpop.f32.mrb[0].mxu0
        %v2573 = vadd.f32 0.0, %v2572
        %v2574 = vpop.f32.mrb[0].mxu0
        %v2575 = vadd.f32 0.0, %v2574
        %2576 = vmatprep.mubr.f32.mxu0 %v1127
        %2577 = vmatmul.mubr.f32.gmra.mrb[0].mxu0 %v1126
        %v2578 = vpop.f32.mrb[0].mxu0
        %v2579 = vadd.f32 0.0, %v2578
        %v2580 = vpop.f32.mrb[0].mxu0
        %v2581 = vadd.f32 0.0, %v2580
        %2582 = vmatprep.mubr.f32.mxu0 %v1129
        %2583 = vmatmul.mubr.f32.gmra.mrb[0].mxu0 %v1128
        %v2584 = vpop.f32.mrb[0].mxu0
        %v2585 = vadd.f32 0.0, %v2584
        %v2586 = vpop.f32.mrb[0].mxu0
        %v2587 = vadd.f32 0.0, %v2586
        %2588 = vmatprep.mubr.f32.mxu0 %v1131
        %2589 = vmatmul.mubr.f32.gmra.mrb[0].mxu0 %v1130
        %v2590 = vpop.f32.mrb[0].mxu0
        %v2591 = vadd.f32 0.0, %v2590
        %v2592 = vpop.f32.mrb[0].mxu0
        %v2593 = vadd.f32 0.0, %v2592
        %2594 = vmatprep.mubr.f32.mxu0 %v1133
        %2595 = vmatmul.mubr.f32.gmra.mrb[0].mxu0 %v1132
        %v2596 = vpop.f32.mrb[0].mxu0
        %v2597 = vadd.f32 0.0, %v2596
        %v2598 = vpop.f32.mrb[0].mxu0
        %v2599 = vadd.f32 0.0, %v2598
        %2600 = vmatprep.mubr.f32.mxu0 %v1135
        %2601 = vmatmul.mubr.f32.gmra.mrb[0].mxu0 %v1134
        %v2602 = vpop.f32.mrb[0].mxu0
        %v2603 = vadd.f32 0.0, %v2602
        %v2604 = vpop.f32.mrb[0].mxu0
        %v2605 = vadd.f32 0.0, %v2604
        %2606 = vmatprep.mubr.f32.mxu0 %v1137
        %2607 = vmatmul.mubr.f32.gmra.mrb[0].mxu0 %v1136
        %v2608 = vpop.f32.mrb[0].mxu0
        %v2609 = vadd.f32 0.0, %v2608
        %v2610 = vpop.f32.mrb[0].mxu0
        %v2611 = vadd.f32 0.0, %v2610
        %2612 = vmatprep.mubr.f32.mxu0 %v1139
        %2613 = vmatmul.mubr.f32.gmra.mrb[0].mxu0 %v1138
        %v2614 = vpop.f32.mrb[0].mxu0
        %v2615 = vadd.f32 0.0, %v2614
        %v2616 = vpop.f32.mrb[0].mxu0
        %v2617 = vadd.f32 0.0, %v2616
        %2618 = vmatprep.mubr.f32.mxu0 %v1141
        %2619 = vmatmul.mubr.f32.gmra.mrb[0].mxu0 %v1140
        %v2620 = vpop.f32.mrb[0].mxu0
        %v2621 = vadd.f32 0.0, %v2620
        %v2622 = vpop.f32.mrb[0].mxu0
        %v2623 = vadd.f32 0.0, %v2622
        %2624 = vmatprep.mubr.f32.mxu0 %v1143
        %2625 = vmatmul.mubr.f32.gmra.mrb[0].mxu0 %v1142
        %v2626 = vpop.f32.mrb[0].mxu0
        %v2627 = vadd.f32 0.0, %v2626
        %v2628 = vpop.f32.mrb[0].mxu0
        %v2629 = vadd.f32 0.0, %v2628
        %2630 = vmatprep.mubr.f32.mxu0 %v1145
        %2631 = vmatmul.mubr.f32.gmra.mrb[0].mxu0 %v1144
        %v2632 = vpop.f32.mrb[0].mxu0
        %v2633 = vadd.f32 0.0, %v2632
        %v2634 = vpop.f32.mrb[0].mxu0
        %v2635 = vadd.f32 0.0, %v2634
        %2636 = vmatprep.mubr.f32.mxu0 %v1147
        %2637 = vmatmul.mubr.f32.gmra.mrb[0].mxu0 %v1146
        %v2638 = vpop.f32.mrb[0].mxu0
        %v2639 = vadd.f32 0.0, %v2638
        %v2640 = vpop.f32.mrb[0].mxu0
        %v2641 = vadd.f32 0.0, %v2640
        %2642 = vmatprep.mubr.f32.mxu0 %v1149
        %2643 = vmatmul.mubr.f32.gmra.mrb[0].mxu0 %v1148
        %v2644 = vpop.f32.mrb[0].mxu0
        %v2645 = vadd.f32 0.0, %v2644
        %v2646 = vpop.f32.mrb[0].mxu0
        %v2647 = vadd.f32 0.0, %v2646
        %2648 = vmatprep.mubr.f32.mxu0 %v1151
        %2649 = vmatmul.mubr.f32.gmra.mrb[0].mxu0 %v1150
        %v2650 = vpop.f32.mrb[0].mxu0
        %v2651 = vadd.f32 0.0, %v2650
        %v2652 = vpop.f32.mrb[0].mxu0
        %v2653 = vadd.f32 0.0, %v2652
        %2654 = vmatprep.mubr.f32.mxu0 %v1153
        %2655 = vmatmul.mubr.f32.gmra.mrb[0].mxu0 %v1152
        %v2656 = vpop.f32.mrb[0].mxu0
        %v2657 = vadd.f32 0.0, %v2656
        %v2658 = vpop.f32.mrb[0].mxu0
        %v2659 = vadd.f32 0.0, %v2658
        %2660 = vmatprep.mubr.f32.mxu0 %v1155
        %2661 = vmatmul.mubr.f32.gmra.mrb[0].mxu0 %v1154
        %v2662 = vpop.f32.mrb[0].mxu0
        %v2663 = vadd.f32 0.0, %v2662
        %v2664 = vpop.f32.mrb[0].mxu0
        %v2665 = vadd.f32 0.0, %v2664
        %2666 = vmatprep.mubr.f32.mxu0 %v1157
        %2667 = vmatmul.mubr.f32.gmra.mrb[0].mxu0 %v1156
        %v2668 = vpop.f32.mrb[0].mxu0
        %v2669 = vadd.f32 0.0, %v2668
        %v2670 = vpop.f32.mrb[0].mxu0
        %v2671 = vadd.f32 0.0, %v2670
        %2672 = vmatprep.mubr.f32.mxu0 %v1159
        %2673 = vmatmul.mubr.f32.gmra.mrb[0].mxu0 %v1158
        %v2674 = vpop.f32.mrb[0].mxu0
        %v2675 = vadd.f32 0.0, %v2674
        %v2676 = vpop.f32.mrb[0].mxu0
        %v2677 = vadd.f32 0.0, %v2676
        %2678 = vmatprep.mubr.f32.mxu0 %v1161
        %2679 = vmatmul.mubr.f32.gmra.mrb[0].mxu0 %v1160
        %v2680 = vpop.f32.mrb[0].mxu0
        %v2681 = vadd.f32 0.0, %v2680
        %v2682 = vpop.f32.mrb[0].mxu0
        %v2683 = vadd.f32 0.0, %v2682
        %2684 = vmatprep.mubr.f32.mxu0 %v1163
        %2685 = vmatmul.mubr.f32.gmra.mrb[0].mxu0 %v1162
        %v2686 = vpop.f32.mrb[0].mxu0
        %v2687 = vadd.f32 0.0, %v2686
        %v2688 = vpop.f32.mrb[0].mxu0
        %v2689 = vadd.f32 0.0, %v2688
        %2690 = vmatprep.mubr.f32.mxu0 %v1165
        %2691 = vmatmul.mubr.f32.gmra.mrb[0].mxu0 %v1164
        %v2692 = vpop.f32.mrb[0].mxu0
        %v2693 = vadd.f32 0.0, %v2692
        %v2694 = vpop.f32.mrb[0].mxu0
        %v2695 = vadd.f32 0.0, %v2694
        %2696 = vmatprep.mubr.f32.mxu0 %v1167
        %2697 = vmatmul.mubr.f32.gmra.mrb[0].mxu0 %v1166
        %v2698 = vpop.f32.mrb[0].mxu0
        %v2699 = vadd.f32 0.0, %v2698
        %v2700 = vpop.f32.mrb[0].mxu0
        %v2701 = vadd.f32 0.0, %v2700
        %2702 = vmatprep.mubr.f32.mxu0 %v1169
        %2703 = vmatmul.mubr.f32.gmra.mrb[0].mxu0 %v1168
        %v2704 = vpop.f32.mrb[0].mxu0
        %v2705 = vadd.f32 0.0, %v2704
        %v2706 = vpop.f32.mrb[0].mxu0
        %v2707 = vadd.f32 0.0, %v2706
        %2708 = vdwg.mxu0
        %v2709 = vadd.f32 %v658, %v1429
        %v2710 = vadd.f32 %v659, %v1431
        %v2711 = vadd.f32 %v660, %v1878
        %v2712 = vadd.f32 %v661, %v1880
        %v2713 = vadd.f32 %v662, %v2327
        %v2714 = vadd.f32 %v663, %v2329
        %v2715 = vadd.f32 %v664, %v1435
        %v2716 = vadd.f32 %v665, %v1437
        %v2717 = vadd.f32 %v666, %v1884
        %v2718 = vadd.f32 %v667, %v1886
        %v2719 = vadd.f32 %v668, %v2333
        %v2720 = vadd.f32 %v669, %v2335
        %v2721 = vadd.f32 %v670, %v1441
        %v2722 = vadd.f32 %v671, %v1443
        %v2723 = vadd.f32 %v672, %v1890
        %v2724 = vadd.f32 %v673, %v1892
        %v2725 = vadd.f32 %v674, %v2339
        %v2726 = vadd.f32 %v675, %v2341
        %v2727 = vadd.f32 %v676, %v1447
        %v2728 = vadd.f32 %v677, %v1449
        %v2729 = vadd.f32 %v678, %v1896
        %v2730 = vadd.f32 %v679, %v1898
        %v2731 = vadd.f32 %v680, %v2345
        %v2732 = vadd.f32 %v681, %v2347
        %v2733 = vadd.f32 %v682, %v1453
        %v2734 = vadd.f32 %v683, %v1455
        %v2735 = vadd.f32 %v684, %v1902
        %v2736 = vadd.f32 %v685, %v1904
        %v2737 = vadd.f32 %v686, %v2351
        %v2738 = vadd.f32 %v687, %v2353
        %v2739 = vadd.f32 %v688, %v1459
        %v2740 = vadd.f32 %v689, %v1461
        %v2741 = vadd.f32 %v690, %v1908
        %v2742 = vadd.f32 %v691, %v1910
        %v2743 = vadd.f32 %v692, %v2357
        %v2744 = vadd.f32 %v693, %v2359
        %v2745 = vadd.f32 %v694, %v1465
        %v2746 = vadd.f32 %v695, %v1467
        %v2747 = vadd.f32 %v696, %v1914
        %v2748 = vadd.f32 %v697, %v1916
        %v2749 = vadd.f32 %v698, %v2363
        %v2750 = vadd.f32 %v699, %v2365
        %v2751 = vadd.f32 %v700, %v1471
        %v2752 = vadd.f32 %v701, %v1473
        %v2753 = vadd.f32 %v702, %v1920
        %v2754 = vadd.f32 %v703, %v1922
        %v2755 = vadd.f32 %v704, %v2369
        %v2756 = vadd.f32 %v705, %v2371
        %v2757 = vadd.f32 %v706, %v1477
        %v2758 = vadd.f32 %v707, %v1479
        %v2759 = vadd.f32 %v708, %v1926
        %v2760 = vadd.f32 %v709, %v1928
        %v2761 = vadd.f32 %v710, %v2375
        %v2762 = vadd.f32 %v711, %v2377
        %v2763 = vadd.f32 %v712, %v1483
        %v2764 = vadd.f32 %v713, %v1485
        %v2765 = vadd.f32 %v714, %v1932
        %v2766 = vadd.f32 %v715, %v1934
        %v2767 = vadd.f32 %v716, %v2381
        %v2768 = vadd.f32 %v717, %v2383
        %v2769 = vadd.f32 %v718, %v1489
        %v2770 = vadd.f32 %v719, %v1491
        %v2771 = vadd.f32 %v720, %v1938
        %v2772 = vadd.f32 %v721, %v1940
        %v2773 = vadd.f32 %v722, %v2387
        %v2774 = vadd.f32 %v723, %v2389
        %v2775 = vadd.f32 %v724, %v1495
        %v2776 = vadd.f32 %v725, %v1497
        %v2777 = vadd.f32 %v726, %v1944
        %v2778 = vadd.f32 %v727, %v1946
        %v2779 = vadd.f32 %v728, %v2393
        %v2780 = vadd.f32 %v729, %v2395
        %v2781 = vadd.f32 %v730, %v1501
        %v2782 = vadd.f32 %v731, %v1503
        %v2783 = vadd.f32 %v732, %v1950
        %v2784 = vadd.f32 %v733, %v1952
        %v2785 = vadd.f32 %v734, %v2399
        %v2786 = vadd.f32 %v735, %v2401
        %v2787 = vadd.f32 %v736, %v1507
        %v2788 = vadd.f32 %v737, %v1509
        %v2789 = vadd.f32 %v738, %v1956
        %v2790 = vadd.f32 %v739, %v1958
        %v2791 = vadd.f32 %v740, %v2405
        %v2792 = vadd.f32 %v741, %v2407
        %v2793 = vadd.f32 %v742, %v1513
        %v2794 = vadd.f32 %v743, %v1515
        %v2795 = vadd.f32 %v744, %v1962
        %v2796 = vadd.f32 %v745, %v1964
        %v2797 = vadd.f32 %v746, %v2411
        %v2798 = vadd.f32 %v747, %v2413
        %v2799 = vadd.f32 %v748, %v1519
        %v2800 = vadd.f32 %v749, %v1521
        %v2801 = vadd.f32 %v750, %v1968
        %v2802 = vadd.f32 %v751, %v1970
        %v2803 = vadd.f32 %v752, %v2417
        %v2804 = vadd.f32 %v753, %v2419
        %v2805 = vadd.f32 %v754, %v1525
        %v2806 = vadd.f32 %v755, %v1527
        %v2807 = vadd.f32 %v756, %v1974
        %v2808 = vadd.f32 %v757, %v1976
        %v2809 = vadd.f32 %v758, %v2423
        %v2810 = vadd.f32 %v759, %v2425
        %v2811 = vadd.f32 %v760, %v1531
        %v2812 = vadd.f32 %v761, %v1533
        %v2813 = vadd.f32 %v762, %v1980
        %v2814 = vadd.f32 %v763, %v1982
        %v2815 = vadd.f32 %v764, %v2429
        %v2816 = vadd.f32 %v765, %v2431
        %v2817 = vadd.f32 %v766, %v1537
        %v2818 = vadd.f32 %v767, %v1539
        %v2819 = vadd.f32 %v768, %v1986
        %v2820 = vadd.f32 %v769, %v1988
        %v2821 = vadd.f32 %v770, %v2435
        %v2822 = vadd.f32 %v771, %v2437
        %v2823 = vadd.f32 %v772, %v1543
        %v2824 = vadd.f32 %v773, %v1545
        %v2825 = vadd.f32 %v774, %v1992
        %v2826 = vadd.f32 %v775, %v1994
        %v2827 = vadd.f32 %v776, %v2441
        %v2828 = vadd.f32 %v777, %v2443
        %v2829 = vadd.f32 %v778, %v1549
        %v2830 = vadd.f32 %v779, %v1551
        %v2831 = vadd.f32 %v780, %v1998
        %v2832 = vadd.f32 %v781, %v2000
        %v2833 = vadd.f32 %v782, %v2447
        %v2834 = vadd.f32 %v783, %v2449
        %v2835 = vadd.f32 %v784, %v1555
        %v2836 = vadd.f32 %v785, %v1557
        %v2837 = vadd.f32 %v786, %v2004
        %v2838 = vadd.f32 %v787, %v2006
        %v2839 = vadd.f32 %v788, %v2453
        %v2840 = vadd.f32 %v789, %v2455
        %v2841 = vadd.f32 %v790, %v1561
        %v2842 = vadd.f32 %v791, %v1563
        %v2843 = vadd.f32 %v792, %v2010
        %v2844 = vadd.f32 %v793, %v2012
        %v2845 = vadd.f32 %v794, %v2459
        %v2846 = vadd.f32 %v795, %v2461
        %v2847 = vadd.f32 %v796, %v1567
        %v2848 = vadd.f32 %v797, %v1569
        %v2849 = vadd.f32 %v798, %v2016
        %v2850 = vadd.f32 %v799, %v2018
        %v2851 = vadd.f32 %v800, %v2465
        %v2852 = vadd.f32 %v801, %v2467
        %v2853 = vadd.f32 %v802, %v1573
        %v2854 = vadd.f32 %v803, %v1575
        %v2855 = vadd.f32 %v804, %v2022
        %v2856 = vadd.f32 %v805, %v2024
        %v2857 = vadd.f32 %v806, %v2471
        %v2858 = vadd.f32 %v807, %v2473
        %v2859 = vadd.f32 %v808, %v1579
        %v2860 = vadd.f32 %v809, %v1581
        %v2861 = vadd.f32 %v810, %v2028
        %v2862 = vadd.f32 %v811, %v2030
        %v2863 = vadd.f32 %v812, %v2477
        %v2864 = vadd.f32 %v813, %v2479
        %v2865 = vadd.f32 %v814, %v1585
        %v2866 = vadd.f32 %v815, %v1587
        %v2867 = vadd.f32 %v816, %v2034
        %v2868 = vadd.f32 %v817, %v2036
        %v2869 = vadd.f32 %v818, %v2483
        %v2870 = vadd.f32 %v819, %v2485
        %v2871 = vadd.f32 %v820, %v1591
        %v2872 = vadd.f32 %v821, %v1593
        %v2873 = vadd.f32 %v822, %v2040
        %v2874 = vadd.f32 %v823, %v2042
        %v2875 = vadd.f32 %v824, %v2489
        %v2876 = vadd.f32 %v825, %v2491
        %v2877 = vadd.f32 %v826, %v1597
        %v2878 = vadd.f32 %v827, %v1599
        %v2879 = vadd.f32 %v828, %v2046
        %v2880 = vadd.f32 %v829, %v2048
        %v2881 = vadd.f32 %v830, %v2495
        %v2882 = vadd.f32 %v831, %v2497
        %v2883 = vadd.f32 %v832, %v1603
        %v2884 = vadd.f32 %v833, %v1605
        %v2885 = vadd.f32 %v834, %v2052
        %v2886 = vadd.f32 %v835, %v2054
        %v2887 = vadd.f32 %v836, %v2501
        %v2888 = vadd.f32 %v837, %v2503
        %v2889 = vadd.f32 %v838, %v1609
        %v2890 = vadd.f32 %v839, %v1611
        %v2891 = vadd.f32 %v840, %v2058
        %v2892 = vadd.f32 %v841, %v2060
        %v2893 = vadd.f32 %v842, %v2507
        %v2894 = vadd.f32 %v843, %v2509
        %v2895 = vadd.f32 %v844, %v1615
        %v2896 = vadd.f32 %v845, %v1617
        %v2897 = vadd.f32 %v846, %v2064
        %v2898 = vadd.f32 %v847, %v2066
        %v2899 = vadd.f32 %v848, %v2513
        %v2900 = vadd.f32 %v849, %v2515
        %v2901 = vadd.f32 %v850, %v1621
        %v2902 = vadd.f32 %v851, %v1623
        %v2903 = vadd.f32 %v852, %v2070
        %v2904 = vadd.f32 %v853, %v2072
        %v2905 = vadd.f32 %v854, %v2519
        %v2906 = vadd.f32 %v855, %v2521
        %v2907 = vadd.f32 %v856, %v1627
        %v2908 = vadd.f32 %v857, %v1629
        %v2909 = vadd.f32 %v858, %v2076
        %v2910 = vadd.f32 %v859, %v2078
        %v2911 = vadd.f32 %v860, %v2525
        %v2912 = vadd.f32 %v861, %v2527
        %v2913 = vadd.f32 %v862, %v1633
        %v2914 = vadd.f32 %v863, %v1635
        %v2915 = vadd.f32 %v864, %v2082
        %v2916 = vadd.f32 %v865, %v2084
        %v2917 = vadd.f32 %v866, %v2531
        %v2918 = vadd.f32 %v867, %v2533
        %v2919 = vadd.f32 %v868, %v1639
        %v2920 = vadd.f32 %v869, %v1641
        %v2921 = vadd.f32 %v870, %v2088
        %v2922 = vadd.f32 %v871, %v2090
        %v2923 = vadd.f32 %v872, %v2537
        %v2924 = vadd.f32 %v873, %v2539
        %v2925 = vadd.f32 %v874, %v1645
        %v2926 = vadd.f32 %v875, %v1647
        %v2927 = vadd.f32 %v876, %v2094
        %v2928 = vadd.f32 %v877, %v2096
        %v2929 = vadd.f32 %v878, %v2543
        %v2930 = vadd.f32 %v879, %v2545
        %v2931 = vadd.f32 %v880, %v1651
        %v2932 = vadd.f32 %v881, %v1653
        %v2933 = vadd.f32 %v882, %v2100
        %v2934 = vadd.f32 %v883, %v2102
        %v2935 = vadd.f32 %v884, %v2549
        %v2936 = vadd.f32 %v885, %v2551
        %v2937 = vadd.f32 %v886, %v1657
        %v2938 = vadd.f32 %v887, %v1659
        %v2939 = vadd.f32 %v888, %v2106
        %v2940 = vadd.f32 %v889, %v2108
        %v2941 = vadd.f32 %v890, %v2555
        %v2942 = vadd.f32 %v891, %v2557
        %v2943 = vadd.f32 %v892, %v1663
        %v2944 = vadd.f32 %v893, %v1665
        %v2945 = vadd.f32 %v894, %v2112
        %v2946 = vadd.f32 %v895, %v2114
        %v2947 = vadd.f32 %v896, %v2561
        %v2948 = vadd.f32 %v897, %v2563
        %v2949 = vadd.f32 %v898, %v1669
        %v2950 = vadd.f32 %v899, %v1671
        %v2951 = vadd.f32 %v900, %v2118
        %v2952 = vadd.f32 %v901, %v2120
        %v2953 = vadd.f32 %v902, %v2567
        %v2954 = vadd.f32 %v903, %v2569
        %v2955 = vadd.f32 %v904, %v1675
        %v2956 = vadd.f32 %v905, %v1677
        %v2957 = vadd.f32 %v906, %v2124
        %v2958 = vadd.f32 %v907, %v2126
        %v2959 = vadd.f32 %v908, %v2573
        %v2960 = vadd.f32 %v909, %v2575
        %v2961 = vadd.f32 %v910, %v1681
        %v2962 = vadd.f32 %v911, %v1683
        %v2963 = vadd.f32 %v912, %v2130
        %v2964 = vadd.f32 %v913, %v2132
        %v2965 = vadd.f32 %v914, %v2579
        %v2966 = vadd.f32 %v915, %v2581
        %v2967 = vadd.f32 %v916, %v1687
        %v2968 = vadd.f32 %v917, %v1689
        %v2969 = vadd.f32 %v918, %v2136
        %v2970 = vadd.f32 %v919, %v2138
        %v2971 = vadd.f32 %v920, %v2585
        %v2972 = vadd.f32 %v921, %v2587
        %v2973 = vadd.f32 %v922, %v1693
        %v2974 = vadd.f32 %v923, %v1695
        %v2975 = vadd.f32 %v924, %v2142
        %v2976 = vadd.f32 %v925, %v2144
        %v2977 = vadd.f32 %v926, %v2591
        %v2978 = vadd.f32 %v927, %v2593
        %v2979 = vadd.f32 %v928, %v1699
        %v2980 = vadd.f32 %v929, %v1701
        %v2981 = vadd.f32 %v930, %v2148
        %v2982 = vadd.f32 %v931, %v2150
        %v2983 = vadd.f32 %v932, %v2597
        %v2984 = vadd.f32 %v933, %v2599
        %v2985 = vadd.f32 %v934, %v1705
        %v2986 = vadd.f32 %v935, %v1707
        %v2987 = vadd.f32 %v936, %v2154
        %v2988 = vadd.f32 %v937, %v2156
        %v2989 = vadd.f32 %v938, %v2603
        %v2990 = vadd.f32 %v939, %v2605
        %v2991 = vadd.f32 %v940, %v1711
        %v2992 = vadd.f32 %v941, %v1713
        %v2993 = vadd.f32 %v942, %v2160
        %v2994 = vadd.f32 %v943, %v2162
        %v2995 = vadd.f32 %v944, %v2609
        %v2996 = vadd.f32 %v945, %v2611
        %v2997 = vadd.f32 %v946, %v1717
        %v2998 = vadd.f32 %v947, %v1719
        %v2999 = vadd.f32 %v948, %v2166
        %v3000 = vadd.f32 %v949, %v2168
        %v3001 = vadd.f32 %v950, %v2615
        %v3002 = vadd.f32 %v951, %v2617
        %v3003 = vadd.f32 %v952, %v1723
        %v3004 = vadd.f32 %v953, %v1725
        %v3005 = vadd.f32 %v954, %v2172
        %v3006 = vadd.f32 %v955, %v2174
        %v3007 = vadd.f32 %v956, %v2621
        %v3008 = vadd.f32 %v957, %v2623
        %v3009 = vadd.f32 %v958, %v1729
        %v3010 = vadd.f32 %v959, %v1731
        %v3011 = vadd.f32 %v960, %v2178
        %v3012 = vadd.f32 %v961, %v2180
        %v3013 = vadd.f32 %v962, %v2627
        %v3014 = vadd.f32 %v963, %v2629
        %v3015 = vadd.f32 %v964, %v1735
        %v3016 = vadd.f32 %v965, %v1737
        %v3017 = vadd.f32 %v966, %v2184
        %v3018 = vadd.f32 %v967, %v2186
        %v3019 = vadd.f32 %v968, %v2633
        %v3020 = vadd.f32 %v969, %v2635
        %v3021 = vadd.f32 %v970, %v1741
        %v3022 = vadd.f32 %v971, %v1743
        %v3023 = vadd.f32 %v972, %v2190
        %v3024 = vadd.f32 %v973, %v2192
        %v3025 = vadd.f32 %v974, %v2639
        %v3026 = vadd.f32 %v975, %v2641
        %v3027 = vadd.f32 %v976, %v1747
        %v3028 = vadd.f32 %v977, %v1749
        %v3029 = vadd.f32 %v978, %v2196
        %v3030 = vadd.f32 %v979, %v2198
        %v3031 = vadd.f32 %v980, %v2645
        %v3032 = vadd.f32 %v981, %v2647
        %v3033 = vadd.f32 %v982, %v1753
        %v3034 = vadd.f32 %v983, %v1755
        %v3035 = vadd.f32 %v984, %v2202
        %v3036 = vadd.f32 %v985, %v2204
        %v3037 = vadd.f32 %v986, %v2651
        %v3038 = vadd.f32 %v987, %v2653
        %v3039 = vadd.f32 %v988, %v1759
        %v3040 = vadd.f32 %v989, %v1761
        %v3041 = vadd.f32 %v990, %v2208
        %v3042 = vadd.f32 %v991, %v2210
        %v3043 = vadd.f32 %v992, %v2657
        %v3044 = vadd.f32 %v993, %v2659
        %v3045 = vadd.f32 %v994, %v1765
        %v3046 = vadd.f32 %v995, %v1767
        %v3047 = vadd.f32 %v996, %v2214
        %v3048 = vadd.f32 %v997, %v2216
        %v3049 = vadd.f32 %v998, %v2663
        %v3050 = vadd.f32 %v999, %v2665
        %v3051 = vadd.f32 %v1000, %v1771
        %v3052 = vadd.f32 %v1001, %v1773
        %v3053 = vadd.f32 %v1002, %v2220
        %v3054 = vadd.f32 %v1003, %v2222
        %v3055 = vadd.f32 %v1004, %v2669
        %v3056 = vadd.f32 %v1005, %v2671
        %v3057 = vadd.f32 %v1006, %v1777
        %v3058 = vadd.f32 %v1007, %v1779
        %v3059 = vadd.f32 %v1008, %v2226
        %v3060 = vadd.f32 %v1009, %v2228
        %v3061 = vadd.f32 %v1010, %v2675
        %v3062 = vadd.f32 %v1011, %v2677
        %v3063 = vadd.f32 %v1012, %v1783
        %v3064 = vadd.f32 %v1013, %v1785
        %v3065 = vadd.f32 %v1014, %v2232
        %v3066 = vadd.f32 %v1015, %v2234
        %v3067 = vadd.f32 %v1016, %v2681
        %v3068 = vadd.f32 %v1017, %v2683
        %v3069 = vadd.f32 %v1018, %v1789
        %v3070 = vadd.f32 %v1019, %v1791
        %v3071 = vadd.f32 %v1020, %v2238
        %v3072 = vadd.f32 %v1021, %v2240
        %v3073 = vadd.f32 %v1022, %v2687
        %v3074 = vadd.f32 %v1023, %v2689
        %v3075 = vadd.f32 %v1024, %v1795
        %v3076 = vadd.f32 %v1025, %v1797
        %v3077 = vadd.f32 %v1026, %v2244
        %v3078 = vadd.f32 %v1027, %v2246
        %v3079 = vadd.f32 %v1028, %v2693
        %v3080 = vadd.f32 %v1029, %v2695
        %v3081 = vadd.f32 %v1030, %v1801
        %v3082 = vadd.f32 %v1031, %v1803
        %v3083 = vadd.f32 %v1032, %v2250
        %v3084 = vadd.f32 %v1033, %v2252
        %v3085 = vadd.f32 %v1034, %v2699
        %v3086 = vadd.f32 %v1035, %v2701
        %v3087 = vadd.f32 %v1036, %v1807
        %v3088 = vadd.f32 %v1037, %v1809
        %v3089 = vadd.f32 %v1038, %v2256
        %v3090 = vadd.f32 %v1039, %v2258
        %v3091 = vadd.f32 %v1040, %v2705
        %v3092 = vadd.f32 %v1041, %v2707
        %3093 = vst [vmem:[#allocation2] sm:$0xff] %v2709
        %3094 = vst [vmem:[#allocation2 + $0x8] sm:$0xff] %v2710
        %3095 = vst [vmem:[#allocation2 + $0x10] sm:$0xff] %v2711
        %3096 = vst [vmem:[#allocation2 + $0x18] sm:$0xff] %v2712
        %3097 = vst [vmem:[#allocation2 + $0x20] sm:$0xff] %v2713
        %3098 = vst [vmem:[#allocation2 + $0x28] sm:$0xff] %v2714
        %3099 = vst [vmem:[#allocation2 + $0x30] sm:$0xff] %v2715
        %3100 = vst [vmem:[#allocation2 + $0x38] sm:$0xff] %v2716
        %3101 = vst [vmem:[#allocation2 + $0x40] sm:$0xff] %v2717
        %3102 = vst [vmem:[#allocation2 + $0x48] sm:$0xff] %v2718
        %3103 = vst [vmem:[#allocation2 + $0x50] sm:$0xff] %v2719
        %3104 = vst [vmem:[#allocation2 + $0x58] sm:$0xff] %v2720
        %3105 = vst [vmem:[#allocation2 + $0x60] sm:$0xff] %v2721
        %3106 = vst [vmem:[#allocation2 + $0x68] sm:$0xff] %v2722
        %3107 = vst [vmem:[#allocation2 + $0x70] sm:$0xff] %v2723
        %3108 = vst [vmem:[#allocation2 + $0x78] sm:$0xff] %v2724
        %3109 = vst [vmem:[#allocation2 + $0x80] sm:$0xff] %v2725
        %3110 = vst [vmem:[#allocation2 + $0x88] sm:$0xff] %v2726
        %3111 = vst [vmem:[#allocation2 + $0x90] sm:$0xff] %v2727
        %3112 = vst [vmem:[#allocation2 + $0x98] sm:$0xff] %v2728
        %3113 = vst [vmem:[#allocation2 + $0xa0] sm:$0xff] %v2729
        %3114 = vst [vmem:[#allocation2 + $0xa8] sm:$0xff] %v2730
        %3115 = vst [vmem:[#allocation2 + $0xb0] sm:$0xff] %v2731
        %3116 = vst [vmem:[#allocation2 + $0xb8] sm:$0xff] %v2732
        %3117 = vst [vmem:[#allocation2 + $0xc0] sm:$0xff] %v2733
        %3118 = vst [vmem:[#allocation2 + $0xc8] sm:$0xff] %v2734
        %3119 = vst [vmem:[#allocation2 + $0xd0] sm:$0xff] %v2735
        %3120 = vst [vmem:[#allocation2 + $0xd8] sm:$0xff] %v2736
        %3121 = vst [vmem:[#allocation2 + $0xe0] sm:$0xff] %v2737
        %3122 = vst [vmem:[#allocation2 + $0xe8] sm:$0xff] %v2738
        %3123 = vst [vmem:[#allocation2 + $0xf0] sm:$0xff] %v2739
        %3124 = vst [vmem:[#allocation2 + $0xf8] sm:$0xff] %v2740
        %3125 = vst [vmem:[#allocation2 + $0x100] sm:$0xff] %v2741
        %3126 = vst [vmem:[#allocation2 + $0x108] sm:$0xff] %v2742
        %3127 = vst [vmem:[#allocation2 + $0x110] sm:$0xff] %v2743
        %3128 = vst [vmem:[#allocation2 + $0x118] sm:$0xff] %v2744
        %3129 = vst [vmem:[#allocation2 + $0x120] sm:$0xff] %v2745
        %3130 = vst [vmem:[#allocation2 + $0x128] sm:$0xff] %v2746
        %3131 = vst [vmem:[#allocation2 + $0x130] sm:$0xff] %v2747
        %3132 = vst [vmem:[#allocation2 + $0x138] sm:$0xff] %v2748
        %3133 = vst [vmem:[#allocation2 + $0x140] sm:$0xff] %v2749
        %3134 = vst [vmem:[#allocation2 + $0x148] sm:$0xff] %v2750
        %3135 = vst [vmem:[#allocation2 + $0x150] sm:$0xff] %v2751
        %3136 = vst [vmem:[#allocation2 + $0x158] sm:$0xff] %v2752
        %3137 = vst [vmem:[#allocation2 + $0x160] sm:$0xff] %v2753
        %3138 = vst [vmem:[#allocation2 + $0x168] sm:$0xff] %v2754
        %3139 = vst [vmem:[#allocation2 + $0x170] sm:$0xff] %v2755
        %3140 = vst [vmem:[#allocation2 + $0x178] sm:$0xff] %v2756
        %3141 = vst [vmem:[#allocation2 + $0x180] sm:$0xff] %v2757
        %3142 = vst [vmem:[#allocation2 + $0x188] sm:$0xff] %v2758
        %3143 = vst [vmem:[#allocation2 + $0x190] sm:$0xff] %v2759
        %3144 = vst [vmem:[#allocation2 + $0x198] sm:$0xff] %v2760
        %3145 = vst [vmem:[#allocation2 + $0x1a0] sm:$0xff] %v2761
        %3146 = vst [vmem:[#allocation2 + $0x1a8] sm:$0xff] %v2762
        %3147 = vst [vmem:[#allocation2 + $0x1b0] sm:$0xff] %v2763
        %3148 = vst [vmem:[#allocation2 + $0x1b8] sm:$0xff] %v2764
        %3149 = vst [vmem:[#allocation2 + $0x1c0] sm:$0xff] %v2765
        %3150 = vst [vmem:[#allocation2 + $0x1c8] sm:$0xff] %v2766
        %3151 = vst [vmem:[#allocation2 + $0x1d0] sm:$0xff] %v2767
        %3152 = vst [vmem:[#allocation2 + $0x1d8] sm:$0xff] %v2768
        %3153 = vst [vmem:[#allocation2 + $0x1e0] sm:$0xff] %v2769
        %3154 = vst [vmem:[#allocation2 + $0x1e8] sm:$0xff] %v2770
        %3155 = vst [vmem:[#allocation2 + $0x1f0] sm:$0xff] %v2771
        %3156 = vst [vmem:[#allocation2 + $0x1f8] sm:$0xff] %v2772
        %3157 = vst [vmem:[#allocation2 + $0x200] sm:$0xff] %v2773
        %3158 = vst [vmem:[#allocation2 + $0x208] sm:$0xff] %v2774
        %3159 = vst [vmem:[#allocation2 + $0x210] sm:$0xff] %v2775
        %3160 = vst [vmem:[#allocation2 + $0x218] sm:$0xff] %v2776
        %3161 = vst [vmem:[#allocation2 + $0x220] sm:$0xff] %v2777
        %3162 = vst [vmem:[#allocation2 + $0x228] sm:$0xff] %v2778
        %3163 = vst [vmem:[#allocation2 + $0x230] sm:$0xff] %v2779
        %3164 = vst [vmem:[#allocation2 + $0x238] sm:$0xff] %v2780
        %3165 = vst [vmem:[#allocation2 + $0x240] sm:$0xff] %v2781
        %3166 = vst [vmem:[#allocation2 + $0x248] sm:$0xff] %v2782
        %3167 = vst [vmem:[#allocation2 + $0x250] sm:$0xff] %v2783
        %3168 = vst [vmem:[#allocation2 + $0x258] sm:$0xff] %v2784
        %3169 = vst [vmem:[#allocation2 + $0x260] sm:$0xff] %v2785
        %3170 = vst [vmem:[#allocation2 + $0x268] sm:$0xff] %v2786
        %3171 = vst [vmem:[#allocation2 + $0x270] sm:$0xff] %v2787
        %3172 = vst [vmem:[#allocation2 + $0x278] sm:$0xff] %v2788
        %3173 = vst [vmem:[#allocation2 + $0x280] sm:$0xff] %v2789
        %3174 = vst [vmem:[#allocation2 + $0x288] sm:$0xff] %v2790
        %3175 = vst [vmem:[#allocation2 + $0x290] sm:$0xff] %v2791
        %3176 = vst [vmem:[#allocation2 + $0x298] sm:$0xff] %v2792
        %3177 = vst [vmem:[#allocation2 + $0x2a0] sm:$0xff] %v2793
        %3178 = vst [vmem:[#allocation2 + $0x2a8] sm:$0xff] %v2794
        %3179 = vst [vmem:[#allocation2 + $0x2b0] sm:$0xff] %v2795
        %3180 = vst [vmem:[#allocation2 + $0x2b8] sm:$0xff] %v2796
        %3181 = vst [vmem:[#allocation2 + $0x2c0] sm:$0xff] %v2797
        %3182 = vst [vmem:[#allocation2 + $0x2c8] sm:$0xff] %v2798
        %3183 = vst [vmem:[#allocation2 + $0x2d0] sm:$0xff] %v2799
        %3184 = vst [vmem:[#allocation2 + $0x2d8] sm:$0xff] %v2800
        %3185 = vst [vmem:[#allocation2 + $0x2e0] sm:$0xff] %v2801
        %3186 = vst [vmem:[#allocation2 + $0x2e8] sm:$0xff] %v2802
        %3187 = vst [vmem:[#allocation2 + $0x2f0] sm:$0xff] %v2803
        %3188 = vst [vmem:[#allocation2 + $0x2f8] sm:$0xff] %v2804
        %3189 = vst [vmem:[#allocation2 + $0x300] sm:$0xff] %v2805
        %3190 = vst [vmem:[#allocation2 + $0x308] sm:$0xff] %v2806
        %3191 = vst [vmem:[#allocation2 + $0x310] sm:$0xff] %v2807
        %3192 = vst [vmem:[#allocation2 + $0x318] sm:$0xff] %v2808
        %3193 = vst [vmem:[#allocation2 + $0x320] sm:$0xff] %v2809
        %3194 = vst [vmem:[#allocation2 + $0x328] sm:$0xff] %v2810
        %3195 = vst [vmem:[#allocation2 + $0x330] sm:$0xff] %v2811
        %3196 = vst [vmem:[#allocation2 + $0x338] sm:$0xff] %v2812
        %3197 = vst [vmem:[#allocation2 + $0x340] sm:$0xff] %v2813
        %3198 = vst [vmem:[#allocation2 + $0x348] sm:$0xff] %v2814
        %3199 = vst [vmem:[#allocation2 + $0x350] sm:$0xff] %v2815
        %3200 = vst [vmem:[#allocation2 + $0x358] sm:$0xff] %v2816
        %3201 = vst [vmem:[#allocation2 + $0x360] sm:$0xff] %v2817
        %3202 = vst [vmem:[#allocation2 + $0x368] sm:$0xff] %v2818
        %3203 = vst [vmem:[#allocation2 + $0x370] sm:$0xff] %v2819
        %3204 = vst [vmem:[#allocation2 + $0x378] sm:$0xff] %v2820
        %3205 = vst [vmem:[#allocation2 + $0x380] sm:$0xff] %v2821
        %3206 = vst [vmem:[#allocation2 + $0x388] sm:$0xff] %v2822
        %3207 = vst [vmem:[#allocation2 + $0x390] sm:$0xff] %v2823
        %3208 = vst [vmem:[#allocation2 + $0x398] sm:$0xff] %v2824
        %3209 = vst [vmem:[#allocation2 + $0x3a0] sm:$0xff] %v2825
        %3210 = vst [vmem:[#allocation2 + $0x3a8] sm:$0xff] %v2826
        %3211 = vst [vmem:[#allocation2 + $0x3b0] sm:$0xff] %v2827
        %3212 = vst [vmem:[#allocation2 + $0x3b8] sm:$0xff] %v2828
        %3213 = vst [vmem:[#allocation2 + $0x3c0] sm:$0xff] %v2829
        %3214 = vst [vmem:[#allocation2 + $0x3c8] sm:$0xff] %v2830
        %3215 = vst [vmem:[#allocation2 + $0x3d0] sm:$0xff] %v2831
        %3216 = vst [vmem:[#allocation2 + $0x3d8] sm:$0xff] %v2832
        %3217 = vst [vmem:[#allocation2 + $0x3e0] sm:$0xff] %v2833
        %3218 = vst [vmem:[#allocation2 + $0x3e8] sm:$0xff] %v2834
        %3219 = vst [vmem:[#allocation2 + $0x3f0] sm:$0xff] %v2835
        %3220 = vst [vmem:[#allocation2 + $0x3f8] sm:$0xff] %v2836
        %3221 = vst [vmem:[#allocation2 + $0x400] sm:$0xff] %v2837
        %3222 = vst [vmem:[#allocation2 + $0x408] sm:$0xff] %v2838
        %3223 = vst [vmem:[#allocation2 + $0x410] sm:$0xff] %v2839
        %3224 = vst [vmem:[#allocation2 + $0x418] sm:$0xff] %v2840
        %3225 = vst [vmem:[#allocation2 + $0x420] sm:$0xff] %v2841
        %3226 = vst [vmem:[#allocation2 + $0x428] sm:$0xff] %v2842
        %3227 = vst [vmem:[#allocation2 + $0x430] sm:$0xff] %v2843
        %3228 = vst [vmem:[#allocation2 + $0x438] sm:$0xff] %v2844
        %3229 = vst [vmem:[#allocation2 + $0x440] sm:$0xff] %v2845
        %3230 = vst [vmem:[#allocation2 + $0x448] sm:$0xff] %v2846
        %3231 = vst [vmem:[#allocation2 + $0x450] sm:$0xff] %v2847
        %3232 = vst [vmem:[#allocation2 + $0x458] sm:$0xff] %v2848
        %3233 = vst [vmem:[#allocation2 + $0x460] sm:$0xff] %v2849
        %3234 = vst [vmem:[#allocation2 + $0x468] sm:$0xff] %v2850
        %3235 = vst [vmem:[#allocation2 + $0x470] sm:$0xff] %v2851
        %3236 = vst [vmem:[#allocation2 + $0x478] sm:$0xff] %v2852
        %3237 = vst [vmem:[#allocation2 + $0x480] sm:$0xff] %v2853
        %3238 = vst [vmem:[#allocation2 + $0x488] sm:$0xff] %v2854
        %3239 = vst [vmem:[#allocation2 + $0x490] sm:$0xff] %v2855
        %3240 = vst [vmem:[#allocation2 + $0x498] sm:$0xff] %v2856
        %3241 = vst [vmem:[#allocation2 + $0x4a0] sm:$0xff] %v2857
        %3242 = vst [vmem:[#allocation2 + $0x4a8] sm:$0xff] %v2858
        %3243 = vst [vmem:[#allocation2 + $0x4b0] sm:$0xff] %v2859
        %3244 = vst [vmem:[#allocation2 + $0x4b8] sm:$0xff] %v2860
        %3245 = vst [vmem:[#allocation2 + $0x4c0] sm:$0xff] %v2861
        %3246 = vst [vmem:[#allocation2 + $0x4c8] sm:$0xff] %v2862
        %3247 = vst [vmem:[#allocation2 + $0x4d0] sm:$0xff] %v2863
        %3248 = vst [vmem:[#allocation2 + $0x4d8] sm:$0xff] %v2864
        %3249 = vst [vmem:[#allocation2 + $0x4e0] sm:$0xff] %v2865
        %3250 = vst [vmem:[#allocation2 + $0x4e8] sm:$0xff] %v2866
        %3251 = vst [vmem:[#allocation2 + $0x4f0] sm:$0xff] %v2867
        %3252 = vst [vmem:[#allocation2 + $0x4f8] sm:$0xff] %v2868
        %3253 = vst [vmem:[#allocation2 + $0x500] sm:$0xff] %v2869
        %3254 = vst [vmem:[#allocation2 + $0x508] sm:$0xff] %v2870
        %3255 = vst [vmem:[#allocation2 + $0x510] sm:$0xff] %v2871
        %3256 = vst [vmem:[#allocation2 + $0x518] sm:$0xff] %v2872
        %3257 = vst [vmem:[#allocation2 + $0x520] sm:$0xff] %v2873
        %3258 = vst [vmem:[#allocation2 + $0x528] sm:$0xff] %v2874
        %3259 = vst [vmem:[#allocation2 + $0x530] sm:$0xff] %v2875
        %3260 = vst [vmem:[#allocation2 + $0x538] sm:$0xff] %v2876
        %3261 = vst [vmem:[#allocation2 + $0x540] sm:$0xff] %v2877
        %3262 = vst [vmem:[#allocation2 + $0x548] sm:$0xff] %v2878
        %3263 = vst [vmem:[#allocation2 + $0x550] sm:$0xff] %v2879
        %3264 = vst [vmem:[#allocation2 + $0x558] sm:$0xff] %v2880
        %3265 = vst [vmem:[#allocation2 + $0x560] sm:$0xff] %v2881
        %3266 = vst [vmem:[#allocation2 + $0x568] sm:$0xff] %v2882
        %3267 = vst [vmem:[#allocation2 + $0x570] sm:$0xff] %v2883
        %3268 = vst [vmem:[#allocation2 + $0x578] sm:$0xff] %v2884
        %3269 = vst [vmem:[#allocation2 + $0x580] sm:$0xff] %v2885
        %3270 = vst [vmem:[#allocation2 + $0x588] sm:$0xff] %v2886
        %3271 = vst [vmem:[#allocation2 + $0x590] sm:$0xff] %v2887
        %3272 = vst [vmem:[#allocation2 + $0x598] sm:$0xff] %v2888
        %3273 = vst [vmem:[#allocation2 + $0x5a0] sm:$0xff] %v2889
        %3274 = vst [vmem:[#allocation2 + $0x5a8] sm:$0xff] %v2890
        %3275 = vst [vmem:[#allocation2 + $0x5b0] sm:$0xff] %v2891
        %3276 = vst [vmem:[#allocation2 + $0x5b8] sm:$0xff] %v2892
        %3277 = vst [vmem:[#allocation2 + $0x5c0] sm:$0xff] %v2893
        %3278 = vst [vmem:[#allocation2 + $0x5c8] sm:$0xff] %v2894
        %3279 = vst [vmem:[#allocation2 + $0x5d0] sm:$0xff] %v2895
        %3280 = vst [vmem:[#allocation2 + $0x5d8] sm:$0xff] %v2896
        %3281 = vst [vmem:[#allocation2 + $0x5e0] sm:$0xff] %v2897
        %3282 = vst [vmem:[#allocation2 + $0x5e8] sm:$0xff] %v2898
        %3283 = vst [vmem:[#allocation2 + $0x5f0] sm:$0xff] %v2899
        %3284 = vst [vmem:[#allocation2 + $0x5f8] sm:$0xff] %v2900
        %3285 = vst [vmem:[#allocation2 + $0x600] sm:$0xff] %v2901
        %3286 = vst [vmem:[#allocation2 + $0x608] sm:$0xff] %v2902
        %3287 = vst [vmem:[#allocation2 + $0x610] sm:$0xff] %v2903
        %3288 = vst [vmem:[#allocation2 + $0x618] sm:$0xff] %v2904
        %3289 = vst [vmem:[#allocation2 + $0x620] sm:$0xff] %v2905
        %3290 = vst [vmem:[#allocation2 + $0x628] sm:$0xff] %v2906
        %3291 = vst [vmem:[#allocation2 + $0x630] sm:$0xff] %v2907
        %3292 = vst [vmem:[#allocation2 + $0x638] sm:$0xff] %v2908
        %3293 = vst [vmem:[#allocation2 + $0x640] sm:$0xff] %v2909
        %3294 = vst [vmem:[#allocation2 + $0x648] sm:$0xff] %v2910
        %3295 = vst [vmem:[#allocation2 + $0x650] sm:$0xff] %v2911
        %3296 = vst [vmem:[#allocation2 + $0x658] sm:$0xff] %v2912
        %3297 = vst [vmem:[#allocation2 + $0x660] sm:$0xff] %v2913
        %3298 = vst [vmem:[#allocation2 + $0x668] sm:$0xff] %v2914
        %3299 = vst [vmem:[#allocation2 + $0x670] sm:$0xff] %v2915
        %3300 = vst [vmem:[#allocation2 + $0x678] sm:$0xff] %v2916
        %3301 = vst [vmem:[#allocation2 + $0x680] sm:$0xff] %v2917
        %3302 = vst [vmem:[#allocation2 + $0x688] sm:$0xff] %v2918
        %3303 = vst [vmem:[#allocation2 + $0x690] sm:$0xff] %v2919
        %3304 = vst [vmem:[#allocation2 + $0x698] sm:$0xff] %v2920
        %3305 = vst [vmem:[#allocation2 + $0x6a0] sm:$0xff] %v2921
        %3306 = vst [vmem:[#allocation2 + $0x6a8] sm:$0xff] %v2922
        %3307 = vst [vmem:[#allocation2 + $0x6b0] sm:$0xff] %v2923
        %3308 = vst [vmem:[#allocation2 + $0x6b8] sm:$0xff] %v2924
        %3309 = vst [vmem:[#allocation2 + $0x6c0] sm:$0xff] %v2925
        %3310 = vst [vmem:[#allocation2 + $0x6c8] sm:$0xff] %v2926
        %3311 = vst [vmem:[#allocation2 + $0x6d0] sm:$0xff] %v2927
        %3312 = vst [vmem:[#allocation2 + $0x6d8] sm:$0xff] %v2928
        %3313 = vst [vmem:[#allocation2 + $0x6e0] sm:$0xff] %v2929
        %3314 = vst [vmem:[#allocation2 + $0x6e8] sm:$0xff] %v2930
        %3315 = vst [vmem:[#allocation2 + $0x6f0] sm:$0xff] %v2931
        %3316 = vst [vmem:[#allocation2 + $0x6f8] sm:$0xff] %v2932
        %3317 = vst [vmem:[#allocation2 + $0x700] sm:$0xff] %v2933
        %3318 = vst [vmem:[#allocation2 + $0x708] sm:$0xff] %v2934
        %3319 = vst [vmem:[#allocation2 + $0x710] sm:$0xff] %v2935
        %3320 = vst [vmem:[#allocation2 + $0x718] sm:$0xff] %v2936
        %3321 = vst [vmem:[#allocation2 + $0x720] sm:$0xff] %v2937
        %3322 = vst [vmem:[#allocation2 + $0x728] sm:$0xff] %v2938
        %3323 = vst [vmem:[#allocation2 + $0x730] sm:$0xff] %v2939
        %3324 = vst [vmem:[#allocation2 + $0x738] sm:$0xff] %v2940
        %3325 = vst [vmem:[#allocation2 + $0x740] sm:$0xff] %v2941
        %3326 = vst [vmem:[#allocation2 + $0x748] sm:$0xff] %v2942
        %3327 = vst [vmem:[#allocation2 + $0x750] sm:$0xff] %v2943
        %3328 = vst [vmem:[#allocation2 + $0x758] sm:$0xff] %v2944
        %3329 = vst [vmem:[#allocation2 + $0x760] sm:$0xff] %v2945
        %3330 = vst [vmem:[#allocation2 + $0x768] sm:$0xff] %v2946
        %3331 = vst [vmem:[#allocation2 + $0x770] sm:$0xff] %v2947
        %3332 = vst [vmem:[#allocation2 + $0x778] sm:$0xff] %v2948
        %3333 = vst [vmem:[#allocation2 + $0x780] sm:$0xff] %v2949
        %3334 = vst [vmem:[#allocation2 + $0x788] sm:$0xff] %v2950
        %3335 = vst [vmem:[#allocation2 + $0x790] sm:$0xff] %v2951
        %3336 = vst [vmem:[#allocation2 + $0x798] sm:$0xff] %v2952
        %3337 = vst [vmem:[#allocation2 + $0x7a0] sm:$0xff] %v2953
        %3338 = vst [vmem:[#allocation2 + $0x7a8] sm:$0xff] %v2954
        %3339 = vst [vmem:[#allocation2 + $0x7b0] sm:$0xff] %v2955
        %3340 = vst [vmem:[#allocation2 + $0x7b8] sm:$0xff] %v2956
        %3341 = vst [vmem:[#allocation2 + $0x7c0] sm:$0xff] %v2957
        %3342 = vst [vmem:[#allocation2 + $0x7c8] sm:$0xff] %v2958
        %3343 = vst [vmem:[#allocation2 + $0x7d0] sm:$0xff] %v2959
        %3344 = vst [vmem:[#allocation2 + $0x7d8] sm:$0xff] %v2960
        %3345 = vst [vmem:[#allocation2 + $0x7e0] sm:$0xff] %v2961
        %3346 = vst [vmem:[#allocation2 + $0x7e8] sm:$0xff] %v2962
        %3347 = vst [vmem:[#allocation2 + $0x7f0] sm:$0xff] %v2963
        %3348 = vst [vmem:[#allocation2 + $0x7f8] sm:$0xff] %v2964
        %3349 = vst [vmem:[#allocation2 + $0x800] sm:$0xff] %v2965
        %3350 = vst [vmem:[#allocation2 + $0x808] sm:$0xff] %v2966
        %3351 = vst [vmem:[#allocation2 + $0x810] sm:$0xff] %v2967
        %3352 = vst [vmem:[#allocation2 + $0x818] sm:$0xff] %v2968
        %3353 = vst [vmem:[#allocation2 + $0x820] sm:$0xff] %v2969
        %3354 = vst [vmem:[#allocation2 + $0x828] sm:$0xff] %v2970
        %3355 = vst [vmem:[#allocation2 + $0x830] sm:$0xff] %v2971
        %3356 = vst [vmem:[#allocation2 + $0x838] sm:$0xff] %v2972
        %3357 = vst [vmem:[#allocation2 + $0x840] sm:$0xff] %v2973
        %3358 = vst [vmem:[#allocation2 + $0x848] sm:$0xff] %v2974
        %3359 = vst [vmem:[#allocation2 + $0x850] sm:$0xff] %v2975
        %3360 = vst [vmem:[#allocation2 + $0x858] sm:$0xff] %v2976
        %3361 = vst [vmem:[#allocation2 + $0x860] sm:$0xff] %v2977
        %3362 = vst [vmem:[#allocation2 + $0x868] sm:$0xff] %v2978
        %3363 = vst [vmem:[#allocation2 + $0x870] sm:$0xff] %v2979
        %3364 = vst [vmem:[#allocation2 + $0x878] sm:$0xff] %v2980
        %3365 = vst [vmem:[#allocation2 + $0x880] sm:$0xff] %v2981
        %3366 = vst [vmem:[#allocation2 + $0x888] sm:$0xff] %v2982
        %3367 = vst [vmem:[#allocation2 + $0x890] sm:$0xff] %v2983
        %3368 = vst [vmem:[#allocation2 + $0x898] sm:$0xff] %v2984
        %3369 = vst [vmem:[#allocation2 + $0x8a0] sm:$0xff] %v2985
        %3370 = vst [vmem:[#allocation2 + $0x8a8] sm:$0xff] %v2986
        %3371 = vst [vmem:[#allocation2 + $0x8b0] sm:$0xff] %v2987
        %3372 = vst [vmem:[#allocation2 + $0x8b8] sm:$0xff] %v2988
        %3373 = vst [vmem:[#allocation2 + $0x8c0] sm:$0xff] %v2989
        %3374 = vst [vmem:[#allocation2 + $0x8c8] sm:$0xff] %v2990
        %3375 = vst [vmem:[#allocation2 + $0x8d0] sm:$0xff] %v2991
        %3376 = vst [vmem:[#allocation2 + $0x8d8] sm:$0xff] %v2992
        %3377 = vst [vmem:[#allocation2 + $0x8e0] sm:$0xff] %v2993
        %3378 = vst [vmem:[#allocation2 + $0x8e8] sm:$0xff] %v2994
        %3379 = vst [vmem:[#allocation2 + $0x8f0] sm:$0xff] %v2995
        %3380 = vst [vmem:[#allocation2 + $0x8f8] sm:$0xff] %v2996
        %3381 = vst [vmem:[#allocation2 + $0x900] sm:$0xff] %v2997
        %3382 = vst [vmem:[#allocation2 + $0x908] sm:$0xff] %v2998
        %3383 = vst [vmem:[#allocation2 + $0x910] sm:$0xff] %v2999
        %3384 = vst [vmem:[#allocation2 + $0x918] sm:$0xff] %v3000
        %3385 = vst [vmem:[#allocation2 + $0x920] sm:$0xff] %v3001
        %3386 = vst [vmem:[#allocation2 + $0x928] sm:$0xff] %v3002
        %3387 = vst [vmem:[#allocation2 + $0x930] sm:$0xff] %v3003
        %3388 = vst [vmem:[#allocation2 + $0x938] sm:$0xff] %v3004
        %3389 = vst [vmem:[#allocation2 + $0x940] sm:$0xff] %v3005
        %3390 = vst [vmem:[#allocation2 + $0x948] sm:$0xff] %v3006
        %3391 = vst [vmem:[#allocation2 + $0x950] sm:$0xff] %v3007
        %3392 = vst [vmem:[#allocation2 + $0x958] sm:$0xff] %v3008
        %3393 = vst [vmem:[#allocation2 + $0x960] sm:$0xff] %v3009
        %3394 = vst [vmem:[#allocation2 + $0x968] sm:$0xff] %v3010
        %3395 = vst [vmem:[#allocation2 + $0x970] sm:$0xff] %v3011
        %3396 = vst [vmem:[#allocation2 + $0x978] sm:$0xff] %v3012
        %3397 = vst [vmem:[#allocation2 + $0x980] sm:$0xff] %v3013
        %3398 = vst [vmem:[#allocation2 + $0x988] sm:$0xff] %v3014
        %3399 = vst [vmem:[#allocation2 + $0x990] sm:$0xff] %v3015
        %3400 = vst [vmem:[#allocation2 + $0x998] sm:$0xff] %v3016
        %3401 = vst [vmem:[#allocation2 + $0x9a0] sm:$0xff] %v3017
        %3402 = vst [vmem:[#allocation2 + $0x9a8] sm:$0xff] %v3018
        %3403 = vst [vmem:[#allocation2 + $0x9b0] sm:$0xff] %v3019
        %3404 = vst [vmem:[#allocation2 + $0x9b8] sm:$0xff] %v3020
        %3405 = vst [vmem:[#allocation2 + $0x9c0] sm:$0xff] %v3021
        %3406 = vst [vmem:[#allocation2 + $0x9c8] sm:$0xff] %v3022
        %3407 = vst [vmem:[#allocation2 + $0x9d0] sm:$0xff] %v3023
        %3408 = vst [vmem:[#allocation2 + $0x9d8] sm:$0xff] %v3024
        %3409 = vst [vmem:[#allocation2 + $0x9e0] sm:$0xff] %v3025
        %3410 = vst [vmem:[#allocation2 + $0x9e8] sm:$0xff] %v3026
        %3411 = vst [vmem:[#allocation2 + $0x9f0] sm:$0xff] %v3027
        %3412 = vst [vmem:[#allocation2 + $0x9f8] sm:$0xff] %v3028
        %3413 = vst [vmem:[#allocation2 + $0xa00] sm:$0xff] %v3029
        %3414 = vst [vmem:[#allocation2 + $0xa08] sm:$0xff] %v3030
        %3415 = vst [vmem:[#allocation2 + $0xa10] sm:$0xff] %v3031
        %3416 = vst [vmem:[#allocation2 + $0xa18] sm:$0xff] %v3032
        %3417 = vst [vmem:[#allocation2 + $0xa20] sm:$0xff] %v3033
        %3418 = vst [vmem:[#allocation2 + $0xa28] sm:$0xff] %v3034
        %3419 = vst [vmem:[#allocation2 + $0xa30] sm:$0xff] %v3035
        %3420 = vst [vmem:[#allocation2 + $0xa38] sm:$0xff] %v3036
        %3421 = vst [vmem:[#allocation2 + $0xa40] sm:$0xff] %v3037
        %3422 = vst [vmem:[#allocation2 + $0xa48] sm:$0xff] %v3038
        %3423 = vst [vmem:[#allocation2 + $0xa50] sm:$0xff] %v3039
        %3424 = vst [vmem:[#allocation2 + $0xa58] sm:$0xff] %v3040
        %3425 = vst [vmem:[#allocation2 + $0xa60] sm:$0xff] %v3041
        %3426 = vst [vmem:[#allocation2 + $0xa68] sm:$0xff] %v3042
        %3427 = vst [vmem:[#allocation2 + $0xa70] sm:$0xff] %v3043
        %3428 = vst [vmem:[#allocation2 + $0xa78] sm:$0xff] %v3044
        %3429 = vst [vmem:[#allocation2 + $0xa80] sm:$0xff] %v3045
        %3430 = vst [vmem:[#allocation2 + $0xa88] sm:$0xff] %v3046
        %3431 = vst [vmem:[#allocation2 + $0xa90] sm:$0xff] %v3047
        %3432 = vst [vmem:[#allocation2 + $0xa98] sm:$0xff] %v3048
        %3433 = vst [vmem:[#allocation2 + $0xaa0] sm:$0xff] %v3049
        %3434 = vst [vmem:[#allocation2 + $0xaa8] sm:$0xff] %v3050
        %3435 = vst [vmem:[#allocation2 + $0xab0] sm:$0xff] %v3051
        %3436 = vst [vmem:[#allocation2 + $0xab8] sm:$0xff] %v3052
        %3437 = vst [vmem:[#allocation2 + $0xac0] sm:$0xff] %v3053
        %3438 = vst [vmem:[#allocation2 + $0xac8] sm:$0xff] %v3054
        %3439 = vst [vmem:[#allocation2 + $0xad0] sm:$0xff] %v3055
        %3440 = vst [vmem:[#allocation2 + $0xad8] sm:$0xff] %v3056
        %3441 = vst [vmem:[#allocation2 + $0xae0] sm:$0xff] %v3057
        %3442 = vst [vmem:[#allocation2 + $0xae8] sm:$0xff] %v3058
        %3443 = vst [vmem:[#allocation2 + $0xaf0] sm:$0xff] %v3059
        %3444 = vst [vmem:[#allocation2 + $0xaf8] sm:$0xff] %v3060
        %3445 = vst [vmem:[#allocation2 + $0xb00] sm:$0xff] %v3061
        %3446 = vst [vmem:[#allocation2 + $0xb08] sm:$0xff] %v3062
        %3447 = vst [vmem:[#allocation2 + $0xb10] sm:$0xff] %v3063
        %3448 = vst [vmem:[#allocation2 + $0xb18] sm:$0xff] %v3064
        %3449 = vst [vmem:[#allocation2 + $0xb20] sm:$0xff] %v3065
        %3450 = vst [vmem:[#allocation2 + $0xb28] sm:$0xff] %v3066
        %3451 = vst [vmem:[#allocation2 + $0xb30] sm:$0xff] %v3067
        %3452 = vst [vmem:[#allocation2 + $0xb38] sm:$0xff] %v3068
        %3453 = vst [vmem:[#allocation2 + $0xb40] sm:$0xff] %v3069
        %3454 = vst [vmem:[#allocation2 + $0xb48] sm:$0xff] %v3070
        %3455 = vst [vmem:[#allocation2 + $0xb50] sm:$0xff] %v3071
        %3456 = vst [vmem:[#allocation2 + $0xb58] sm:$0xff] %v3072
        %3457 = vst [vmem:[#allocation2 + $0xb60] sm:$0xff] %v3073
        %3458 = vst [vmem:[#allocation2 + $0xb68] sm:$0xff] %v3074
        %3459 = vst [vmem:[#allocation2 + $0xb70] sm:$0xff] %v3075
        %3460 = vst [vmem:[#allocation2 + $0xb78] sm:$0xff] %v3076
        %3461 = vst [vmem:[#allocation2 + $0xb80] sm:$0xff] %v3077
        %3462 = vst [vmem:[#allocation2 + $0xb88] sm:$0xff] %v3078
        %3463 = vst [vmem:[#allocation2 + $0xb90] sm:$0xff] %v3079
        %3464 = vst [vmem:[#allocation2 + $0xb98] sm:$0xff] %v3080
        %3465 = vst [vmem:[#allocation2 + $0xba0] sm:$0xff] %v3081
        %3466 = vst [vmem:[#allocation2 + $0xba8] sm:$0xff] %v3082
        %3467 = vst [vmem:[#allocation2 + $0xbb0] sm:$0xff] %v3083
        %3468 = vst [vmem:[#allocation2 + $0xbb8] sm:$0xff] %v3084
        %3469 = vst [vmem:[#allocation2 + $0xbc0] sm:$0xff] %v3085
        %3470 = vst [vmem:[#allocation2 + $0xbc8] sm:$0xff] %v3086
        %3471 = vst [vmem:[#allocation2 + $0xbd0] sm:$0xff] %v3087
        %3472 = vst [vmem:[#allocation2 + $0xbd8] sm:$0xff] %v3088
        %3473 = vst [vmem:[#allocation2 + $0xbe0] sm:$0xff] %v3089
        %3474 = vst [vmem:[#allocation2 + $0xbe8] sm:$0xff] %v3090
        %3475 = vst [vmem:[#allocation2 + $0xbf0] sm:$0xff] %v3091
        %3476 = vst [vmem:[#allocation2 + $0xbf8] sm:$0xff] %v3092
        // Predicated region
        $region49: #{tpu_custom_call.1} parent=31 // pred_check
          %p3477 = pneg %p270
        $region50: #{tpu_custom_call.1} parent=31 // pred_check_branch
          %3479 = sbr.rel (%p3477) target = $region52
        $region51: #{tpu_custom_call.1} parent=31 // pred_region
          %v3480 = vld [vmem:[#allocation2] sm:$0xff]
          %v3481 = vld [vmem:[#allocation2 + $0x8] sm:$0xff]
          %v3482 = vld [vmem:[#allocation2 + $0x10] sm:$0xff]
          %v3483 = vld [vmem:[#allocation2 + $0x18] sm:$0xff]
          %v3484 = vld [vmem:[#allocation2 + $0x20] sm:$0xff]
          %v3485 = vld [vmem:[#allocation2 + $0x28] sm:$0xff]
          %v3486 = vld [vmem:[#allocation2 + $0x30] sm:$0xff]
          %v3487 = vld [vmem:[#allocation2 + $0x38] sm:$0xff]
          %v3488 = vld [vmem:[#allocation2 + $0x40] sm:$0xff]
          %v3489 = vld [vmem:[#allocation2 + $0x48] sm:$0xff]
          %v3490 = vld [vmem:[#allocation2 + $0x50] sm:$0xff]
          %v3491 = vld [vmem:[#allocation2 + $0x58] sm:$0xff]
          %v3492 = vld [vmem:[#allocation2 + $0x60] sm:$0xff]
          %v3493 = vld [vmem:[#allocation2 + $0x68] sm:$0xff]
          %v3494 = vld [vmem:[#allocation2 + $0x70] sm:$0xff]
          %v3495 = vld [vmem:[#allocation2 + $0x78] sm:$0xff]
          %v3496 = vld [vmem:[#allocation2 + $0x80] sm:$0xff]
          %v3497 = vld [vmem:[#allocation2 + $0x88] sm:$0xff]
          %v3498 = vld [vmem:[#allocation2 + $0x90] sm:$0xff]
          %v3499 = vld [vmem:[#allocation2 + $0x98] sm:$0xff]
          %v3500 = vld [vmem:[#allocation2 + $0xa0] sm:$0xff]
          %v3501 = vld [vmem:[#allocation2 + $0xa8] sm:$0xff]
          %v3502 = vld [vmem:[#allocation2 + $0xb0] sm:$0xff]
          %v3503 = vld [vmem:[#allocation2 + $0xb8] sm:$0xff]
          %v3504 = vld [vmem:[#allocation2 + $0xc0] sm:$0xff]
          %v3505 = vld [vmem:[#allocation2 + $0xc8] sm:$0xff]
          %v3506 = vld [vmem:[#allocation2 + $0xd0] sm:$0xff]
          %v3507 = vld [vmem:[#allocation2 + $0xd8] sm:$0xff]
          %v3508 = vld [vmem:[#allocation2 + $0xe0] sm:$0xff]
          %v3509 = vld [vmem:[#allocation2 + $0xe8] sm:$0xff]
          %v3510 = vld [vmem:[#allocation2 + $0xf0] sm:$0xff]
          %v3511 = vld [vmem:[#allocation2 + $0xf8] sm:$0xff]
          %v3512 = vld [vmem:[#allocation2 + $0x100] sm:$0xff]
          %v3513 = vld [vmem:[#allocation2 + $0x108] sm:$0xff]
          %v3514 = vld [vmem:[#allocation2 + $0x110] sm:$0xff]
          %v3515 = vld [vmem:[#allocation2 + $0x118] sm:$0xff]
          %v3516 = vld [vmem:[#allocation2 + $0x120] sm:$0xff]
          %v3517 = vld [vmem:[#allocation2 + $0x128] sm:$0xff]
          %v3518 = vld [vmem:[#allocation2 + $0x130] sm:$0xff]
          %v3519 = vld [vmem:[#allocation2 + $0x138] sm:$0xff]
          %v3520 = vld [vmem:[#allocation2 + $0x140] sm:$0xff]
          %v3521 = vld [vmem:[#allocation2 + $0x148] sm:$0xff]
          %v3522 = vld [vmem:[#allocation2 + $0x150] sm:$0xff]
          %v3523 = vld [vmem:[#allocation2 + $0x158] sm:$0xff]
          %v3524 = vld [vmem:[#allocation2 + $0x160] sm:$0xff]
          %v3525 = vld [vmem:[#allocation2 + $0x168] sm:$0xff]
          %v3526 = vld [vmem:[#allocation2 + $0x170] sm:$0xff]
          %v3527 = vld [vmem:[#allocation2 + $0x178] sm:$0xff]
          %v3528 = vld [vmem:[#allocation2 + $0x180] sm:$0xff]
          %v3529 = vld [vmem:[#allocation2 + $0x188] sm:$0xff]
          %v3530 = vld [vmem:[#allocation2 + $0x190] sm:$0xff]
          %v3531 = vld [vmem:[#allocation2 + $0x198] sm:$0xff]
          %v3532 = vld [vmem:[#allocation2 + $0x1a0] sm:$0xff]
          %v3533 = vld [vmem:[#allocation2 + $0x1a8] sm:$0xff]
          %v3534 = vld [vmem:[#allocation2 + $0x1b0] sm:$0xff]
          %v3535 = vld [vmem:[#allocation2 + $0x1b8] sm:$0xff]
          %v3536 = vld [vmem:[#allocation2 + $0x1c0] sm:$0xff]
          %v3537 = vld [vmem:[#allocation2 + $0x1c8] sm:$0xff]
          %v3538 = vld [vmem:[#allocation2 + $0x1d0] sm:$0xff]
          %v3539 = vld [vmem:[#allocation2 + $0x1d8] sm:$0xff]
          %v3540 = vld [vmem:[#allocation2 + $0x1e0] sm:$0xff]
          %v3541 = vld [vmem:[#allocation2 + $0x1e8] sm:$0xff]
          %v3542 = vld [vmem:[#allocation2 + $0x1f0] sm:$0xff]
          %v3543 = vld [vmem:[#allocation2 + $0x1f8] sm:$0xff]
          %v3544 = vld [vmem:[#allocation2 + $0x200] sm:$0xff]
          %v3545 = vld [vmem:[#allocation2 + $0x208] sm:$0xff]
          %v3546 = vld [vmem:[#allocation2 + $0x210] sm:$0xff]
          %v3547 = vld [vmem:[#allocation2 + $0x218] sm:$0xff]
          %v3548 = vld [vmem:[#allocation2 + $0x220] sm:$0xff]
          %v3549 = vld [vmem:[#allocation2 + $0x228] sm:$0xff]
          %v3550 = vld [vmem:[#allocation2 + $0x230] sm:$0xff]
          %v3551 = vld [vmem:[#allocation2 + $0x238] sm:$0xff]
          %v3552 = vld [vmem:[#allocation2 + $0x240] sm:$0xff]
          %v3553 = vld [vmem:[#allocation2 + $0x248] sm:$0xff]
          %v3554 = vld [vmem:[#allocation2 + $0x250] sm:$0xff]
          %v3555 = vld [vmem:[#allocation2 + $0x258] sm:$0xff]
          %v3556 = vld [vmem:[#allocation2 + $0x260] sm:$0xff]
          %v3557 = vld [vmem:[#allocation2 + $0x268] sm:$0xff]
          %v3558 = vld [vmem:[#allocation2 + $0x270] sm:$0xff]
          %v3559 = vld [vmem:[#allocation2 + $0x278] sm:$0xff]
          %v3560 = vld [vmem:[#allocation2 + $0x280] sm:$0xff]
          %v3561 = vld [vmem:[#allocation2 + $0x288] sm:$0xff]
          %v3562 = vld [vmem:[#allocation2 + $0x290] sm:$0xff]
          %v3563 = vld [vmem:[#allocation2 + $0x298] sm:$0xff]
          %v3564 = vld [vmem:[#allocation2 + $0x2a0] sm:$0xff]
          %v3565 = vld [vmem:[#allocation2 + $0x2a8] sm:$0xff]
          %v3566 = vld [vmem:[#allocation2 + $0x2b0] sm:$0xff]
          %v3567 = vld [vmem:[#allocation2 + $0x2b8] sm:$0xff]
          %v3568 = vld [vmem:[#allocation2 + $0x2c0] sm:$0xff]
          %v3569 = vld [vmem:[#allocation2 + $0x2c8] sm:$0xff]
          %v3570 = vld [vmem:[#allocation2 + $0x2d0] sm:$0xff]
          %v3571 = vld [vmem:[#allocation2 + $0x2d8] sm:$0xff]
          %v3572 = vld [vmem:[#allocation2 + $0x2e0] sm:$0xff]
          %v3573 = vld [vmem:[#allocation2 + $0x2e8] sm:$0xff]
          %v3574 = vld [vmem:[#allocation2 + $0x2f0] sm:$0xff]
          %v3575 = vld [vmem:[#allocation2 + $0x2f8] sm:$0xff]
          %v3576 = vld [vmem:[#allocation2 + $0x300] sm:$0xff]
          %v3577 = vld [vmem:[#allocation2 + $0x308] sm:$0xff]
          %v3578 = vld [vmem:[#allocation2 + $0x310] sm:$0xff]
          %v3579 = vld [vmem:[#allocation2 + $0x318] sm:$0xff]
          %v3580 = vld [vmem:[#allocation2 + $0x320] sm:$0xff]
          %v3581 = vld [vmem:[#allocation2 + $0x328] sm:$0xff]
          %v3582 = vld [vmem:[#allocation2 + $0x330] sm:$0xff]
          %v3583 = vld [vmem:[#allocation2 + $0x338] sm:$0xff]
          %v3584 = vld [vmem:[#allocation2 + $0x340] sm:$0xff]
          %v3585 = vld [vmem:[#allocation2 + $0x348] sm:$0xff]
          %v3586 = vld [vmem:[#allocation2 + $0x350] sm:$0xff]
          %v3587 = vld [vmem:[#allocation2 + $0x358] sm:$0xff]
          %v3588 = vld [vmem:[#allocation2 + $0x360] sm:$0xff]
          %v3589 = vld [vmem:[#allocation2 + $0x368] sm:$0xff]
          %v3590 = vld [vmem:[#allocation2 + $0x370] sm:$0xff]
          %v3591 = vld [vmem:[#allocation2 + $0x378] sm:$0xff]
          %v3592 = vld [vmem:[#allocation2 + $0x380] sm:$0xff]
          %v3593 = vld [vmem:[#allocation2 + $0x388] sm:$0xff]
          %v3594 = vld [vmem:[#allocation2 + $0x390] sm:$0xff]
          %v3595 = vld [vmem:[#allocation2 + $0x398] sm:$0xff]
          %v3596 = vld [vmem:[#allocation2 + $0x3a0] sm:$0xff]
          %v3597 = vld [vmem:[#allocation2 + $0x3a8] sm:$0xff]
          %v3598 = vld [vmem:[#allocation2 + $0x3b0] sm:$0xff]
          %v3599 = vld [vmem:[#allocation2 + $0x3b8] sm:$0xff]
          %v3600 = vld [vmem:[#allocation2 + $0x3c0] sm:$0xff]
          %v3601 = vld [vmem:[#allocation2 + $0x3c8] sm:$0xff]
          %v3602 = vld [vmem:[#allocation2 + $0x3d0] sm:$0xff]
          %v3603 = vld [vmem:[#allocation2 + $0x3d8] sm:$0xff]
          %v3604 = vld [vmem:[#allocation2 + $0x3e0] sm:$0xff]
          %v3605 = vld [vmem:[#allocation2 + $0x3e8] sm:$0xff]
          %v3606 = vld [vmem:[#allocation2 + $0x3f0] sm:$0xff]
          %v3607 = vld [vmem:[#allocation2 + $0x3f8] sm:$0xff]
          %v3608 = vld [vmem:[#allocation2 + $0x400] sm:$0xff]
          %v3609 = vld [vmem:[#allocation2 + $0x408] sm:$0xff]
          %v3610 = vld [vmem:[#allocation2 + $0x410] sm:$0xff]
          %v3611 = vld [vmem:[#allocation2 + $0x418] sm:$0xff]
          %v3612 = vld [vmem:[#allocation2 + $0x420] sm:$0xff]
          %v3613 = vld [vmem:[#allocation2 + $0x428] sm:$0xff]
          %v3614 = vld [vmem:[#allocation2 + $0x430] sm:$0xff]
          %v3615 = vld [vmem:[#allocation2 + $0x438] sm:$0xff]
          %v3616 = vld [vmem:[#allocation2 + $0x440] sm:$0xff]
          %v3617 = vld [vmem:[#allocation2 + $0x448] sm:$0xff]
          %v3618 = vld [vmem:[#allocation2 + $0x450] sm:$0xff]
          %v3619 = vld [vmem:[#allocation2 + $0x458] sm:$0xff]
          %v3620 = vld [vmem:[#allocation2 + $0x460] sm:$0xff]
          %v3621 = vld [vmem:[#allocation2 + $0x468] sm:$0xff]
          %v3622 = vld [vmem:[#allocation2 + $0x470] sm:$0xff]
          %v3623 = vld [vmem:[#allocation2 + $0x478] sm:$0xff]
          %v3624 = vld [vmem:[#allocation2 + $0x480] sm:$0xff]
          %v3625 = vld [vmem:[#allocation2 + $0x488] sm:$0xff]
          %v3626 = vld [vmem:[#allocation2 + $0x490] sm:$0xff]
          %v3627 = vld [vmem:[#allocation2 + $0x498] sm:$0xff]
          %v3628 = vld [vmem:[#allocation2 + $0x4a0] sm:$0xff]
          %v3629 = vld [vmem:[#allocation2 + $0x4a8] sm:$0xff]
          %v3630 = vld [vmem:[#allocation2 + $0x4b0] sm:$0xff]
          %v3631 = vld [vmem:[#allocation2 + $0x4b8] sm:$0xff]
          %v3632 = vld [vmem:[#allocation2 + $0x4c0] sm:$0xff]
          %v3633 = vld [vmem:[#allocation2 + $0x4c8] sm:$0xff]
          %v3634 = vld [vmem:[#allocation2 + $0x4d0] sm:$0xff]
          %v3635 = vld [vmem:[#allocation2 + $0x4d8] sm:$0xff]
          %v3636 = vld [vmem:[#allocation2 + $0x4e0] sm:$0xff]
          %v3637 = vld [vmem:[#allocation2 + $0x4e8] sm:$0xff]
          %v3638 = vld [vmem:[#allocation2 + $0x4f0] sm:$0xff]
          %v3639 = vld [vmem:[#allocation2 + $0x4f8] sm:$0xff]
          %v3640 = vld [vmem:[#allocation2 + $0x500] sm:$0xff]
          %v3641 = vld [vmem:[#allocation2 + $0x508] sm:$0xff]
          %v3642 = vld [vmem:[#allocation2 + $0x510] sm:$0xff]
          %v3643 = vld [vmem:[#allocation2 + $0x518] sm:$0xff]
          %v3644 = vld [vmem:[#allocation2 + $0x520] sm:$0xff]
          %v3645 = vld [vmem:[#allocation2 + $0x528] sm:$0xff]
          %v3646 = vld [vmem:[#allocation2 + $0x530] sm:$0xff]
          %v3647 = vld [vmem:[#allocation2 + $0x538] sm:$0xff]
          %v3648 = vld [vmem:[#allocation2 + $0x540] sm:$0xff]
          %v3649 = vld [vmem:[#allocation2 + $0x548] sm:$0xff]
          %v3650 = vld [vmem:[#allocation2 + $0x550] sm:$0xff]
          %v3651 = vld [vmem:[#allocation2 + $0x558] sm:$0xff]
          %v3652 = vld [vmem:[#allocation2 + $0x560] sm:$0xff]
          %v3653 = vld [vmem:[#allocation2 + $0x568] sm:$0xff]
          %v3654 = vld [vmem:[#allocation2 + $0x570] sm:$0xff]
          %v3655 = vld [vmem:[#allocation2 + $0x578] sm:$0xff]
          %v3656 = vld [vmem:[#allocation2 + $0x580] sm:$0xff]
          %v3657 = vld [vmem:[#allocation2 + $0x588] sm:$0xff]
          %v3658 = vld [vmem:[#allocation2 + $0x590] sm:$0xff]
          %v3659 = vld [vmem:[#allocation2 + $0x598] sm:$0xff]
          %v3660 = vld [vmem:[#allocation2 + $0x5a0] sm:$0xff]
          %v3661 = vld [vmem:[#allocation2 + $0x5a8] sm:$0xff]
          %v3662 = vld [vmem:[#allocation2 + $0x5b0] sm:$0xff]
          %v3663 = vld [vmem:[#allocation2 + $0x5b8] sm:$0xff]
          %v3664 = vld [vmem:[#allocation2 + $0x5c0] sm:$0xff]
          %v3665 = vld [vmem:[#allocation2 + $0x5c8] sm:$0xff]
          %v3666 = vld [vmem:[#allocation2 + $0x5d0] sm:$0xff]
          %v3667 = vld [vmem:[#allocation2 + $0x5d8] sm:$0xff]
          %v3668 = vld [vmem:[#allocation2 + $0x5e0] sm:$0xff]
          %v3669 = vld [vmem:[#allocation2 + $0x5e8] sm:$0xff]
          %v3670 = vld [vmem:[#allocation2 + $0x5f0] sm:$0xff]
          %v3671 = vld [vmem:[#allocation2 + $0x5f8] sm:$0xff]
          %v3672 = vld [vmem:[#allocation2 + $0x600] sm:$0xff]
          %v3673 = vld [vmem:[#allocation2 + $0x608] sm:$0xff]
          %v3674 = vld [vmem:[#allocation2 + $0x610] sm:$0xff]
          %v3675 = vld [vmem:[#allocation2 + $0x618] sm:$0xff]
          %v3676 = vld [vmem:[#allocation2 + $0x620] sm:$0xff]
          %v3677 = vld [vmem:[#allocation2 + $0x628] sm:$0xff]
          %v3678 = vld [vmem:[#allocation2 + $0x630] sm:$0xff]
          %v3679 = vld [vmem:[#allocation2 + $0x638] sm:$0xff]
          %v3680 = vld [vmem:[#allocation2 + $0x640] sm:$0xff]
          %v3681 = vld [vmem:[#allocation2 + $0x648] sm:$0xff]
          %v3682 = vld [vmem:[#allocation2 + $0x650] sm:$0xff]
          %v3683 = vld [vmem:[#allocation2 + $0x658] sm:$0xff]
          %v3684 = vld [vmem:[#allocation2 + $0x660] sm:$0xff]
          %v3685 = vld [vmem:[#allocation2 + $0x668] sm:$0xff]
          %v3686 = vld [vmem:[#allocation2 + $0x670] sm:$0xff]
          %v3687 = vld [vmem:[#allocation2 + $0x678] sm:$0xff]
          %v3688 = vld [vmem:[#allocation2 + $0x680] sm:$0xff]
          %v3689 = vld [vmem:[#allocation2 + $0x688] sm:$0xff]
          %v3690 = vld [vmem:[#allocation2 + $0x690] sm:$0xff]
          %v3691 = vld [vmem:[#allocation2 + $0x698] sm:$0xff]
          %v3692 = vld [vmem:[#allocation2 + $0x6a0] sm:$0xff]
          %v3693 = vld [vmem:[#allocation2 + $0x6a8] sm:$0xff]
          %v3694 = vld [vmem:[#allocation2 + $0x6b0] sm:$0xff]
          %v3695 = vld [vmem:[#allocation2 + $0x6b8] sm:$0xff]
          %v3696 = vld [vmem:[#allocation2 + $0x6c0] sm:$0xff]
          %v3697 = vld [vmem:[#allocation2 + $0x6c8] sm:$0xff]
          %v3698 = vld [vmem:[#allocation2 + $0x6d0] sm:$0xff]
          %v3699 = vld [vmem:[#allocation2 + $0x6d8] sm:$0xff]
          %v3700 = vld [vmem:[#allocation2 + $0x6e0] sm:$0xff]
          %v3701 = vld [vmem:[#allocation2 + $0x6e8] sm:$0xff]
          %v3702 = vld [vmem:[#allocation2 + $0x6f0] sm:$0xff]
          %v3703 = vld [vmem:[#allocation2 + $0x6f8] sm:$0xff]
          %v3704 = vld [vmem:[#allocation2 + $0x700] sm:$0xff]
          %v3705 = vld [vmem:[#allocation2 + $0x708] sm:$0xff]
          %v3706 = vld [vmem:[#allocation2 + $0x710] sm:$0xff]
          %v3707 = vld [vmem:[#allocation2 + $0x718] sm:$0xff]
          %v3708 = vld [vmem:[#allocation2 + $0x720] sm:$0xff]
          %v3709 = vld [vmem:[#allocation2 + $0x728] sm:$0xff]
          %v3710 = vld [vmem:[#allocation2 + $0x730] sm:$0xff]
          %v3711 = vld [vmem:[#allocation2 + $0x738] sm:$0xff]
          %v3712 = vld [vmem:[#allocation2 + $0x740] sm:$0xff]
          %v3713 = vld [vmem:[#allocation2 + $0x748] sm:$0xff]
          %v3714 = vld [vmem:[#allocation2 + $0x750] sm:$0xff]
          %v3715 = vld [vmem:[#allocation2 + $0x758] sm:$0xff]
          %v3716 = vld [vmem:[#allocation2 + $0x760] sm:$0xff]
          %v3717 = vld [vmem:[#allocation2 + $0x768] sm:$0xff]
          %v3718 = vld [vmem:[#allocation2 + $0x770] sm:$0xff]
          %v3719 = vld [vmem:[#allocation2 + $0x778] sm:$0xff]
          %v3720 = vld [vmem:[#allocation2 + $0x780] sm:$0xff]
          %v3721 = vld [vmem:[#allocation2 + $0x788] sm:$0xff]
          %v3722 = vld [vmem:[#allocation2 + $0x790] sm:$0xff]
          %v3723 = vld [vmem:[#allocation2 + $0x798] sm:$0xff]
          %v3724 = vld [vmem:[#allocation2 + $0x7a0] sm:$0xff]
          %v3725 = vld [vmem:[#allocation2 + $0x7a8] sm:$0xff]
          %v3726 = vld [vmem:[#allocation2 + $0x7b0] sm:$0xff]
          %v3727 = vld [vmem:[#allocation2 + $0x7b8] sm:$0xff]
          %v3728 = vld [vmem:[#allocation2 + $0x7c0] sm:$0xff]
          %v3729 = vld [vmem:[#allocation2 + $0x7c8] sm:$0xff]
          %v3730 = vld [vmem:[#allocation2 + $0x7d0] sm:$0xff]
          %v3731 = vld [vmem:[#allocation2 + $0x7d8] sm:$0xff]
          %v3732 = vld [vmem:[#allocation2 + $0x7e0] sm:$0xff]
          %v3733 = vld [vmem:[#allocation2 + $0x7e8] sm:$0xff]
          %v3734 = vld [vmem:[#allocation2 + $0x7f0] sm:$0xff]
          %v3735 = vld [vmem:[#allocation2 + $0x7f8] sm:$0xff]
          %v3736 = vld [vmem:[#allocation2 + $0x800] sm:$0xff]
          %v3737 = vld [vmem:[#allocation2 + $0x808] sm:$0xff]
          %v3738 = vld [vmem:[#allocation2 + $0x810] sm:$0xff]
          %v3739 = vld [vmem:[#allocation2 + $0x818] sm:$0xff]
          %v3740 = vld [vmem:[#allocation2 + $0x820] sm:$0xff]
          %v3741 = vld [vmem:[#allocation2 + $0x828] sm:$0xff]
          %v3742 = vld [vmem:[#allocation2 + $0x830] sm:$0xff]
          %v3743 = vld [vmem:[#allocation2 + $0x838] sm:$0xff]
          %v3744 = vld [vmem:[#allocation2 + $0x840] sm:$0xff]
          %v3745 = vld [vmem:[#allocation2 + $0x848] sm:$0xff]
          %v3746 = vld [vmem:[#allocation2 + $0x850] sm:$0xff]
          %v3747 = vld [vmem:[#allocation2 + $0x858] sm:$0xff]
          %v3748 = vld [vmem:[#allocation2 + $0x860] sm:$0xff]
          %v3749 = vld [vmem:[#allocation2 + $0x868] sm:$0xff]
          %v3750 = vld [vmem:[#allocation2 + $0x870] sm:$0xff]
          %v3751 = vld [vmem:[#allocation2 + $0x878] sm:$0xff]
          %v3752 = vld [vmem:[#allocation2 + $0x880] sm:$0xff]
          %v3753 = vld [vmem:[#allocation2 + $0x888] sm:$0xff]
          %v3754 = vld [vmem:[#allocation2 + $0x890] sm:$0xff]
          %v3755 = vld [vmem:[#allocation2 + $0x898] sm:$0xff]
          %v3756 = vld [vmem:[#allocation2 + $0x8a0] sm:$0xff]
          %v3757 = vld [vmem:[#allocation2 + $0x8a8] sm:$0xff]
          %v3758 = vld [vmem:[#allocation2 + $0x8b0] sm:$0xff]
          %v3759 = vld [vmem:[#allocation2 + $0x8b8] sm:$0xff]
          %v3760 = vld [vmem:[#allocation2 + $0x8c0] sm:$0xff]
          %v3761 = vld [vmem:[#allocation2 + $0x8c8] sm:$0xff]
          %v3762 = vld [vmem:[#allocation2 + $0x8d0] sm:$0xff]
          %v3763 = vld [vmem:[#allocation2 + $0x8d8] sm:$0xff]
          %v3764 = vld [vmem:[#allocation2 + $0x8e0] sm:$0xff]
          %v3765 = vld [vmem:[#allocation2 + $0x8e8] sm:$0xff]
          %v3766 = vld [vmem:[#allocation2 + $0x8f0] sm:$0xff]
          %v3767 = vld [vmem:[#allocation2 + $0x8f8] sm:$0xff]
          %v3768 = vld [vmem:[#allocation2 + $0x900] sm:$0xff]
          %v3769 = vld [vmem:[#allocation2 + $0x908] sm:$0xff]
          %v3770 = vld [vmem:[#allocation2 + $0x910] sm:$0xff]
          %v3771 = vld [vmem:[#allocation2 + $0x918] sm:$0xff]
          %v3772 = vld [vmem:[#allocation2 + $0x920] sm:$0xff]
          %v3773 = vld [vmem:[#allocation2 + $0x928] sm:$0xff]
          %v3774 = vld [vmem:[#allocation2 + $0x930] sm:$0xff]
          %v3775 = vld [vmem:[#allocation2 + $0x938] sm:$0xff]
          %v3776 = vld [vmem:[#allocation2 + $0x940] sm:$0xff]
          %v3777 = vld [vmem:[#allocation2 + $0x948] sm:$0xff]
          %v3778 = vld [vmem:[#allocation2 + $0x950] sm:$0xff]
          %v3779 = vld [vmem:[#allocation2 + $0x958] sm:$0xff]
          %v3780 = vld [vmem:[#allocation2 + $0x960] sm:$0xff]
          %v3781 = vld [vmem:[#allocation2 + $0x968] sm:$0xff]
          %v3782 = vld [vmem:[#allocation2 + $0x970] sm:$0xff]
          %v3783 = vld [vmem:[#allocation2 + $0x978] sm:$0xff]
          %v3784 = vld [vmem:[#allocation2 + $0x980] sm:$0xff]
          %v3785 = vld [vmem:[#allocation2 + $0x988] sm:$0xff]
          %v3786 = vld [vmem:[#allocation2 + $0x990] sm:$0xff]
          %v3787 = vld [vmem:[#allocation2 + $0x998] sm:$0xff]
          %v3788 = vld [vmem:[#allocation2 + $0x9a0] sm:$0xff]
          %v3789 = vld [vmem:[#allocation2 + $0x9a8] sm:$0xff]
          %v3790 = vld [vmem:[#allocation2 + $0x9b0] sm:$0xff]
          %v3791 = vld [vmem:[#allocation2 + $0x9b8] sm:$0xff]
          %v3792 = vld [vmem:[#allocation2 + $0x9c0] sm:$0xff]
          %v3793 = vld [vmem:[#allocation2 + $0x9c8] sm:$0xff]
          %v3794 = vld [vmem:[#allocation2 + $0x9d0] sm:$0xff]
          %v3795 = vld [vmem:[#allocation2 + $0x9d8] sm:$0xff]
          %v3796 = vld [vmem:[#allocation2 + $0x9e0] sm:$0xff]
          %v3797 = vld [vmem:[#allocation2 + $0x9e8] sm:$0xff]
          %v3798 = vld [vmem:[#allocation2 + $0x9f0] sm:$0xff]
          %v3799 = vld [vmem:[#allocation2 + $0x9f8] sm:$0xff]
          %v3800 = vld [vmem:[#allocation2 + $0xa00] sm:$0xff]
          %v3801 = vld [vmem:[#allocation2 + $0xa08] sm:$0xff]
          %v3802 = vld [vmem:[#allocation2 + $0xa10] sm:$0xff]
          %v3803 = vld [vmem:[#allocation2 + $0xa18] sm:$0xff]
          %v3804 = vld [vmem:[#allocation2 + $0xa20] sm:$0xff]
          %v3805 = vld [vmem:[#allocation2 + $0xa28] sm:$0xff]
          %v3806 = vld [vmem:[#allocation2 + $0xa30] sm:$0xff]
          %v3807 = vld [vmem:[#allocation2 + $0xa38] sm:$0xff]
          %v3808 = vld [vmem:[#allocation2 + $0xa40] sm:$0xff]
          %v3809 = vld [vmem:[#allocation2 + $0xa48] sm:$0xff]
          %v3810 = vld [vmem:[#allocation2 + $0xa50] sm:$0xff]
          %v3811 = vld [vmem:[#allocation2 + $0xa58] sm:$0xff]
          %v3812 = vld [vmem:[#allocation2 + $0xa60] sm:$0xff]
          %v3813 = vld [vmem:[#allocation2 + $0xa68] sm:$0xff]
          %v3814 = vld [vmem:[#allocation2 + $0xa70] sm:$0xff]
          %v3815 = vld [vmem:[#allocation2 + $0xa78] sm:$0xff]
          %v3816 = vld [vmem:[#allocation2 + $0xa80] sm:$0xff]
          %v3817 = vld [vmem:[#allocation2 + $0xa88] sm:$0xff]
          %v3818 = vld [vmem:[#allocation2 + $0xa90] sm:$0xff]
          %v3819 = vld [vmem:[#allocation2 + $0xa98] sm:$0xff]
          %v3820 = vld [vmem:[#allocation2 + $0xaa0] sm:$0xff]
          %v3821 = vld [vmem:[#allocation2 + $0xaa8] sm:$0xff]
          %v3822 = vld [vmem:[#allocation2 + $0xab0] sm:$0xff]
          %v3823 = vld [vmem:[#allocation2 + $0xab8] sm:$0xff]
          %v3824 = vld [vmem:[#allocation2 + $0xac0] sm:$0xff]
          %v3825 = vld [vmem:[#allocation2 + $0xac8] sm:$0xff]
          %v3826 = vld [vmem:[#allocation2 + $0xad0] sm:$0xff]
          %v3827 = vld [vmem:[#allocation2 + $0xad8] sm:$0xff]
          %v3828 = vld [vmem:[#allocation2 + $0xae0] sm:$0xff]
          %v3829 = vld [vmem:[#allocation2 + $0xae8] sm:$0xff]
          %v3830 = vld [vmem:[#allocation2 + $0xaf0] sm:$0xff]
          %v3831 = vld [vmem:[#allocation2 + $0xaf8] sm:$0xff]
          %v3832 = vld [vmem:[#allocation2 + $0xb00] sm:$0xff]
          %v3833 = vld [vmem:[#allocation2 + $0xb08] sm:$0xff]
          %v3834 = vld [vmem:[#allocation2 + $0xb10] sm:$0xff]
          %v3835 = vld [vmem:[#allocation2 + $0xb18] sm:$0xff]
          %v3836 = vld [vmem:[#allocation2 + $0xb20] sm:$0xff]
          %v3837 = vld [vmem:[#allocation2 + $0xb28] sm:$0xff]
          %v3838 = vld [vmem:[#allocation2 + $0xb30] sm:$0xff]
          %v3839 = vld [vmem:[#allocation2 + $0xb38] sm:$0xff]
          %v3840 = vld [vmem:[#allocation2 + $0xb40] sm:$0xff]
          %v3841 = vld [vmem:[#allocation2 + $0xb48] sm:$0xff]
          %v3842 = vld [vmem:[#allocation2 + $0xb50] sm:$0xff]
          %v3843 = vld [vmem:[#allocation2 + $0xb58] sm:$0xff]
          %v3844 = vld [vmem:[#allocation2 + $0xb60] sm:$0xff]
          %v3845 = vld [vmem:[#allocation2 + $0xb68] sm:$0xff]
          %v3846 = vld [vmem:[#allocation2 + $0xb70] sm:$0xff]
          %v3847 = vld [vmem:[#allocation2 + $0xb78] sm:$0xff]
          %v3848 = vld [vmem:[#allocation2 + $0xb80] sm:$0xff]
          %v3849 = vld [vmem:[#allocation2 + $0xb88] sm:$0xff]
          %v3850 = vld [vmem:[#allocation2 + $0xb90] sm:$0xff]
          %v3851 = vld [vmem:[#allocation2 + $0xb98] sm:$0xff]
          %v3852 = vld [vmem:[#allocation2 + $0xba0] sm:$0xff]
          %v3853 = vld [vmem:[#allocation2 + $0xba8] sm:$0xff]
          %v3854 = vld [vmem:[#allocation2 + $0xbb0] sm:$0xff]
          %v3855 = vld [vmem:[#allocation2 + $0xbb8] sm:$0xff]
          %v3856 = vld [vmem:[#allocation2 + $0xbc0] sm:$0xff]
          %v3857 = vld [vmem:[#allocation2 + $0xbc8] sm:$0xff]
          %v3858 = vld [vmem:[#allocation2 + $0xbd0] sm:$0xff]
          %v3859 = vld [vmem:[#allocation2 + $0xbd8] sm:$0xff]
          %v3860 = vld [vmem:[#allocation2 + $0xbe0] sm:$0xff]
          %v3861 = vld [vmem:[#allocation2 + $0xbe8] sm:$0xff]
          %v3862 = vld [vmem:[#allocation2 + $0xbf0] sm:$0xff]
          %v3863 = vld [vmem:[#allocation2 + $0xbf8] sm:$0xff]
          %v3864 = vld [vmem:[#allocation8] sm:$0x3f]
          %v3866 = vlaneseq
          %v3867 = vshrl.u32 %v3866, 7
          %v3868 = vsub.s32 0, %v3867
          %v3869 = vrot.slane %v3864, %v3868
          %v3870 = vlaneseq
          %v3871 = vshrl.u32 %v3870, 7
          %v3872 = vsub.s32 1, %v3871
          %v3873 = vrot.slane %v3864, %v3872
          %v3874 = vlaneseq
          %v3875 = vshrl.u32 %v3874, 7
          %v3876 = vsub.s32 2, %v3875
          %v3877 = vrot.slane %v3864, %v3876
          %v3878 = vlaneseq
          %v3879 = vshrl.u32 %v3878, 7
          %v3880 = vsub.s32 3, %v3879
          %v3881 = vrot.slane %v3864, %v3880
          %v3882 = vlaneseq
          %v3883 = vshrl.u32 %v3882, 7
          %v3884 = vsub.s32 4, %v3883
          %v3885 = vrot.slane %v3864, %v3884
          %v3886 = vlaneseq
          %v3887 = vshrl.u32 %v3886, 7
          %v3888 = vsub.s32 5, %v3887
          %v3889 = vrot.slane %v3864, %v3888
          %v3896 = vadd.f32 %v3480, %v3869
          %v3897 = vadd.f32 %v3481, %v3873
          %v3898 = vadd.f32 %v3482, %v3877
          %v3899 = vadd.f32 %v3483, %v3881
          %v3900 = vadd.f32 %v3484, %v3885
          %v3901 = vadd.f32 %v3485, %v3889
          %v3902 = vadd.f32 %v3486, %v3869
          %v3903 = vadd.f32 %v3487, %v3873
          %v3904 = vadd.f32 %v3488, %v3877
          %v3905 = vadd.f32 %v3489, %v3881
          %v3906 = vadd.f32 %v3490, %v3885
          %v3907 = vadd.f32 %v3491, %v3889
          %v3908 = vadd.f32 %v3492, %v3869
          %v3909 = vadd.f32 %v3493, %v3873
          %v3910 = vadd.f32 %v3494, %v3877
          %v3911 = vadd.f32 %v3495, %v3881
          %v3912 = vadd.f32 %v3496, %v3885
          %v3913 = vadd.f32 %v3497, %v3889
          %v3914 = vadd.f32 %v3498, %v3869
          %v3915 = vadd.f32 %v3499, %v3873
          %v3916 = vadd.f32 %v3500, %v3877
          %v3917 = vadd.f32 %v3501, %v3881
          %v3918 = vadd.f32 %v3502, %v3885
          %v3919 = vadd.f32 %v3503, %v3889
          %v3920 = vadd.f32 %v3504, %v3869
          %v3921 = vadd.f32 %v3505, %v3873
          %v3922 = vadd.f32 %v3506, %v3877
          %v3923 = vadd.f32 %v3507, %v3881
          %v3924 = vadd.f32 %v3508, %v3885
          %v3925 = vadd.f32 %v3509, %v3889
          %v3926 = vadd.f32 %v3510, %v3869
          %v3927 = vadd.f32 %v3511, %v3873
          %v3928 = vadd.f32 %v3512, %v3877
          %v3929 = vadd.f32 %v3513, %v3881
          %v3930 = vadd.f32 %v3514, %v3885
          %v3931 = vadd.f32 %v3515, %v3889
          %v3932 = vadd.f32 %v3516, %v3869
          %v3933 = vadd.f32 %v3517, %v3873
          %v3934 = vadd.f32 %v3518, %v3877
          %v3935 = vadd.f32 %v3519, %v3881
          %v3936 = vadd.f32 %v3520, %v3885
          %v3937 = vadd.f32 %v3521, %v3889
          %v3938 = vadd.f32 %v3522, %v3869
          %v3939 = vadd.f32 %v3523, %v3873
          %v3940 = vadd.f32 %v3524, %v3877
          %v3941 = vadd.f32 %v3525, %v3881
          %v3942 = vadd.f32 %v3526, %v3885
          %v3943 = vadd.f32 %v3527, %v3889
          %v3944 = vadd.f32 %v3528, %v3869
          %v3945 = vadd.f32 %v3529, %v3873
          %v3946 = vadd.f32 %v3530, %v3877
          %v3947 = vadd.f32 %v3531, %v3881
          %v3948 = vadd.f32 %v3532, %v3885
          %v3949 = vadd.f32 %v3533, %v3889
          %v3950 = vadd.f32 %v3534, %v3869
          %v3951 = vadd.f32 %v3535, %v3873
          %v3952 = vadd.f32 %v3536, %v3877
          %v3953 = vadd.f32 %v3537, %v3881
          %v3954 = vadd.f32 %v3538, %v3885
          %v3955 = vadd.f32 %v3539, %v3889
          %v3956 = vadd.f32 %v3540, %v3869
          %v3957 = vadd.f32 %v3541, %v3873
          %v3958 = vadd.f32 %v3542, %v3877
          %v3959 = vadd.f32 %v3543, %v3881
          %v3960 = vadd.f32 %v3544, %v3885
          %v3961 = vadd.f32 %v3545, %v3889
          %v3962 = vadd.f32 %v3546, %v3869
          %v3963 = vadd.f32 %v3547, %v3873
          %v3964 = vadd.f32 %v3548, %v3877
          %v3965 = vadd.f32 %v3549, %v3881
          %v3966 = vadd.f32 %v3550, %v3885
          %v3967 = vadd.f32 %v3551, %v3889
          %v3968 = vadd.f32 %v3552, %v3869
          %v3969 = vadd.f32 %v3553, %v3873
          %v3970 = vadd.f32 %v3554, %v3877
          %v3971 = vadd.f32 %v3555, %v3881
          %v3972 = vadd.f32 %v3556, %v3885
          %v3973 = vadd.f32 %v3557, %v3889
          %v3974 = vadd.f32 %v3558, %v3869
          %v3975 = vadd.f32 %v3559, %v3873
          %v3976 = vadd.f32 %v3560, %v3877
          %v3977 = vadd.f32 %v3561, %v3881
          %v3978 = vadd.f32 %v3562, %v3885
          %v3979 = vadd.f32 %v3563, %v3889
          %v3980 = vadd.f32 %v3564, %v3869
          %v3981 = vadd.f32 %v3565, %v3873
          %v3982 = vadd.f32 %v3566, %v3877
          %v3983 = vadd.f32 %v3567, %v3881
          %v3984 = vadd.f32 %v3568, %v3885
          %v3985 = vadd.f32 %v3569, %v3889
          %v3986 = vadd.f32 %v3570, %v3869
          %v3987 = vadd.f32 %v3571, %v3873
          %v3988 = vadd.f32 %v3572, %v3877
          %v3989 = vadd.f32 %v3573, %v3881
          %v3990 = vadd.f32 %v3574, %v3885
          %v3991 = vadd.f32 %v3575, %v3889
          %v3992 = vadd.f32 %v3576, %v3869
          %v3993 = vadd.f32 %v3577, %v3873
          %v3994 = vadd.f32 %v3578, %v3877
          %v3995 = vadd.f32 %v3579, %v3881
          %v3996 = vadd.f32 %v3580, %v3885
          %v3997 = vadd.f32 %v3581, %v3889
          %v3998 = vadd.f32 %v3582, %v3869
          %v3999 = vadd.f32 %v3583, %v3873
          %v4000 = vadd.f32 %v3584, %v3877
          %v4001 = vadd.f32 %v3585, %v3881
          %v4002 = vadd.f32 %v3586, %v3885
          %v4003 = vadd.f32 %v3587, %v3889
          %v4004 = vadd.f32 %v3588, %v3869
          %v4005 = vadd.f32 %v3589, %v3873
          %v4006 = vadd.f32 %v3590, %v3877
          %v4007 = vadd.f32 %v3591, %v3881
          %v4008 = vadd.f32 %v3592, %v3885
          %v4009 = vadd.f32 %v3593, %v3889
          %v4010 = vadd.f32 %v3594, %v3869
          %v4011 = vadd.f32 %v3595, %v3873
          %v4012 = vadd.f32 %v3596, %v3877
          %v4013 = vadd.f32 %v3597, %v3881
          %v4014 = vadd.f32 %v3598, %v3885
          %v4015 = vadd.f32 %v3599, %v3889
          %v4016 = vadd.f32 %v3600, %v3869
          %v4017 = vadd.f32 %v3601, %v3873
          %v4018 = vadd.f32 %v3602, %v3877
          %v4019 = vadd.f32 %v3603, %v3881
          %v4020 = vadd.f32 %v3604, %v3885
          %v4021 = vadd.f32 %v3605, %v3889
          %v4022 = vadd.f32 %v3606, %v3869
          %v4023 = vadd.f32 %v3607, %v3873
          %v4024 = vadd.f32 %v3608, %v3877
          %v4025 = vadd.f32 %v3609, %v3881
          %v4026 = vadd.f32 %v3610, %v3885
          %v4027 = vadd.f32 %v3611, %v3889
          %v4028 = vadd.f32 %v3612, %v3869
          %v4029 = vadd.f32 %v3613, %v3873
          %v4030 = vadd.f32 %v3614, %v3877
          %v4031 = vadd.f32 %v3615, %v3881
          %v4032 = vadd.f32 %v3616, %v3885
          %v4033 = vadd.f32 %v3617, %v3889
          %v4034 = vadd.f32 %v3618, %v3869
          %v4035 = vadd.f32 %v3619, %v3873
          %v4036 = vadd.f32 %v3620, %v3877
          %v4037 = vadd.f32 %v3621, %v3881
          %v4038 = vadd.f32 %v3622, %v3885
          %v4039 = vadd.f32 %v3623, %v3889
          %v4040 = vadd.f32 %v3624, %v3869
          %v4041 = vadd.f32 %v3625, %v3873
          %v4042 = vadd.f32 %v3626, %v3877
          %v4043 = vadd.f32 %v3627, %v3881
          %v4044 = vadd.f32 %v3628, %v3885
          %v4045 = vadd.f32 %v3629, %v3889
          %v4046 = vadd.f32 %v3630, %v3869
          %v4047 = vadd.f32 %v3631, %v3873
          %v4048 = vadd.f32 %v3632, %v3877
          %v4049 = vadd.f32 %v3633, %v3881
          %v4050 = vadd.f32 %v3634, %v3885
          %v4051 = vadd.f32 %v3635, %v3889
          %v4052 = vadd.f32 %v3636, %v3869
          %v4053 = vadd.f32 %v3637, %v3873
          %v4054 = vadd.f32 %v3638, %v3877
          %v4055 = vadd.f32 %v3639, %v3881
          %v4056 = vadd.f32 %v3640, %v3885
          %v4057 = vadd.f32 %v3641, %v3889
          %v4058 = vadd.f32 %v3642, %v3869
          %v4059 = vadd.f32 %v3643, %v3873
          %v4060 = vadd.f32 %v3644, %v3877
          %v4061 = vadd.f32 %v3645, %v3881
          %v4062 = vadd.f32 %v3646, %v3885
          %v4063 = vadd.f32 %v3647, %v3889
          %v4064 = vadd.f32 %v3648, %v3869
          %v4065 = vadd.f32 %v3649, %v3873
          %v4066 = vadd.f32 %v3650, %v3877
          %v4067 = vadd.f32 %v3651, %v3881
          %v4068 = vadd.f32 %v3652, %v3885
          %v4069 = vadd.f32 %v3653, %v3889
          %v4070 = vadd.f32 %v3654, %v3869
          %v4071 = vadd.f32 %v3655, %v3873
          %v4072 = vadd.f32 %v3656, %v3877
          %v4073 = vadd.f32 %v3657, %v3881
          %v4074 = vadd.f32 %v3658, %v3885
          %v4075 = vadd.f32 %v3659, %v3889
          %v4076 = vadd.f32 %v3660, %v3869
          %v4077 = vadd.f32 %v3661, %v3873
          %v4078 = vadd.f32 %v3662, %v3877
          %v4079 = vadd.f32 %v3663, %v3881
          %v4080 = vadd.f32 %v3664, %v3885
          %v4081 = vadd.f32 %v3665, %v3889
          %v4082 = vadd.f32 %v3666, %v3869
          %v4083 = vadd.f32 %v3667, %v3873
          %v4084 = vadd.f32 %v3668, %v3877
          %v4085 = vadd.f32 %v3669, %v3881
          %v4086 = vadd.f32 %v3670, %v3885
          %v4087 = vadd.f32 %v3671, %v3889
          %v4088 = vadd.f32 %v3672, %v3869
          %v4089 = vadd.f32 %v3673, %v3873
          %v4090 = vadd.f32 %v3674, %v3877
          %v4091 = vadd.f32 %v3675, %v3881
          %v4092 = vadd.f32 %v3676, %v3885
          %v4093 = vadd.f32 %v3677, %v3889
          %v4094 = vadd.f32 %v3678, %v3869
          %v4095 = vadd.f32 %v3679, %v3873
          %v4096 = vadd.f32 %v3680, %v3877
          %v4097 = vadd.f32 %v3681, %v3881
          %v4098 = vadd.f32 %v3682, %v3885
          %v4099 = vadd.f32 %v3683, %v3889
          %v4100 = vadd.f32 %v3684, %v3869
          %v4101 = vadd.f32 %v3685, %v3873
          %v4102 = vadd.f32 %v3686, %v3877
          %v4103 = vadd.f32 %v3687, %v3881
          %v4104 = vadd.f32 %v3688, %v3885
          %v4105 = vadd.f32 %v3689, %v3889
          %v4106 = vadd.f32 %v3690, %v3869
          %v4107 = vadd.f32 %v3691, %v3873
          %v4108 = vadd.f32 %v3692, %v3877
          %v4109 = vadd.f32 %v3693, %v3881
          %v4110 = vadd.f32 %v3694, %v3885
          %v4111 = vadd.f32 %v3695, %v3889
          %v4112 = vadd.f32 %v3696, %v3869
          %v4113 = vadd.f32 %v3697, %v3873
          %v4114 = vadd.f32 %v3698, %v3877
          %v4115 = vadd.f32 %v3699, %v3881
          %v4116 = vadd.f32 %v3700, %v3885
          %v4117 = vadd.f32 %v3701, %v3889
          %v4118 = vadd.f32 %v3702, %v3869
          %v4119 = vadd.f32 %v3703, %v3873
          %v4120 = vadd.f32 %v3704, %v3877
          %v4121 = vadd.f32 %v3705, %v3881
          %v4122 = vadd.f32 %v3706, %v3885
          %v4123 = vadd.f32 %v3707, %v3889
          %v4124 = vadd.f32 %v3708, %v3869
          %v4125 = vadd.f32 %v3709, %v3873
          %v4126 = vadd.f32 %v3710, %v3877
          %v4127 = vadd.f32 %v3711, %v3881
          %v4128 = vadd.f32 %v3712, %v3885
          %v4129 = vadd.f32 %v3713, %v3889
          %v4130 = vadd.f32 %v3714, %v3869
          %v4131 = vadd.f32 %v3715, %v3873
          %v4132 = vadd.f32 %v3716, %v3877
          %v4133 = vadd.f32 %v3717, %v3881
          %v4134 = vadd.f32 %v3718, %v3885
          %v4135 = vadd.f32 %v3719, %v3889
          %v4136 = vadd.f32 %v3720, %v3869
          %v4137 = vadd.f32 %v3721, %v3873
          %v4138 = vadd.f32 %v3722, %v3877
          %v4139 = vadd.f32 %v3723, %v3881
          %v4140 = vadd.f32 %v3724, %v3885
          %v4141 = vadd.f32 %v3725, %v3889
          %v4142 = vadd.f32 %v3726, %v3869
          %v4143 = vadd.f32 %v3727, %v3873
          %v4144 = vadd.f32 %v3728, %v3877
          %v4145 = vadd.f32 %v3729, %v3881
          %v4146 = vadd.f32 %v3730, %v3885
          %v4147 = vadd.f32 %v3731, %v3889
          %v4148 = vadd.f32 %v3732, %v3869
          %v4149 = vadd.f32 %v3733, %v3873
          %v4150 = vadd.f32 %v3734, %v3877
          %v4151 = vadd.f32 %v3735, %v3881
          %v4152 = vadd.f32 %v3736, %v3885
          %v4153 = vadd.f32 %v3737, %v3889
          %v4154 = vadd.f32 %v3738, %v3869
          %v4155 = vadd.f32 %v3739, %v3873
          %v4156 = vadd.f32 %v3740, %v3877
          %v4157 = vadd.f32 %v3741, %v3881
          %v4158 = vadd.f32 %v3742, %v3885
          %v4159 = vadd.f32 %v3743, %v3889
          %v4160 = vadd.f32 %v3744, %v3869
          %v4161 = vadd.f32 %v3745, %v3873
          %v4162 = vadd.f32 %v3746, %v3877
          %v4163 = vadd.f32 %v3747, %v3881
          %v4164 = vadd.f32 %v3748, %v3885
          %v4165 = vadd.f32 %v3749, %v3889
          %v4166 = vadd.f32 %v3750, %v3869
          %v4167 = vadd.f32 %v3751, %v3873
          %v4168 = vadd.f32 %v3752, %v3877
          %v4169 = vadd.f32 %v3753, %v3881
          %v4170 = vadd.f32 %v3754, %v3885
          %v4171 = vadd.f32 %v3755, %v3889
          %v4172 = vadd.f32 %v3756, %v3869
          %v4173 = vadd.f32 %v3757, %v3873
          %v4174 = vadd.f32 %v3758, %v3877
          %v4175 = vadd.f32 %v3759, %v3881
          %v4176 = vadd.f32 %v3760, %v3885
          %v4177 = vadd.f32 %v3761, %v3889
          %v4178 = vadd.f32 %v3762, %v3869
          %v4179 = vadd.f32 %v3763, %v3873
          %v4180 = vadd.f32 %v3764, %v3877
          %v4181 = vadd.f32 %v3765, %v3881
          %v4182 = vadd.f32 %v3766, %v3885
          %v4183 = vadd.f32 %v3767, %v3889
          %v4184 = vadd.f32 %v3768, %v3869
          %v4185 = vadd.f32 %v3769, %v3873
          %v4186 = vadd.f32 %v3770, %v3877
          %v4187 = vadd.f32 %v3771, %v3881
          %v4188 = vadd.f32 %v3772, %v3885
          %v4189 = vadd.f32 %v3773, %v3889
          %v4190 = vadd.f32 %v3774, %v3869
          %v4191 = vadd.f32 %v3775, %v3873
          %v4192 = vadd.f32 %v3776, %v3877
          %v4193 = vadd.f32 %v3777, %v3881
          %v4194 = vadd.f32 %v3778, %v3885
          %v4195 = vadd.f32 %v3779, %v3889
          %v4196 = vadd.f32 %v3780, %v3869
          %v4197 = vadd.f32 %v3781, %v3873
          %v4198 = vadd.f32 %v3782, %v3877
          %v4199 = vadd.f32 %v3783, %v3881
          %v4200 = vadd.f32 %v3784, %v3885
          %v4201 = vadd.f32 %v3785, %v3889
          %v4202 = vadd.f32 %v3786, %v3869
          %v4203 = vadd.f32 %v3787, %v3873
          %v4204 = vadd.f32 %v3788, %v3877
          %v4205 = vadd.f32 %v3789, %v3881
          %v4206 = vadd.f32 %v3790, %v3885
          %v4207 = vadd.f32 %v3791, %v3889
          %v4208 = vadd.f32 %v3792, %v3869
          %v4209 = vadd.f32 %v3793, %v3873
          %v4210 = vadd.f32 %v3794, %v3877
          %v4211 = vadd.f32 %v3795, %v3881
          %v4212 = vadd.f32 %v3796, %v3885
          %v4213 = vadd.f32 %v3797, %v3889
          %v4214 = vadd.f32 %v3798, %v3869
          %v4215 = vadd.f32 %v3799, %v3873
          %v4216 = vadd.f32 %v3800, %v3877
          %v4217 = vadd.f32 %v3801, %v3881
          %v4218 = vadd.f32 %v3802, %v3885
          %v4219 = vadd.f32 %v3803, %v3889
          %v4220 = vadd.f32 %v3804, %v3869
          %v4221 = vadd.f32 %v3805, %v3873
          %v4222 = vadd.f32 %v3806, %v3877
          %v4223 = vadd.f32 %v3807, %v3881
          %v4224 = vadd.f32 %v3808, %v3885
          %v4225 = vadd.f32 %v3809, %v3889
          %v4226 = vadd.f32 %v3810, %v3869
          %v4227 = vadd.f32 %v3811, %v3873
          %v4228 = vadd.f32 %v3812, %v3877
          %v4229 = vadd.f32 %v3813, %v3881
          %v4230 = vadd.f32 %v3814, %v3885
          %v4231 = vadd.f32 %v3815, %v3889
          %v4232 = vadd.f32 %v3816, %v3869
          %v4233 = vadd.f32 %v3817, %v3873
          %v4234 = vadd.f32 %v3818, %v3877
          %v4235 = vadd.f32 %v3819, %v3881
          %v4236 = vadd.f32 %v3820, %v3885
          %v4237 = vadd.f32 %v3821, %v3889
          %v4238 = vadd.f32 %v3822, %v3869
          %v4239 = vadd.f32 %v3823, %v3873
          %v4240 = vadd.f32 %v3824, %v3877
          %v4241 = vadd.f32 %v3825, %v3881
          %v4242 = vadd.f32 %v3826, %v3885
          %v4243 = vadd.f32 %v3827, %v3889
          %v4244 = vadd.f32 %v3828, %v3869
          %v4245 = vadd.f32 %v3829, %v3873
          %v4246 = vadd.f32 %v3830, %v3877
          %v4247 = vadd.f32 %v3831, %v3881
          %v4248 = vadd.f32 %v3832, %v3885
          %v4249 = vadd.f32 %v3833, %v3889
          %v4250 = vadd.f32 %v3834, %v3869
          %v4251 = vadd.f32 %v3835, %v3873
          %v4252 = vadd.f32 %v3836, %v3877
          %v4253 = vadd.f32 %v3837, %v3881
          %v4254 = vadd.f32 %v3838, %v3885
          %v4255 = vadd.f32 %v3839, %v3889
          %v4256 = vadd.f32 %v3840, %v3869
          %v4257 = vadd.f32 %v3841, %v3873
          %v4258 = vadd.f32 %v3842, %v3877
          %v4259 = vadd.f32 %v3843, %v3881
          %v4260 = vadd.f32 %v3844, %v3885
          %v4261 = vadd.f32 %v3845, %v3889
          %v4262 = vadd.f32 %v3846, %v3869
          %v4263 = vadd.f32 %v3847, %v3873
          %v4264 = vadd.f32 %v3848, %v3877
          %v4265 = vadd.f32 %v3849, %v3881
          %v4266 = vadd.f32 %v3850, %v3885
          %v4267 = vadd.f32 %v3851, %v3889
          %v4268 = vadd.f32 %v3852, %v3869
          %v4269 = vadd.f32 %v3853, %v3873
          %v4270 = vadd.f32 %v3854, %v3877
          %v4271 = vadd.f32 %v3855, %v3881
          %v4272 = vadd.f32 %v3856, %v3885
          %v4273 = vadd.f32 %v3857, %v3889
          %v4274 = vadd.f32 %v3858, %v3869
          %v4275 = vadd.f32 %v3859, %v3873
          %v4276 = vadd.f32 %v3860, %v3877
          %v4277 = vadd.f32 %v3861, %v3881
          %v4278 = vadd.f32 %v3862, %v3885
          %v4279 = vadd.f32 %v3863, %v3889
          %4280 = vst [vmem:[%s262] sm:$0xff] %v3896
          %4281 = vst [vmem:[%s262 + $0x8] sm:$0xff] %v3897
          %4282 = vst [vmem:[%s262 + $0x10] sm:$0xff] %v3898
          %4283 = vst [vmem:[%s262 + $0x18] sm:$0xff] %v3899
          %4284 = vst [vmem:[%s262 + $0x20] sm:$0xff] %v3900
          %4285 = vst [vmem:[%s262 + $0x28] sm:$0xff] %v3901
          %4286 = vst [vmem:[%s262 + $0x30] sm:$0xff] %v3902
          %4287 = vst [vmem:[%s262 + $0x38] sm:$0xff] %v3903
          %4288 = vst [vmem:[%s262 + $0x40] sm:$0xff] %v3904
          %4289 = vst [vmem:[%s262 + $0x48] sm:$0xff] %v3905
          %4290 = vst [vmem:[%s262 + $0x50] sm:$0xff] %v3906
          %4291 = vst [vmem:[%s262 + $0x58] sm:$0xff] %v3907
          %4292 = vst [vmem:[%s262 + $0x60] sm:$0xff] %v3908
          %4293 = vst [vmem:[%s262 + $0x68] sm:$0xff] %v3909
          %4294 = vst [vmem:[%s262 + $0x70] sm:$0xff] %v3910
          %4295 = vst [vmem:[%s262 + $0x78] sm:$0xff] %v3911
          %4296 = vst [vmem:[%s262 + $0x80] sm:$0xff] %v3912
          %4297 = vst [vmem:[%s262 + $0x88] sm:$0xff] %v3913
          %4298 = vst [vmem:[%s262 + $0x90] sm:$0xff] %v3914
          %4299 = vst [vmem:[%s262 + $0x98] sm:$0xff] %v3915
          %4300 = vst [vmem:[%s262 + $0xa0] sm:$0xff] %v3916
          %4301 = vst [vmem:[%s262 + $0xa8] sm:$0xff] %v3917
          %4302 = vst [vmem:[%s262 + $0xb0] sm:$0xff] %v3918
          %4303 = vst [vmem:[%s262 + $0xb8] sm:$0xff] %v3919
          %4304 = vst [vmem:[%s262 + $0xc0] sm:$0xff] %v3920
          %4305 = vst [vmem:[%s262 + $0xc8] sm:$0xff] %v3921
          %4306 = vst [vmem:[%s262 + $0xd0] sm:$0xff] %v3922
          %4307 = vst [vmem:[%s262 + $0xd8] sm:$0xff] %v3923
          %4308 = vst [vmem:[%s262 + $0xe0] sm:$0xff] %v3924
          %4309 = vst [vmem:[%s262 + $0xe8] sm:$0xff] %v3925
          %4310 = vst [vmem:[%s262 + $0xf0] sm:$0xff] %v3926
          %4311 = vst [vmem:[%s262 + $0xf8] sm:$0xff] %v3927
          %4312 = vst [vmem:[%s262 + $0x100] sm:$0xff] %v3928
          %4313 = vst [vmem:[%s262 + $0x108] sm:$0xff] %v3929
          %4314 = vst [vmem:[%s262 + $0x110] sm:$0xff] %v3930
          %4315 = vst [vmem:[%s262 + $0x118] sm:$0xff] %v3931
          %4316 = vst [vmem:[%s262 + $0x120] sm:$0xff] %v3932
          %4317 = vst [vmem:[%s262 + $0x128] sm:$0xff] %v3933
          %4318 = vst [vmem:[%s262 + $0x130] sm:$0xff] %v3934
          %4319 = vst [vmem:[%s262 + $0x138] sm:$0xff] %v3935
          %4320 = vst [vmem:[%s262 + $0x140] sm:$0xff] %v3936
          %4321 = vst [vmem:[%s262 + $0x148] sm:$0xff] %v3937
          %4322 = vst [vmem:[%s262 + $0x150] sm:$0xff] %v3938
          %4323 = vst [vmem:[%s262 + $0x158] sm:$0xff] %v3939
          %4324 = vst [vmem:[%s262 + $0x160] sm:$0xff] %v3940
          %4325 = vst [vmem:[%s262 + $0x168] sm:$0xff] %v3941
          %4326 = vst [vmem:[%s262 + $0x170] sm:$0xff] %v3942
          %4327 = vst [vmem:[%s262 + $0x178] sm:$0xff] %v3943
          %4328 = vst [vmem:[%s262 + $0x180] sm:$0xff] %v3944
          %4329 = vst [vmem:[%s262 + $0x188] sm:$0xff] %v3945
          %4330 = vst [vmem:[%s262 + $0x190] sm:$0xff] %v3946
          %4331 = vst [vmem:[%s262 + $0x198] sm:$0xff] %v3947
          %4332 = vst [vmem:[%s262 + $0x1a0] sm:$0xff] %v3948
          %4333 = vst [vmem:[%s262 + $0x1a8] sm:$0xff] %v3949
          %4334 = vst [vmem:[%s262 + $0x1b0] sm:$0xff] %v3950
          %4335 = vst [vmem:[%s262 + $0x1b8] sm:$0xff] %v3951
          %4336 = vst [vmem:[%s262 + $0x1c0] sm:$0xff] %v3952
          %4337 = vst [vmem:[%s262 + $0x1c8] sm:$0xff] %v3953
          %4338 = vst [vmem:[%s262 + $0x1d0] sm:$0xff] %v3954
          %4339 = vst [vmem:[%s262 + $0x1d8] sm:$0xff] %v3955
          %4340 = vst [vmem:[%s262 + $0x1e0] sm:$0xff] %v3956
          %4341 = vst [vmem:[%s262 + $0x1e8] sm:$0xff] %v3957
          %4342 = vst [vmem:[%s262 + $0x1f0] sm:$0xff] %v3958
          %4343 = vst [vmem:[%s262 + $0x1f8] sm:$0xff] %v3959
          %4344 = vst [vmem:[%s262 + $0x200] sm:$0xff] %v3960
          %4345 = vst [vmem:[%s262 + $0x208] sm:$0xff] %v3961
          %4346 = vst [vmem:[%s262 + $0x210] sm:$0xff] %v3962
          %4347 = vst [vmem:[%s262 + $0x218] sm:$0xff] %v3963
          %4348 = vst [vmem:[%s262 + $0x220] sm:$0xff] %v3964
          %4349 = vst [vmem:[%s262 + $0x228] sm:$0xff] %v3965
          %4350 = vst [vmem:[%s262 + $0x230] sm:$0xff] %v3966
          %4351 = vst [vmem:[%s262 + $0x238] sm:$0xff] %v3967
          %4352 = vst [vmem:[%s262 + $0x240] sm:$0xff] %v3968
          %4353 = vst [vmem:[%s262 + $0x248] sm:$0xff] %v3969
          %4354 = vst [vmem:[%s262 + $0x250] sm:$0xff] %v3970
          %4355 = vst [vmem:[%s262 + $0x258] sm:$0xff] %v3971
          %4356 = vst [vmem:[%s262 + $0x260] sm:$0xff] %v3972
          %4357 = vst [vmem:[%s262 + $0x268] sm:$0xff] %v3973
          %4358 = vst [vmem:[%s262 + $0x270] sm:$0xff] %v3974
          %4359 = vst [vmem:[%s262 + $0x278] sm:$0xff] %v3975
          %4360 = vst [vmem:[%s262 + $0x280] sm:$0xff] %v3976
          %4361 = vst [vmem:[%s262 + $0x288] sm:$0xff] %v3977
          %4362 = vst [vmem:[%s262 + $0x290] sm:$0xff] %v3978
          %4363 = vst [vmem:[%s262 + $0x298] sm:$0xff] %v3979
          %4364 = vst [vmem:[%s262 + $0x2a0] sm:$0xff] %v3980
          %4365 = vst [vmem:[%s262 + $0x2a8] sm:$0xff] %v3981
          %4366 = vst [vmem:[%s262 + $0x2b0] sm:$0xff] %v3982
          %4367 = vst [vmem:[%s262 + $0x2b8] sm:$0xff] %v3983
          %4368 = vst [vmem:[%s262 + $0x2c0] sm:$0xff] %v3984
          %4369 = vst [vmem:[%s262 + $0x2c8] sm:$0xff] %v3985
          %4370 = vst [vmem:[%s262 + $0x2d0] sm:$0xff] %v3986
          %4371 = vst [vmem:[%s262 + $0x2d8] sm:$0xff] %v3987
          %4372 = vst [vmem:[%s262 + $0x2e0] sm:$0xff] %v3988
          %4373 = vst [vmem:[%s262 + $0x2e8] sm:$0xff] %v3989
          %4374 = vst [vmem:[%s262 + $0x2f0] sm:$0xff] %v3990
          %4375 = vst [vmem:[%s262 + $0x2f8] sm:$0xff] %v3991
          %4376 = vst [vmem:[%s262 + $0x300] sm:$0xff] %v3992
          %4377 = vst [vmem:[%s262 + $0x308] sm:$0xff] %v3993
          %4378 = vst [vmem:[%s262 + $0x310] sm:$0xff] %v3994
          %4379 = vst [vmem:[%s262 + $0x318] sm:$0xff] %v3995
          %4380 = vst [vmem:[%s262 + $0x320] sm:$0xff] %v3996
          %4381 = vst [vmem:[%s262 + $0x328] sm:$0xff] %v3997
          %4382 = vst [vmem:[%s262 + $0x330] sm:$0xff] %v3998
          %4383 = vst [vmem:[%s262 + $0x338] sm:$0xff] %v3999
          %4384 = vst [vmem:[%s262 + $0x340] sm:$0xff] %v4000
          %4385 = vst [vmem:[%s262 + $0x348] sm:$0xff] %v4001
          %4386 = vst [vmem:[%s262 + $0x350] sm:$0xff] %v4002
          %4387 = vst [vmem:[%s262 + $0x358] sm:$0xff] %v4003
          %4388 = vst [vmem:[%s262 + $0x360] sm:$0xff] %v4004
          %4389 = vst [vmem:[%s262 + $0x368] sm:$0xff] %v4005
          %4390 = vst [vmem:[%s262 + $0x370] sm:$0xff] %v4006
          %4391 = vst [vmem:[%s262 + $0x378] sm:$0xff] %v4007
          %4392 = vst [vmem:[%s262 + $0x380] sm:$0xff] %v4008
          %4393 = vst [vmem:[%s262 + $0x388] sm:$0xff] %v4009
          %4394 = vst [vmem:[%s262 + $0x390] sm:$0xff] %v4010
          %4395 = vst [vmem:[%s262 + $0x398] sm:$0xff] %v4011
          %4396 = vst [vmem:[%s262 + $0x3a0] sm:$0xff] %v4012
          %4397 = vst [vmem:[%s262 + $0x3a8] sm:$0xff] %v4013
          %4398 = vst [vmem:[%s262 + $0x3b0] sm:$0xff] %v4014
          %4399 = vst [vmem:[%s262 + $0x3b8] sm:$0xff] %v4015
          %4400 = vst [vmem:[%s262 + $0x3c0] sm:$0xff] %v4016
          %4401 = vst [vmem:[%s262 + $0x3c8] sm:$0xff] %v4017
          %4402 = vst [vmem:[%s262 + $0x3d0] sm:$0xff] %v4018
          %4403 = vst [vmem:[%s262 + $0x3d8] sm:$0xff] %v4019
          %4404 = vst [vmem:[%s262 + $0x3e0] sm:$0xff] %v4020
          %4405 = vst [vmem:[%s262 + $0x3e8] sm:$0xff] %v4021
          %4406 = vst [vmem:[%s262 + $0x3f0] sm:$0xff] %v4022
          %4407 = vst [vmem:[%s262 + $0x3f8] sm:$0xff] %v4023
          %4408 = vst [vmem:[%s262 + $0x400] sm:$0xff] %v4024
          %4409 = vst [vmem:[%s262 + $0x408] sm:$0xff] %v4025
          %4410 = vst [vmem:[%s262 + $0x410] sm:$0xff] %v4026
          %4411 = vst [vmem:[%s262 + $0x418] sm:$0xff] %v4027
          %4412 = vst [vmem:[%s262 + $0x420] sm:$0xff] %v4028
          %4413 = vst [vmem:[%s262 + $0x428] sm:$0xff] %v4029
          %4414 = vst [vmem:[%s262 + $0x430] sm:$0xff] %v4030
          %4415 = vst [vmem:[%s262 + $0x438] sm:$0xff] %v4031
          %4416 = vst [vmem:[%s262 + $0x440] sm:$0xff] %v4032
          %4417 = vst [vmem:[%s262 + $0x448] sm:$0xff] %v4033
          %4418 = vst [vmem:[%s262 + $0x450] sm:$0xff] %v4034
          %4419 = vst [vmem:[%s262 + $0x458] sm:$0xff] %v4035
          %4420 = vst [vmem:[%s262 + $0x460] sm:$0xff] %v4036
          %4421 = vst [vmem:[%s262 + $0x468] sm:$0xff] %v4037
          %4422 = vst [vmem:[%s262 + $0x470] sm:$0xff] %v4038
          %4423 = vst [vmem:[%s262 + $0x478] sm:$0xff] %v4039
          %4424 = vst [vmem:[%s262 + $0x480] sm:$0xff] %v4040
          %4425 = vst [vmem:[%s262 + $0x488] sm:$0xff] %v4041
          %4426 = vst [vmem:[%s262 + $0x490] sm:$0xff] %v4042
          %4427 = vst [vmem:[%s262 + $0x498] sm:$0xff] %v4043
          %4428 = vst [vmem:[%s262 + $0x4a0] sm:$0xff] %v4044
          %4429 = vst [vmem:[%s262 + $0x4a8] sm:$0xff] %v4045
          %4430 = vst [vmem:[%s262 + $0x4b0] sm:$0xff] %v4046
          %4431 = vst [vmem:[%s262 + $0x4b8] sm:$0xff] %v4047
          %4432 = vst [vmem:[%s262 + $0x4c0] sm:$0xff] %v4048
          %4433 = vst [vmem:[%s262 + $0x4c8] sm:$0xff] %v4049
          %4434 = vst [vmem:[%s262 + $0x4d0] sm:$0xff] %v4050
          %4435 = vst [vmem:[%s262 + $0x4d8] sm:$0xff] %v4051
          %4436 = vst [vmem:[%s262 + $0x4e0] sm:$0xff] %v4052
          %4437 = vst [vmem:[%s262 + $0x4e8] sm:$0xff] %v4053
          %4438 = vst [vmem:[%s262 + $0x4f0] sm:$0xff] %v4054
          %4439 = vst [vmem:[%s262 + $0x4f8] sm:$0xff] %v4055
          %4440 = vst [vmem:[%s262 + $0x500] sm:$0xff] %v4056
          %4441 = vst [vmem:[%s262 + $0x508] sm:$0xff] %v4057
          %4442 = vst [vmem:[%s262 + $0x510] sm:$0xff] %v4058
          %4443 = vst [vmem:[%s262 + $0x518] sm:$0xff] %v4059
          %4444 = vst [vmem:[%s262 + $0x520] sm:$0xff] %v4060
          %4445 = vst [vmem:[%s262 + $0x528] sm:$0xff] %v4061
          %4446 = vst [vmem:[%s262 + $0x530] sm:$0xff] %v4062
          %4447 = vst [vmem:[%s262 + $0x538] sm:$0xff] %v4063
          %4448 = vst [vmem:[%s262 + $0x540] sm:$0xff] %v4064
          %4449 = vst [vmem:[%s262 + $0x548] sm:$0xff] %v4065
          %4450 = vst [vmem:[%s262 + $0x550] sm:$0xff] %v4066
          %4451 = vst [vmem:[%s262 + $0x558] sm:$0xff] %v4067
          %4452 = vst [vmem:[%s262 + $0x560] sm:$0xff] %v4068
          %4453 = vst [vmem:[%s262 + $0x568] sm:$0xff] %v4069
          %4454 = vst [vmem:[%s262 + $0x570] sm:$0xff] %v4070
          %4455 = vst [vmem:[%s262 + $0x578] sm:$0xff] %v4071
          %4456 = vst [vmem:[%s262 + $0x580] sm:$0xff] %v4072
          %4457 = vst [vmem:[%s262 + $0x588] sm:$0xff] %v4073
          %4458 = vst [vmem:[%s262 + $0x590] sm:$0xff] %v4074
          %4459 = vst [vmem:[%s262 + $0x598] sm:$0xff] %v4075
          %4460 = vst [vmem:[%s262 + $0x5a0] sm:$0xff] %v4076
          %4461 = vst [vmem:[%s262 + $0x5a8] sm:$0xff] %v4077
          %4462 = vst [vmem:[%s262 + $0x5b0] sm:$0xff] %v4078
          %4463 = vst [vmem:[%s262 + $0x5b8] sm:$0xff] %v4079
          %4464 = vst [vmem:[%s262 + $0x5c0] sm:$0xff] %v4080
          %4465 = vst [vmem:[%s262 + $0x5c8] sm:$0xff] %v4081
          %4466 = vst [vmem:[%s262 + $0x5d0] sm:$0xff] %v4082
          %4467 = vst [vmem:[%s262 + $0x5d8] sm:$0xff] %v4083
          %4468 = vst [vmem:[%s262 + $0x5e0] sm:$0xff] %v4084
          %4469 = vst [vmem:[%s262 + $0x5e8] sm:$0xff] %v4085
          %4470 = vst [vmem:[%s262 + $0x5f0] sm:$0xff] %v4086
          %4471 = vst [vmem:[%s262 + $0x5f8] sm:$0xff] %v4087
          %4472 = vst [vmem:[%s262 + $0x600] sm:$0xff] %v4088
          %4473 = vst [vmem:[%s262 + $0x608] sm:$0xff] %v4089
          %4474 = vst [vmem:[%s262 + $0x610] sm:$0xff] %v4090
          %4475 = vst [vmem:[%s262 + $0x618] sm:$0xff] %v4091
          %4476 = vst [vmem:[%s262 + $0x620] sm:$0xff] %v4092
          %4477 = vst [vmem:[%s262 + $0x628] sm:$0xff] %v4093
          %4478 = vst [vmem:[%s262 + $0x630] sm:$0xff] %v4094
          %4479 = vst [vmem:[%s262 + $0x638] sm:$0xff] %v4095
          %4480 = vst [vmem:[%s262 + $0x640] sm:$0xff] %v4096
          %4481 = vst [vmem:[%s262 + $0x648] sm:$0xff] %v4097
          %4482 = vst [vmem:[%s262 + $0x650] sm:$0xff] %v4098
          %4483 = vst [vmem:[%s262 + $0x658] sm:$0xff] %v4099
          %4484 = vst [vmem:[%s262 + $0x660] sm:$0xff] %v4100
          %4485 = vst [vmem:[%s262 + $0x668] sm:$0xff] %v4101
          %4486 = vst [vmem:[%s262 + $0x670] sm:$0xff] %v4102
          %4487 = vst [vmem:[%s262 + $0x678] sm:$0xff] %v4103
          %4488 = vst [vmem:[%s262 + $0x680] sm:$0xff] %v4104
          %4489 = vst [vmem:[%s262 + $0x688] sm:$0xff] %v4105
          %4490 = vst [vmem:[%s262 + $0x690] sm:$0xff] %v4106
          %4491 = vst [vmem:[%s262 + $0x698] sm:$0xff] %v4107
          %4492 = vst [vmem:[%s262 + $0x6a0] sm:$0xff] %v4108
          %4493 = vst [vmem:[%s262 + $0x6a8] sm:$0xff] %v4109
          %4494 = vst [vmem:[%s262 + $0x6b0] sm:$0xff] %v4110
          %4495 = vst [vmem:[%s262 + $0x6b8] sm:$0xff] %v4111
          %4496 = vst [vmem:[%s262 + $0x6c0] sm:$0xff] %v4112
          %4497 = vst [vmem:[%s262 + $0x6c8] sm:$0xff] %v4113
          %4498 = vst [vmem:[%s262 + $0x6d0] sm:$0xff] %v4114
          %4499 = vst [vmem:[%s262 + $0x6d8] sm:$0xff] %v4115
          %4500 = vst [vmem:[%s262 + $0x6e0] sm:$0xff] %v4116
          %4501 = vst [vmem:[%s262 + $0x6e8] sm:$0xff] %v4117
          %4502 = vst [vmem:[%s262 + $0x6f0] sm:$0xff] %v4118
          %4503 = vst [vmem:[%s262 + $0x6f8] sm:$0xff] %v4119
          %4504 = vst [vmem:[%s262 + $0x700] sm:$0xff] %v4120
          %4505 = vst [vmem:[%s262 + $0x708] sm:$0xff] %v4121
          %4506 = vst [vmem:[%s262 + $0x710] sm:$0xff] %v4122
          %4507 = vst [vmem:[%s262 + $0x718] sm:$0xff] %v4123
          %4508 = vst [vmem:[%s262 + $0x720] sm:$0xff] %v4124
          %4509 = vst [vmem:[%s262 + $0x728] sm:$0xff] %v4125
          %4510 = vst [vmem:[%s262 + $0x730] sm:$0xff] %v4126
          %4511 = vst [vmem:[%s262 + $0x738] sm:$0xff] %v4127
          %4512 = vst [vmem:[%s262 + $0x740] sm:$0xff] %v4128
          %4513 = vst [vmem:[%s262 + $0x748] sm:$0xff] %v4129
          %4514 = vst [vmem:[%s262 + $0x750] sm:$0xff] %v4130
          %4515 = vst [vmem:[%s262 + $0x758] sm:$0xff] %v4131
          %4516 = vst [vmem:[%s262 + $0x760] sm:$0xff] %v4132
          %4517 = vst [vmem:[%s262 + $0x768] sm:$0xff] %v4133
          %4518 = vst [vmem:[%s262 + $0x770] sm:$0xff] %v4134
          %4519 = vst [vmem:[%s262 + $0x778] sm:$0xff] %v4135
          %4520 = vst [vmem:[%s262 + $0x780] sm:$0xff] %v4136
          %4521 = vst [vmem:[%s262 + $0x788] sm:$0xff] %v4137
          %4522 = vst [vmem:[%s262 + $0x790] sm:$0xff] %v4138
          %4523 = vst [vmem:[%s262 + $0x798] sm:$0xff] %v4139
          %4524 = vst [vmem:[%s262 + $0x7a0] sm:$0xff] %v4140
          %4525 = vst [vmem:[%s262 + $0x7a8] sm:$0xff] %v4141
          %4526 = vst [vmem:[%s262 + $0x7b0] sm:$0xff] %v4142
          %4527 = vst [vmem:[%s262 + $0x7b8] sm:$0xff] %v4143
          %4528 = vst [vmem:[%s262 + $0x7c0] sm:$0xff] %v4144
          %4529 = vst [vmem:[%s262 + $0x7c8] sm:$0xff] %v4145
          %4530 = vst [vmem:[%s262 + $0x7d0] sm:$0xff] %v4146
          %4531 = vst [vmem:[%s262 + $0x7d8] sm:$0xff] %v4147
          %4532 = vst [vmem:[%s262 + $0x7e0] sm:$0xff] %v4148
          %4533 = vst [vmem:[%s262 + $0x7e8] sm:$0xff] %v4149
          %4534 = vst [vmem:[%s262 + $0x7f0] sm:$0xff] %v4150
          %4535 = vst [vmem:[%s262 + $0x7f8] sm:$0xff] %v4151
          %4536 = vst [vmem:[%s262 + $0x800] sm:$0xff] %v4152
          %4537 = vst [vmem:[%s262 + $0x808] sm:$0xff] %v4153
          %4538 = vst [vmem:[%s262 + $0x810] sm:$0xff] %v4154
          %4539 = vst [vmem:[%s262 + $0x818] sm:$0xff] %v4155
          %4540 = vst [vmem:[%s262 + $0x820] sm:$0xff] %v4156
          %4541 = vst [vmem:[%s262 + $0x828] sm:$0xff] %v4157
          %4542 = vst [vmem:[%s262 + $0x830] sm:$0xff] %v4158
          %4543 = vst [vmem:[%s262 + $0x838] sm:$0xff] %v4159
          %4544 = vst [vmem:[%s262 + $0x840] sm:$0xff] %v4160
          %4545 = vst [vmem:[%s262 + $0x848] sm:$0xff] %v4161
          %4546 = vst [vmem:[%s262 + $0x850] sm:$0xff] %v4162
          %4547 = vst [vmem:[%s262 + $0x858] sm:$0xff] %v4163
          %4548 = vst [vmem:[%s262 + $0x860] sm:$0xff] %v4164
          %4549 = vst [vmem:[%s262 + $0x868] sm:$0xff] %v4165
          %4550 = vst [vmem:[%s262 + $0x870] sm:$0xff] %v4166
          %4551 = vst [vmem:[%s262 + $0x878] sm:$0xff] %v4167
          %4552 = vst [vmem:[%s262 + $0x880] sm:$0xff] %v4168
          %4553 = vst [vmem:[%s262 + $0x888] sm:$0xff] %v4169
          %4554 = vst [vmem:[%s262 + $0x890] sm:$0xff] %v4170
          %4555 = vst [vmem:[%s262 + $0x898] sm:$0xff] %v4171
          %4556 = vst [vmem:[%s262 + $0x8a0] sm:$0xff] %v4172
          %4557 = vst [vmem:[%s262 + $0x8a8] sm:$0xff] %v4173
          %4558 = vst [vmem:[%s262 + $0x8b0] sm:$0xff] %v4174
          %4559 = vst [vmem:[%s262 + $0x8b8] sm:$0xff] %v4175
          %4560 = vst [vmem:[%s262 + $0x8c0] sm:$0xff] %v4176
          %4561 = vst [vmem:[%s262 + $0x8c8] sm:$0xff] %v4177
          %4562 = vst [vmem:[%s262 + $0x8d0] sm:$0xff] %v4178
          %4563 = vst [vmem:[%s262 + $0x8d8] sm:$0xff] %v4179
          %4564 = vst [vmem:[%s262 + $0x8e0] sm:$0xff] %v4180
          %4565 = vst [vmem:[%s262 + $0x8e8] sm:$0xff] %v4181
          %4566 = vst [vmem:[%s262 + $0x8f0] sm:$0xff] %v4182
          %4567 = vst [vmem:[%s262 + $0x8f8] sm:$0xff] %v4183
          %4568 = vst [vmem:[%s262 + $0x900] sm:$0xff] %v4184
          %4569 = vst [vmem:[%s262 + $0x908] sm:$0xff] %v4185
          %4570 = vst [vmem:[%s262 + $0x910] sm:$0xff] %v4186
          %4571 = vst [vmem:[%s262 + $0x918] sm:$0xff] %v4187
          %4572 = vst [vmem:[%s262 + $0x920] sm:$0xff] %v4188
          %4573 = vst [vmem:[%s262 + $0x928] sm:$0xff] %v4189
          %4574 = vst [vmem:[%s262 + $0x930] sm:$0xff] %v4190
          %4575 = vst [vmem:[%s262 + $0x938] sm:$0xff] %v4191
          %4576 = vst [vmem:[%s262 + $0x940] sm:$0xff] %v4192
          %4577 = vst [vmem:[%s262 + $0x948] sm:$0xff] %v4193
          %4578 = vst [vmem:[%s262 + $0x950] sm:$0xff] %v4194
          %4579 = vst [vmem:[%s262 + $0x958] sm:$0xff] %v4195
          %4580 = vst [vmem:[%s262 + $0x960] sm:$0xff] %v4196
          %4581 = vst [vmem:[%s262 + $0x968] sm:$0xff] %v4197
          %4582 = vst [vmem:[%s262 + $0x970] sm:$0xff] %v4198
          %4583 = vst [vmem:[%s262 + $0x978] sm:$0xff] %v4199
          %4584 = vst [vmem:[%s262 + $0x980] sm:$0xff] %v4200
          %4585 = vst [vmem:[%s262 + $0x988] sm:$0xff] %v4201
          %4586 = vst [vmem:[%s262 + $0x990] sm:$0xff] %v4202
          %4587 = vst [vmem:[%s262 + $0x998] sm:$0xff] %v4203
          %4588 = vst [vmem:[%s262 + $0x9a0] sm:$0xff] %v4204
          %4589 = vst [vmem:[%s262 + $0x9a8] sm:$0xff] %v4205
          %4590 = vst [vmem:[%s262 + $0x9b0] sm:$0xff] %v4206
          %4591 = vst [vmem:[%s262 + $0x9b8] sm:$0xff] %v4207
          %4592 = vst [vmem:[%s262 + $0x9c0] sm:$0xff] %v4208
          %4593 = vst [vmem:[%s262 + $0x9c8] sm:$0xff] %v4209
          %4594 = vst [vmem:[%s262 + $0x9d0] sm:$0xff] %v4210
          %4595 = vst [vmem:[%s262 + $0x9d8] sm:$0xff] %v4211
          %4596 = vst [vmem:[%s262 + $0x9e0] sm:$0xff] %v4212
          %4597 = vst [vmem:[%s262 + $0x9e8] sm:$0xff] %v4213
          %4598 = vst [vmem:[%s262 + $0x9f0] sm:$0xff] %v4214
          %4599 = vst [vmem:[%s262 + $0x9f8] sm:$0xff] %v4215
          %4600 = vst [vmem:[%s262 + $0xa00] sm:$0xff] %v4216
          %4601 = vst [vmem:[%s262 + $0xa08] sm:$0xff] %v4217
          %4602 = vst [vmem:[%s262 + $0xa10] sm:$0xff] %v4218
          %4603 = vst [vmem:[%s262 + $0xa18] sm:$0xff] %v4219
          %4604 = vst [vmem:[%s262 + $0xa20] sm:$0xff] %v4220
          %4605 = vst [vmem:[%s262 + $0xa28] sm:$0xff] %v4221
          %4606 = vst [vmem:[%s262 + $0xa30] sm:$0xff] %v4222
          %4607 = vst [vmem:[%s262 + $0xa38] sm:$0xff] %v4223
          %4608 = vst [vmem:[%s262 + $0xa40] sm:$0xff] %v4224
          %4609 = vst [vmem:[%s262 + $0xa48] sm:$0xff] %v4225
          %4610 = vst [vmem:[%s262 + $0xa50] sm:$0xff] %v4226
          %4611 = vst [vmem:[%s262 + $0xa58] sm:$0xff] %v4227
          %4612 = vst [vmem:[%s262 + $0xa60] sm:$0xff] %v4228
          %4613 = vst [vmem:[%s262 + $0xa68] sm:$0xff] %v4229
          %4614 = vst [vmem:[%s262 + $0xa70] sm:$0xff] %v4230
          %4615 = vst [vmem:[%s262 + $0xa78] sm:$0xff] %v4231
          %4616 = vst [vmem:[%s262 + $0xa80] sm:$0xff] %v4232
          %4617 = vst [vmem:[%s262 + $0xa88] sm:$0xff] %v4233
          %4618 = vst [vmem:[%s262 + $0xa90] sm:$0xff] %v4234
          %4619 = vst [vmem:[%s262 + $0xa98] sm:$0xff] %v4235
          %4620 = vst [vmem:[%s262 + $0xaa0] sm:$0xff] %v4236
          %4621 = vst [vmem:[%s262 + $0xaa8] sm:$0xff] %v4237
          %4622 = vst [vmem:[%s262 + $0xab0] sm:$0xff] %v4238
          %4623 = vst [vmem:[%s262 + $0xab8] sm:$0xff] %v4239
          %4624 = vst [vmem:[%s262 + $0xac0] sm:$0xff] %v4240
          %4625 = vst [vmem:[%s262 + $0xac8] sm:$0xff] %v4241
          %4626 = vst [vmem:[%s262 + $0xad0] sm:$0xff] %v4242
          %4627 = vst [vmem:[%s262 + $0xad8] sm:$0xff] %v4243
          %4628 = vst [vmem:[%s262 + $0xae0] sm:$0xff] %v4244
          %4629 = vst [vmem:[%s262 + $0xae8] sm:$0xff] %v4245
          %4630 = vst [vmem:[%s262 + $0xaf0] sm:$0xff] %v4246
          %4631 = vst [vmem:[%s262 + $0xaf8] sm:$0xff] %v4247
          %4632 = vst [vmem:[%s262 + $0xb00] sm:$0xff] %v4248
          %4633 = vst [vmem:[%s262 + $0xb08] sm:$0xff] %v4249
          %4634 = vst [vmem:[%s262 + $0xb10] sm:$0xff] %v4250
          %4635 = vst [vmem:[%s262 + $0xb18] sm:$0xff] %v4251
          %4636 = vst [vmem:[%s262 + $0xb20] sm:$0xff] %v4252
          %4637 = vst [vmem:[%s262 + $0xb28] sm:$0xff] %v4253
          %4638 = vst [vmem:[%s262 + $0xb30] sm:$0xff] %v4254
          %4639 = vst [vmem:[%s262 + $0xb38] sm:$0xff] %v4255
          %4640 = vst [vmem:[%s262 + $0xb40] sm:$0xff] %v4256
          %4641 = vst [vmem:[%s262 + $0xb48] sm:$0xff] %v4257
          %4642 = vst [vmem:[%s262 + $0xb50] sm:$0xff] %v4258
          %4643 = vst [vmem:[%s262 + $0xb58] sm:$0xff] %v4259
          %4644 = vst [vmem:[%s262 + $0xb60] sm:$0xff] %v4260
          %4645 = vst [vmem:[%s262 + $0xb68] sm:$0xff] %v4261
          %4646 = vst [vmem:[%s262 + $0xb70] sm:$0xff] %v4262
          %4647 = vst [vmem:[%s262 + $0xb78] sm:$0xff] %v4263
          %4648 = vst [vmem:[%s262 + $0xb80] sm:$0xff] %v4264
          %4649 = vst [vmem:[%s262 + $0xb88] sm:$0xff] %v4265
          %4650 = vst [vmem:[%s262 + $0xb90] sm:$0xff] %v4266
          %4651 = vst [vmem:[%s262 + $0xb98] sm:$0xff] %v4267
          %4652 = vst [vmem:[%s262 + $0xba0] sm:$0xff] %v4268
          %4653 = vst [vmem:[%s262 + $0xba8] sm:$0xff] %v4269
          %4654 = vst [vmem:[%s262 + $0xbb0] sm:$0xff] %v4270
          %4655 = vst [vmem:[%s262 + $0xbb8] sm:$0xff] %v4271
          %4656 = vst [vmem:[%s262 + $0xbc0] sm:$0xff] %v4272
          %4657 = vst [vmem:[%s262 + $0xbc8] sm:$0xff] %v4273
          %4658 = vst [vmem:[%s262 + $0xbd0] sm:$0xff] %v4274
          %4659 = vst [vmem:[%s262 + $0xbd8] sm:$0xff] %v4275
          %4660 = vst [vmem:[%s262 + $0xbe0] sm:$0xff] %v4276
          %4661 = vst [vmem:[%s262 + $0xbe8] sm:$0xff] %v4277
          %4662 = vst [vmem:[%s262 + $0xbf0] sm:$0xff] %v4278
          %4663 = vst [vmem:[%s262 + $0xbf8] sm:$0xff] %v4279
        $region52: #{tpu_custom_call.1} parent=31 // pred_fallthru
          _
        %s4664 = sand.u32 %s132, 1
        %s4665 = scalar_lea.sflag [#allocation5], %s4664
        %s4666 = sand.u32 %s132, 1
        %s4667 = smul.addr %s4666, 3072
        %s4668 = scalar_lea.vmem [#allocation9], %s4667
        // Predicated region
        $region53: #{tpu_custom_call.1} parent=31 // pred_check
          %p4669 = pneg %p142
        $region54: #{tpu_custom_call.1} parent=31 // pred_check_branch
          %4671 = sbr.rel (%p4669) target = $region56
        $region55: #{tpu_custom_call.1} parent=31 // pred_region
          %s4672 = smul.u32 64, %s26
          %s4673 = smul.u32 6, %s27
          %s4675 = ssub.s32 49152, 49152
          %4676 = vsyncadd %s4665, %s4675
          %s4677 = smul.addr %s4672, 6
          %s4678 = sadd.s32 %s4673, %s4677
          %s4679 = smul.addr %s4678, 128
          %s4680 = scalar_lea.hbm %s3, %s4679
          %s4681 = sshll.u32 %s4668, 4
          %s4682 = int_to_ptr.vmem [resolvable:$true] %s4681
          %4687 = dma.vmem_to_hbm [thread:$0]  %s4682, 49152, %s4680, %s4665, 768, 768, 48
        $region56: #{tpu_custom_call.1} parent=31 // pred_fallthru
          _
      $region32: #{tpu_custom_call.1} parent=5 // pred_fallthru
        _
      %p4688 = scmp.le.s32.totalorder 2, %s16
      // Predicated region
      $region57: #{tpu_custom_call.1} parent=5 // pred_check
        %p4689 = pneg %p4688
      $region58: #{tpu_custom_call.1} parent=5 // pred_check_branch
        %4691 = sbr.rel (%p4689) target = $region60
      $region59: #{tpu_custom_call.1} parent=5 // pred_region
        %s4692 = ssub.s32 %s16, 2
        // Predicated region
        $region61: #{tpu_custom_call.1} parent=59 // pred_check
          %p4693 = pneg %p148
        $region62: #{tpu_custom_call.1} parent=59 // pred_check_branch
          %4695 = sbr.rel (%p4693) target = $region64
        $region63: #{tpu_custom_call.1} parent=59 // pred_region
          %s4696 = sand.u32 %s133, 1
          %s4697 = scalar_lea.sflag [#allocation5], %s4696
          %s4698 = sand.u32 %s133, 1
          %s4699 = smul.addr %s4698, 3072
          %s4700 = scalar_lea.vmem [#allocation9], %s4699
          %4701 = dma.done %s4697, 49152
        $region64: #{tpu_custom_call.1} parent=59 // pred_fallthru
          _
      $region60: #{tpu_custom_call.1} parent=5 // pred_fallthru
        _
    $region6: #{tpu_custom_call.1} parent=1 // loop_footer
      %s20 = sadd.s32 1, %s16
    $region7: #{tpu_custom_call.1} parent=1 // loop_footer_branch
      %15 = sbr.rel target = $region3
    $region8: #{tpu_custom_call.1} parent=1 // loop_exit
      _
    %4702 = vsyncpa [#allocation4], 1
    %s4703 = scalar_lea.sflag [#allocation4], 1
    %4704 = vsyncpa %s4703, 1
    %4705 = vsyncpa [#allocation7], 1
    %4706 = vsyncpa [#allocation5], 1
    %s4707 = scalar_lea.sflag [#allocation5], 1
    %4708 = vsyncpa %s4707, 1

</llo_original>
